<compile_context>
chip_gen: v7x
topology: tpu7x:2x2x1
jax: 0.10.0
libtpu: 0.0.40
codegen_flags: <defaults>
</compile_context>

<pallas_src>
import functools

import jax
import jax.numpy as jnp
from jax import lax
from jax.experimental import pallas as pl
from jax.experimental.pallas import tpu as pltpu


def _round_up(x: int, m: int) -> int:
    return ((x + m - 1) // m) * m


def _vmem_capacity_bytes() -> int:
    """Physical VMEM per TensorCore; conservative fallback = v7x's 64 MiB."""
    try:
        cap = getattr(pltpu.get_tpu_info(), "vmem_capacity_bytes", None)
        if cap:
            return int(cap)
    except Exception:
        pass
    return 64 * 1024 * 1024


def _leapfrog_kernel(prev_ref, mntm_ref, z_ref, a_ref, draw_ref, scal_ref,
                     *, num_steps: int, step_size: float):
    """One batch tile of HMC leapfrog + Metropolis accept/reject.

    The tile is split into two independent halves so one half's VPU
    momentum/position updates can overlap the other half's MXU matmul.
    """
    eps = jnp.float32(step_size)
    a_mm = a_ref[...]                 # (D, D) Gram matrix (f32 or bf16), resident
    mm_dtype = a_mm.dtype

    def grad_fn(z):
        # grad U(z) = z @ (W W^T): one MXU matmul per half per leapfrog step.
        return jnp.dot(z.astype(mm_dtype), a_mm,
                       preferred_element_type=jnp.float32)

    tb = draw_ref.shape[0]
    half = tb // 2                    # tb is always a multiple of 16

    prev0 = prev_ref[0:half, :]
    prev1 = prev_ref[half:tb, :]
    mntm0 = mntm_ref[0:half, :]
    mntm1 = mntm_ref[half:tb, :]

    def init_half(prev, mntm):
        g = grad_fn(prev)
        # U(z) = 0.5 * z . (z @ A) — cheap VPU reduction, only where consumed.
        p_u = 0.5 * jnp.sum(prev * g, axis=1, keepdims=True)
        p_k = 0.5 * jnp.sum(mntm * mntm, axis=1, keepdims=True)
        m = mntm - eps * g * 0.5                      # half momentum step
        z = prev - eps * m                            # full position step ("-")
        return m, z, p_u, p_k

    m0, z0, pU0, pK0 = init_half(prev0, mntm0)
    m1, z1, pU1, pK1 = init_half(prev1, mntm1)
    g0 = grad_fn(z0)
    g1 = grad_fn(z1)

    # Remaining full leapfrog steps; U is NOT needed inside the loop.
    if num_steps > 1:
        def body(_, c):
            m0, z0, g0, m1, z1, g1 = c
            m0 = m0 - eps * g0
            m1 = m1 - eps * g1
            z0 = z0 - eps * m0
            z1 = z1 - eps * m1
            g0 = grad_fn(z0)
            g1 = grad_fn(z1)
            return (m0, z0, g0, m1, z1, g1)

        m0, z0, g0, m1, z1, g1 = lax.fori_loop(
            1, num_steps, body, (m0, z0, g0, m1, z1, g1),
            unroll=min(num_steps - 1, 2))

    def finalize_half(prev, m, z, g, p_u, p_k, z_u):
        m = -(m - eps * g * 0.5)                      # final half step, negate
        c_u = 0.5 * jnp.sum(z * g, axis=1, keepdims=True)
        c_k = 0.5 * jnp.sum(m * m, axis=1, keepdims=True)
        # min(1, exp(delta)) == exp(min(delta, 0)) and never overflows.
        delta = p_u + p_k - c_u - c_k
        criterion = jnp.exp(jnp.minimum(delta, jnp.float32(0.0)))
        accept = z_u < criterion                      # (half, 1) bool
        draw = jnp.where(accept, z, prev)
        u_fin = jnp.where(accept, c_u, p_u)
        return draw, u_fin, accept.astype(jnp.float32)

    d0, u0, a0 = finalize_half(prev0, m0, z0, g0, pU0, pK0, z_ref[0:half, :])
    d1, u1, a1 = finalize_half(prev1, m1, z1, g1, pU1, pK1, z_ref[half:tb, :])

    draw_ref[0:half, :] = d0
    draw_ref[half:tb, :] = d1

    # Lane-dense packed scalar slab: lane 0 = U_final, lane 1 = acceptance.
    lane = lax.broadcasted_iota(jnp.int32, (half, 128), 1)
    scal_ref[0:half, :] = jnp.where(lane == 0, u0,
                                    jnp.where(lane == 1, a0, jnp.float32(0.0)))
    scal_ref[half:tb, :] = jnp.where(lane == 0, u1,
                                     jnp.where(lane == 1, a1, jnp.float32(0.0)))


def leapfrog_pallas(previous_sample, mntm_noise, z_uniform, decoder_w,
                    *, num_steps: int, step_size: float,
                    block_b: int = 1024, use_bf16: bool = True):
    B, D = previous_sample.shape

    # Precompute the Gram matrix once outside the kernel: one matmul per
    # leapfrog step inside the kernel, and VMEM holds (D, D) instead of (D, H).
    w = decoder_w.astype(jnp.float32)
    a = jnp.dot(w, w.T, preferred_element_type=jnp.float32)          # (D, D)
    a_dtype = jnp.bfloat16 if use_bf16 else jnp.float32
    a = a.astype(a_dtype)     # feed the MXU operand pre-cast (no per-step cast)

    # ---- Tile selection (derived from queried VMEM capacity) ----------------
    vmem_cap = _vmem_capacity_bytes()
    # Double-buffered per-row tiles (prev/mntm/draw + z column + scalar slab),
    # plus the Gram matrix counted double-buffered (worst case if Buffered(1)
    # is not honoured on this JAX version).
    bytes_per_row = 4 * 2 * (3 * D + 1 + 128)
    gram_bytes = 2 * D * D * (2 if use_bf16 else 4)
    budget = int(0.55 * vmem_cap)
    cap_rows = max(16, (budget - gram_bytes) // bytes_per_row)

    tb = int(min(block_b, cap_rows))
    tb = max(16, (tb // 16) * 16)              # even halves, sublane aligned
    tb = min(tb, _round_up(B, 16))             # never tile bigger than batch
    if B >= 32:
        # Keep >= 2 grid iterations so v7x's two TensorCores both get work on
        # the "parallel" axis; the extra grid step is ~0.35us on v5e/v6e.
        tb = min(tb, _round_up((B + 1) // 2, 16))

    b_pad = _round_up(B, tb)
    grid = (b_pad // tb,)

    # ---- Pad the batch (never fall back to one giant full-batch block). -----
    prev_in = previous_sample.astype(jnp.float32)
    mntm_in = mntm_noise.astype(jnp.float32)
    z_in = z_uniform.reshape(B, 1).astype(jnp.float32)
    if b_pad != B:
        pad = b_pad - B
        prev_in = jnp.pad(prev_in, ((0, pad), (0, 0)))
        mntm_in = jnp.pad(mntm_in, ((0, pad), (0, 0)))
        # Pad Z with 1.0 so padded rows deterministically reject (harmless).
        z_in = jnp.pad(z_in, ((0, pad), (0, 0)), constant_values=1.0)

    kernel = functools.partial(
        _leapfrog_kernel, num_steps=num_steps, step_size=step_size)

    est_bytes = bytes_per_row * tb + gram_bytes
    cp_kwargs = dict(dimension_semantics=("parallel",))
    if est_bytes > 12 * 1024 * 1024:
        # Stay well under physical VMEM (64 MiB/TC on v7x, 128 MiB v5e/v6e).
        cp_kwargs["vmem_limit_bytes"] = min(
            max(int(1.3 * est_bytes), est_bytes + (2 << 20)),
            int(0.75 * vmem_cap))

    out_shape = (
        jax.ShapeDtypeStruct((b_pad, D), jnp.float32),
        jax.ShapeDtypeStruct((b_pad, 128), jnp.float32),
    )
    out_specs = (
        pl.BlockSpec((tb, D), lambda i: (i, 0)),
        pl.BlockSpec((tb, 128), lambda i: (i, 0)),
    )

    def _run(a_pipeline_mode):
        if a_pipeline_mode is None:
            a_spec = pl.BlockSpec((D, D), lambda i: (0, 0))
        else:
            # Gram matrix is fetched once (constant index_map): one buffer is
            # enough; saves a D*D buffer of VMEM at large D (matters on v7x).
            a_spec = pl.BlockSpec((D, D), lambda i: (0, 0),
                                  pipeline_mode=a_pipeline_mode)
        return pl.pallas_call(
            kernel,
            out_shape=out_shape,
            grid=grid,
            in_specs=[
                pl.BlockSpec((tb, D), lambda i: (i, 0)),   # previous sample
                pl.BlockSpec((tb, D), lambda i: (i, 0)),   # momentum noise
                pl.BlockSpec((tb, 1), lambda i: (i, 0)),   # uniform Z column
                a_spec,                                    # Gram matrix
            ],
            out_specs=out_specs,
            # The chain state is overwritten anyway: alias draw onto the
            # previous-sample buffer (no extra (B, D) HBM allocation when the
            # caller donates its buffer).
            input_output_aliases={0: 0},
            compiler_params=pltpu.CompilerParams(**cp_kwargs),
        )(prev_in, mntm_in, z_in, a)

    try:
        draw, scal = _run(pl.Buffered(1))
    except Exception:
        # Older JAX / unsupported buffer count: default double-buffering for A.
        draw, scal = _run(None)

    # Match PyTorch return shapes: draw (B, D), U_final (B,), acceptance (B,)
    return draw[:B], scal[:B, 0], scal[:B, 1]


def _leapfrog_ref(previous_sample, mntm_noise, z_uniform, decoder_w,
                  *, num_steps: int, step_size: float):
    """Pure-JAX reference mirroring the PyTorch forward (original W-form energy)."""
    w = decoder_w

    def energy(z):
        h = z @ w
        return 0.5 * jnp.sum(h * h, axis=1), h @ w.T

    prev = previous_sample
    mntm = mntm_noise
    new_draw = prev
    prev_U, grad = energy(new_draw)
    prev_K = jnp.sum(mntm * mntm * 0.5, axis=1)
    mntm = mntm - step_size * grad / 2.0
    new_draw = new_draw - step_size * mntm
    current_U, grad = energy(new_draw)
    for _ in range(1, num_steps):
        mntm = mntm - step_size * grad
        new_draw = new_draw - step_size * mntm
        current_U, grad = energy(new_draw)
    mntm = mntm - step_size * grad / 2.0
    mntm = -mntm
    current_K = jnp.sum(mntm * mntm * 0.5, axis=1)
    criterion = jnp.minimum(1.0, jnp.exp(prev_U + prev_K - current_U - current_K))
    accept = z_uniform < criterion
    draw_final = jnp.where(accept[:, None], new_draw, prev)
    U_final = jnp.where(accept, current_U, prev_U)
    return draw_final, U_final, accept.astype(jnp.float32), criterion


if __name__ == "__main__":
    num_steps = 3
    step_size = 0.01
    B, D, H = 256, 128, 128   # batch, latent dim, decoder hidden dim

    key = jax.random.PRNGKey(0)
    k_prev, k_mntm, k_z, k_w = jax.random.split(key, 4)
    previous_sample = jax.random.normal(k_prev, (B, D), dtype=jnp.float32)
    mntm_noise = jax.random.normal(k_mntm, (B, D), dtype=jnp.float32)     # torch.randn_like
    z_uniform = jax.random.uniform(k_z, (B,), dtype=jnp.float32)          # torch.rand
    decoder_w = 0.05 * jax.random.normal(k_w, (D, H), dtype=jnp.float32)  # synthetic decoder

    # Pure-JAX reference using the original two-matmul energy form, so the
    # Gram-matrix restructure inside the kernel is cross-checked too.
    draw_r, u_r, acc_r, crit_r = _leapfrog_ref(
        previous_sample, mntm_noise, z_uniform, decoder_w,
        num_steps=num_steps, step_size=step_size)

    # ---- exact-precision path: strict elementwise check ---------------------
    draw, u_final, acceptance = leapfrog_pallas(
        previous_sample, mntm_noise, z_uniform, decoder_w,
        num_steps=num_steps, step_size=step_size, use_bf16=False)
    jax.block_until_ready((draw, u_final, acceptance))

    safe = jnp.abs(z_uniform - crit_r) > 5e-3     # unambiguous accept/reject rows
    m = safe.astype(jnp.float32)
    assert bool(jnp.all((acceptance == acc_r) | ~safe)), "acceptance mismatch"
    assert float(jnp.max(jnp.abs(draw - draw_r) * m[:, None])) < 1e-3, "draw mismatch"
    assert float(jnp.max(jnp.abs(u_final - u_r) * m)) < 1e-2, "U mismatch"

    # ---- bf16 MXU path (performance default): statistical gating ------------
    # bf16 perturbs the Metropolis boundary, so (per the perf review) gate on
    # acceptance rate plus a loose elementwise check away from the boundary.
    draw_b, u_b, acc_b = leapfrog_pallas(
        previous_sample, mntm_noise, z_uniform, decoder_w,
        num_steps=num_steps, step_size=step_size)          # use_bf16=True default
    jax.block_until_ready((draw_b, u_b, acc_b))

    assert bool(jnp.all(jnp.isfinite(draw_b))) and bool(jnp.all(jnp.isfinite(u_b)))
    assert abs(float(jnp.mean(acc_b)) - float(jnp.mean(acc_r))) < 0.1, \
        "bf16 acceptance-rate drift"
    safe_b = (jnp.abs(z_uniform - crit_r) > 0.2).astype(jnp.float32)
    assert float(jnp.max(jnp.abs(draw_b - draw_r) * safe_b[:, None])) < 1e-2, \
        "bf16 draw mismatch"
    assert float(jnp.max(jnp.abs(u_b - u_r) * safe_b)) < 0.25, "bf16 U mismatch"

    print("KERNEL_OK")
</pallas_src>

<mosaic_0001>
module attributes {stable_mosaic.version = 11 : i64} {
  func.func @_leapfrog_kernel(%arg0: i32, %arg1: memref<128x128xf32, #tpu.memory_space<vmem>>, %arg2: memref<128x128xf32, #tpu.memory_space<vmem>>, %arg3: memref<128x1xf32, #tpu.memory_space<vmem>>, %arg4: memref<128x128xf32, #tpu.memory_space<vmem>>, %arg5: memref<128x128xf32, #tpu.memory_space<vmem>>, %arg6: memref<128x128xf32, #tpu.memory_space<vmem>>) attributes {dimension_semantics = [#tpu.dimension_semantics<parallel>], iteration_bounds = array<i64: 2>, scalar_prefetch = 0 : i64, scratch_operands = 0 : i64, tpu.core_type = #tpu.core_type<tc>, window_params = [{transform_indices = @transform_0, window_bounds = array<i64: 128, 128>}, {transform_indices = @transform_1, window_bounds = array<i64: 128, 128>}, {transform_indices = @transform_2, window_bounds = array<i64: 128, 1>}, {pipeline_mode = #tpu.pipeline_mode<synchronous>, transform_indices = @transform_3, window_bounds = array<i64: 128, 128>}, {transform_indices = @transform_4, window_bounds = array<i64: 128, 128>}, {transform_indices = @transform_5, window_bounds = array<i64: 128, 128>}]} {
    %c0 = arith.constant 0 : index
    %c0_0 = arith.constant 0 : index
    %0 = vector.load %arg4[%c0, %c0_0] : memref<128x128xf32, #tpu.memory_space<vmem>>, vector<128x128xf32>
    %c0_1 = arith.constant 0 : index
    %c0_2 = arith.constant 0 : index
    %1 = vector.load %arg1[%c0_1, %c0_2] : memref<128x128xf32, #tpu.memory_space<vmem>>, vector<64x128xf32>
    %c64 = arith.constant 64 : index
    %c0_3 = arith.constant 0 : index
    %2 = vector.load %arg1[%c64, %c0_3] : memref<128x128xf32, #tpu.memory_space<vmem>>, vector<64x128xf32>
    %c0_4 = arith.constant 0 : index
    %c0_5 = arith.constant 0 : index
    %3 = vector.load %arg2[%c0_4, %c0_5] : memref<128x128xf32, #tpu.memory_space<vmem>>, vector<64x128xf32>
    %c64_6 = arith.constant 64 : index
    %c0_7 = arith.constant 0 : index
    %4 = vector.load %arg2[%c64_6, %c0_7] : memref<128x128xf32, #tpu.memory_space<vmem>>, vector<64x128xf32>
    %cst = arith.constant dense<0.000000e+00> : vector<64x128xf32>
    %5 = tpu.matmul %1, %0, %cst {dimension_numbers = #tpu.dot_dimension_numbers<[1], [0], [0], [1], [0, 0, 1, 1], [], []>} : vector<64x128xf32>, vector<128x128xf32>, vector<64x128xf32> -> vector<64x128xf32>
    %6 = arith.mulf %1, %5 : vector<64x128xf32>
    %cst_8 = arith.constant dense<0.000000e+00> : vector<64xf32>
    %7 = vector.multi_reduction <add>, %6, %cst_8 [1] : vector<64x128xf32> to vector<64xf32>
    %8 = vector.shape_cast %7 : vector<64xf32> to vector<64x1xf32>
    %cst_9 = arith.constant 5.000000e-01 : f32
    %9 = vector.broadcast %cst_9 : f32 to vector<64x1xf32>
    %10 = arith.mulf %9, %8 : vector<64x1xf32>
    %11 = arith.mulf %3, %3 : vector<64x128xf32>
    %cst_10 = arith.constant dense<0.000000e+00> : vector<64xf32>
    %12 = vector.multi_reduction <add>, %11, %cst_10 [1] : vector<64x128xf32> to vector<64xf32>
    %13 = vector.shape_cast %12 : vector<64xf32> to vector<64x1xf32>
    %cst_11 = arith.constant 5.000000e-01 : f32
    %14 = vector.broadcast %cst_11 : f32 to vector<64x1xf32>
    %15 = arith.mulf %14, %13 : vector<64x1xf32>
    %cst_12 = arith.constant 0.00999999977 : f32
    %16 = vector.broadcast %cst_12 : f32 to vector<64x128xf32>
    %17 = arith.mulf %16, %5 : vector<64x128xf32>
    %cst_13 = arith.constant 5.000000e-01 : f32
    %18 = vector.broadcast %cst_13 : f32 to vector<64x128xf32>
    %19 = arith.mulf %17, %18 : vector<64x128xf32>
    %20 = arith.subf %3, %19 : vector<64x128xf32>
    %cst_14 = arith.constant 0.00999999977 : f32
    %21 = vector.broadcast %cst_14 : f32 to vector<64x128xf32>
    %22 = arith.mulf %21, %20 : vector<64x128xf32>
    %23 = arith.subf %1, %22 : vector<64x128xf32>
    %cst_15 = arith.constant dense<0.000000e+00> : vector<64x128xf32>
    %24 = tpu.matmul %2, %0, %cst_15 {dimension_numbers = #tpu.dot_dimension_numbers<[1], [0], [0], [1], [0, 0, 1, 1], [], []>} : vector<64x128xf32>, vector<128x128xf32>, vector<64x128xf32> -> vector<64x128xf32>
    %25 = arith.mulf %2, %24 : vector<64x128xf32>
    %cst_16 = arith.constant dense<0.000000e+00> : vector<64xf32>
    %26 = vector.multi_reduction <add>, %25, %cst_16 [1] : vector<64x128xf32> to vector<64xf32>
    %27 = vector.shape_cast %26 : vector<64xf32> to vector<64x1xf32>
    %cst_17 = arith.constant 5.000000e-01 : f32
    %28 = vector.broadcast %cst_17 : f32 to vector<64x1xf32>
    %29 = arith.mulf %28, %27 : vector<64x1xf32>
    %30 = arith.mulf %4, %4 : vector<64x128xf32>
    %cst_18 = arith.constant dense<0.000000e+00> : vector<64xf32>
    %31 = vector.multi_reduction <add>, %30, %cst_18 [1] : vector<64x128xf32> to vector<64xf32>
    %32 = vector.shape_cast %31 : vector<64xf32> to vector<64x1xf32>
    %cst_19 = arith.constant 5.000000e-01 : f32
    %33 = vector.broadcast %cst_19 : f32 to vector<64x1xf32>
    %34 = arith.mulf %33, %32 : vector<64x1xf32>
    %cst_20 = arith.constant 0.00999999977 : f32
    %35 = vector.broadcast %cst_20 : f32 to vector<64x128xf32>
    %36 = arith.mulf %35, %24 : vector<64x128xf32>
    %cst_21 = arith.constant 5.000000e-01 : f32
    %37 = vector.broadcast %cst_21 : f32 to vector<64x128xf32>
    %38 = arith.mulf %36, %37 : vector<64x128xf32>
    %39 = arith.subf %4, %38 : vector<64x128xf32>
    %cst_22 = arith.constant 0.00999999977 : f32
    %40 = vector.broadcast %cst_22 : f32 to vector<64x128xf32>
    %41 = arith.mulf %40, %39 : vector<64x128xf32>
    %42 = arith.subf %2, %41 : vector<64x128xf32>
    %cst_23 = arith.constant dense<0.000000e+00> : vector<64x128xf32>
    %43 = tpu.matmul %23, %0, %cst_23 {dimension_numbers = #tpu.dot_dimension_numbers<[1], [0], [0], [1], [0, 0, 1, 1], [], []>} : vector<64x128xf32>, vector<128x128xf32>, vector<64x128xf32> -> vector<64x128xf32>
    %cst_24 = arith.constant dense<0.000000e+00> : vector<64x128xf32>
    %44 = tpu.matmul %42, %0, %cst_24 {dimension_numbers = #tpu.dot_dimension_numbers<[1], [0], [0], [1], [0, 0, 1, 1], [], []>} : vector<64x128xf32>, vector<128x128xf32>, vector<64x128xf32> -> vector<64x128xf32>
    %cst_25 = arith.constant 0.00999999977 : f32
    %c0_i32 = arith.constant 0 : i32
    %45 = vector.broadcast %cst_25 : f32 to vector<64x128xf32>
    %46 = arith.mulf %45, %43 : vector<64x128xf32>
    %47 = arith.subf %20, %46 : vector<64x128xf32>
    %48 = vector.broadcast %cst_25 : f32 to vector<64x128xf32>
    %49 = arith.mulf %48, %44 : vector<64x128xf32>
    %50 = arith.subf %39, %49 : vector<64x128xf32>
    %51 = vector.broadcast %cst_25 : f32 to vector<64x128xf32>
    %52 = arith.mulf %51, %47 : vector<64x128xf32>
    %53 = arith.subf %23, %52 : vector<64x128xf32>
    %54 = vector.broadcast %cst_25 : f32 to vector<64x128xf32>
    %55 = arith.mulf %54, %50 : vector<64x128xf32>
    %56 = arith.subf %42, %55 : vector<64x128xf32>
    %cst_26 = arith.constant dense<0.000000e+00> : vector<64x128xf32>
    %57 = tpu.matmul %53, %0, %cst_26 {dimension_numbers = #tpu.dot_dimension_numbers<[1], [0], [0], [1], [0, 0, 1, 1], [], []>} : vector<64x128xf32>, vector<128x128xf32>, vector<64x128xf32> -> vector<64x128xf32>
    %cst_27 = arith.constant dense<0.000000e+00> : vector<64x128xf32>
    %58 = tpu.matmul %56, %0, %cst_27 {dimension_numbers = #tpu.dot_dimension_numbers<[1], [0], [0], [1], [0, 0, 1, 1], [], []>} : vector<64x128xf32>, vector<128x128xf32>, vector<64x128xf32> -> vector<64x128xf32>
    %c1_i32 = arith.constant 1 : i32
    %59 = vector.broadcast %cst_25 : f32 to vector<64x128xf32>
    %60 = arith.mulf %59, %57 : vector<64x128xf32>
    %61 = arith.subf %47, %60 : vector<64x128xf32>
    %62 = vector.broadcast %cst_25 : f32 to vector<64x128xf32>
    %63 = arith.mulf %62, %58 : vector<64x128xf32>
    %64 = arith.subf %50, %63 : vector<64x128xf32>
    %65 = vector.broadcast %cst_25 : f32 to vector<64x128xf32>
    %66 = arith.mulf %65, %61 : vector<64x128xf32>
    %67 = arith.subf %53, %66 : vector<64x128xf32>
    %68 = vector.broadcast %cst_25 : f32 to vector<64x128xf32>
    %69 = arith.mulf %68, %64 : vector<64x128xf32>
    %70 = arith.subf %56, %69 : vector<64x128xf32>
    %cst_28 = arith.constant dense<0.000000e+00> : vector<64x128xf32>
    %71 = tpu.matmul %67, %0, %cst_28 {dimension_numbers = #tpu.dot_dimension_numbers<[1], [0], [0], [1], [0, 0, 1, 1], [], []>} : vector<64x128xf32>, vector<128x128xf32>, vector<64x128xf32> -> vector<64x128xf32>
    %cst_29 = arith.constant dense<0.000000e+00> : vector<64x128xf32>
    %72 = tpu.matmul %70, %0, %cst_29 {dimension_numbers = #tpu.dot_dimension_numbers<[1], [0], [0], [1], [0, 0, 1, 1], [], []>} : vector<64x128xf32>, vector<128x128xf32>, vector<64x128xf32> -> vector<64x128xf32>
    %c0_30 = arith.constant 0 : index
    %c0_31 = arith.constant 0 : index
    %73 = vector.load %arg3[%c0_30, %c0_31] : memref<128x1xf32, #tpu.memory_space<vmem>>, vector<64x1xf32>
    %cst_32 = arith.constant 0.00999999977 : f32
    %74 = vector.broadcast %cst_32 : f32 to vector<64x128xf32>
    %75 = arith.mulf %74, %71 : vector<64x128xf32>
    %cst_33 = arith.constant 5.000000e-01 : f32
    %76 = vector.broadcast %cst_33 : f32 to vector<64x128xf32>
    %77 = arith.mulf %75, %76 : vector<64x128xf32>
    %78 = arith.subf %61, %77 : vector<64x128xf32>
    %cst_34 = arith.constant 0.000000e+00 : f32
    %79 = vector.broadcast %cst_34 : f32 to vector<64x128xf32>
    %80 = arith.subf %79, %78 : vector<64x128xf32>
    %81 = arith.mulf %67, %71 : vector<64x128xf32>
    %cst_35 = arith.constant dense<0.000000e+00> : vector<64xf32>
    %82 = vector.multi_reduction <add>, %81, %cst_35 [1] : vector<64x128xf32> to vector<64xf32>
    %83 = vector.shape_cast %82 : vector<64xf32> to vector<64x1xf32>
    %cst_36 = arith.constant 5.000000e-01 : f32
    %84 = vector.broadcast %cst_36 : f32 to vector<64x1xf32>
    %85 = arith.mulf %84, %83 : vector<64x1xf32>
    %86 = arith.mulf %80, %80 : vector<64x128xf32>
    %cst_37 = arith.constant dense<0.000000e+00> : vector<64xf32>
    %87 = vector.multi_reduction <add>, %86, %cst_37 [1] : vector<64x128xf32> to vector<64xf32>
    %88 = vector.shape_cast %87 : vector<64xf32> to vector<64x1xf32>
    %cst_38 = arith.constant 5.000000e-01 : f32
    %89 = vector.broadcast %cst_38 : f32 to vector<64x1xf32>
    %90 = arith.mulf %89, %88 : vector<64x1xf32>
    %91 = arith.addf %10, %15 : vector<64x1xf32>
    %92 = arith.subf %91, %85 : vector<64x1xf32>
    %93 = arith.subf %92, %90 : vector<64x1xf32>
    %cst_39 = arith.constant 0.000000e+00 : f32
    %94 = vector.broadcast %cst_39 : f32 to vector<64x1xf32>
    %95 = arith.minimumf %93, %94 : vector<64x1xf32>
    %96 = math.exp %95 : vector<64x1xf32>
    %97 = arith.cmpf olt, %73, %96 : vector<64x1xf32>
    %98 = vector.shape_cast %97 : vector<64x1xi1> to vector<64x1xi1>
    %99 = vector.broadcast %98 : vector<64x1xi1> to vector<64x128xi1>
    %100 = arith.select %99, %67, %1 : vector<64x128xi1>, vector<64x128xf32>
    %101 = arith.select %97, %85, %10 : vector<64x1xi1>, vector<64x1xf32>
    %102 = arith.extui %97 : vector<64x1xi1> to vector<64x1xi32>
    %103 = arith.sitofp %102 : vector<64x1xi32> to vector<64x1xf32>
    %c64_40 = arith.constant 64 : index
    %c0_41 = arith.constant 0 : index
    %104 = vector.load %arg3[%c64_40, %c0_41] : memref<128x1xf32, #tpu.memory_space<vmem>>, vector<64x1xf32>
    %cst_42 = arith.constant 0.00999999977 : f32
    %105 = vector.broadcast %cst_42 : f32 to vector<64x128xf32>
    %106 = arith.mulf %105, %72 : vector<64x128xf32>
    %cst_43 = arith.constant 5.000000e-01 : f32
    %107 = vector.broadcast %cst_43 : f32 to vector<64x128xf32>
    %108 = arith.mulf %106, %107 : vector<64x128xf32>
    %109 = arith.subf %64, %108 : vector<64x128xf32>
    %cst_44 = arith.constant 0.000000e+00 : f32
    %110 = vector.broadcast %cst_44 : f32 to vector<64x128xf32>
    %111 = arith.subf %110, %109 : vector<64x128xf32>
    %112 = arith.mulf %70, %72 : vector<64x128xf32>
    %cst_45 = arith.constant dense<0.000000e+00> : vector<64xf32>
    %113 = vector.multi_reduction <add>, %112, %cst_45 [1] : vector<64x128xf32> to vector<64xf32>
    %114 = vector.shape_cast %113 : vector<64xf32> to vector<64x1xf32>
    %cst_46 = arith.constant 5.000000e-01 : f32
    %115 = vector.broadcast %cst_46 : f32 to vector<64x1xf32>
    %116 = arith.mulf %115, %114 : vector<64x1xf32>
    %117 = arith.mulf %111, %111 : vector<64x128xf32>
    %cst_47 = arith.constant dense<0.000000e+00> : vector<64xf32>
    %118 = vector.multi_reduction <add>, %117, %cst_47 [1] : vector<64x128xf32> to vector<64xf32>
    %119 = vector.shape_cast %118 : vector<64xf32> to vector<64x1xf32>
    %cst_48 = arith.constant 5.000000e-01 : f32
    %120 = vector.broadcast %cst_48 : f32 to vector<64x1xf32>
    %121 = arith.mulf %120, %119 : vector<64x1xf32>
    %122 = arith.addf %29, %34 : vector<64x1xf32>
    %123 = arith.subf %122, %116 : vector<64x1xf32>
    %124 = arith.subf %123, %121 : vector<64x1xf32>
    %cst_49 = arith.constant 0.000000e+00 : f32
    %125 = vector.broadcast %cst_49 : f32 to vector<64x1xf32>
    %126 = arith.minimumf %124, %125 : vector<64x1xf32>
    %127 = math.exp %126 : vector<64x1xf32>
    %128 = arith.cmpf olt, %104, %127 : vector<64x1xf32>
    %129 = vector.shape_cast %128 : vector<64x1xi1> to vector<64x1xi1>
    %130 = vector.broadcast %129 : vector<64x1xi1> to vector<64x128xi1>
    %131 = arith.select %130, %70, %2 : vector<64x128xi1>, vector<64x128xf32>
    %132 = arith.select %128, %116, %29 : vector<64x1xi1>, vector<64x1xf32>
    %133 = arith.extui %128 : vector<64x1xi1> to vector<64x1xi32>
    %134 = arith.sitofp %133 : vector<64x1xi32> to vector<64x1xf32>
    %c0_50 = arith.constant 0 : index
    %c0_51 = arith.constant 0 : index
    %135 = vector.load %arg5[%c0_50, %c0_51] : memref<128x128xf32, #tpu.memory_space<vmem>>, vector<64x128xf32>
    tpu.vector_store %arg5[%c0_50, %c0_51], %100 {strides = array<i32>} : memref<128x128xf32, #tpu.memory_space<vmem>>, vector<64x128xf32>,
    %c64_52 = arith.constant 64 : index
    %c0_53 = arith.constant 0 : index
    %136 = vector.load %arg5[%c64_52, %c0_53] : memref<128x128xf32, #tpu.memory_space<vmem>>, vector<64x128xf32>
    tpu.vector_store %arg5[%c64_52, %c0_53], %131 {strides = array<i32>} : memref<128x128xf32, #tpu.memory_space<vmem>>, vector<64x128xf32>,
    %137 = tpu.iota {dimensions = array<i32: 1>} : vector<64x128xi32>
    %c0_i32_54 = arith.constant 0 : i32
    %138 = vector.broadcast %c0_i32_54 : i32 to vector<64x128xi32>
    %139 = arith.cmpi eq, %137, %138 : vector<64x128xi32>
    %c1_i32_55 = arith.constant 1 : i32
    %140 = vector.broadcast %c1_i32_55 : i32 to vector<64x128xi32>
    %141 = arith.cmpi eq, %137, %140 : vector<64x128xi32>
    %cst_56 = arith.constant 0.000000e+00 : f32
    %142 = vector.shape_cast %103 : vector<64x1xf32> to vector<64x1xf32>
    %143 = vector.broadcast %142 : vector<64x1xf32> to vector<64x128xf32>
    %144 = vector.broadcast %cst_56 : f32 to vector<64x128xf32>
    %145 = arith.select %141, %143, %144 : vector<64x128xi1>, vector<64x128xf32>
    %146 = vector.shape_cast %101 : vector<64x1xf32> to vector<64x1xf32>
    %147 = vector.broadcast %146 : vector<64x1xf32> to vector<64x128xf32>
    %148 = arith.select %139, %147, %145 : vector<64x128xi1>, vector<64x128xf32>
    %c0_57 = arith.constant 0 : index
    %c0_58 = arith.constant 0 : index
    %149 = vector.load %arg6[%c0_57, %c0_58] : memref<128x128xf32, #tpu.memory_space<vmem>>, vector<64x128xf32>
    tpu.vector_store %arg6[%c0_57, %c0_58], %148 {strides = array<i32>} : memref<128x128xf32, #tpu.memory_space<vmem>>, vector<64x128xf32>,
    %c0_i32_59 = arith.constant 0 : i32
    %150 = vector.broadcast %c0_i32_59 : i32 to vector<64x128xi32>
    %151 = arith.cmpi eq, %137, %150 : vector<64x128xi32>
    %c1_i32_60 = arith.constant 1 : i32
    %152 = vector.broadcast %c1_i32_60 : i32 to vector<64x128xi32>
    %153 = arith.cmpi eq, %137, %152 : vector<64x128xi32>
    %cst_61 = arith.constant 0.000000e+00 : f32
    %154 = vector.shape_cast %134 : vector<64x1xf32> to vector<64x1xf32>
    %155 = vector.broadcast %154 : vector<64x1xf32> to vector<64x128xf32>
    %156 = vector.broadcast %cst_61 : f32 to vector<64x128xf32>
    %157 = arith.select %153, %155, %156 : vector<64x128xi1>, vector<64x128xf32>
    %158 = vector.shape_cast %132 : vector<64x1xf32> to vector<64x1xf32>
    %159 = vector.broadcast %158 : vector<64x1xf32> to vector<64x128xf32>
    %160 = arith.select %151, %159, %157 : vector<64x128xi1>, vector<64x128xf32>
    %c64_62 = arith.constant 64 : index
    %c0_63 = arith.constant 0 : index
    %161 = vector.load %arg6[%c64_62, %c0_63] : memref<128x128xf32, #tpu.memory_space<vmem>>, vector<64x128xf32>
    tpu.vector_store %arg6[%c64_62, %c0_63], %160 {strides = array<i32>} : memref<128x128xf32, #tpu.memory_space<vmem>>, vector<64x128xf32>,
    return
  }
  func.func @transform_0(%arg0: i32) -> (i32, i32) {
    %c0_i32 = arith.constant 0 : i32
    %c0_i32_0 = arith.constant 0 : i32
    return %arg0, %c0_i32 : i32, i32
  }
  func.func @transform_1(%arg0: i32) -> (i32, i32) {
    %c0_i32 = arith.constant 0 : i32
    %c0_i32_0 = arith.constant 0 : i32
    return %arg0, %c0_i32 : i32, i32
  }
  func.func @transform_2(%arg0: i32) -> (i32, i32) {
    %c0_i32 = arith.constant 0 : i32
    %c0_i32_0 = arith.constant 0 : i32
    return %arg0, %c0_i32 : i32, i32
  }
  func.func @transform_3(%arg0: i32) -> (i32, i32) {
    %c0_i32 = arith.constant 0 : i32
    %c0_i32_0 = arith.constant 0 : i32
    %c0_i32_1 = arith.constant 0 : i32
    return %c0_i32, %c0_i32_0 : i32, i32
  }
  func.func @transform_4(%arg0: i32) -> (i32, i32) {
    %c0_i32 = arith.constant 0 : i32
    %c0_i32_0 = arith.constant 0 : i32
    return %arg0, %c0_i32 : i32, i32
  }
  func.func @transform_5(%arg0: i32) -> (i32, i32) {
    %c0_i32 = arith.constant 0 : i32
    %c0_i32_0 = arith.constant 0 : i32
    return %arg0, %c0_i32 : i32, i32
  }
}

module attributes {stable_mosaic.version = 11 : i64} {
  func.func @_leapfrog_kernel(%arg0: i32, %arg1: memref<128x128xf32, #tpu.memory_space<vmem>>, %arg2: memref<128x128xf32, #tpu.memory_space<vmem>>, %arg3: memref<128x1xf32, #tpu.memory_space<vmem>>, %arg4: memref<128x128xf32, #tpu.memory_space<vmem>>, %arg5: memref<128x128xf32, #tpu.memory_space<vmem>>, %arg6: memref<128x128xf32, #tpu.memory_space<vmem>>) attributes {dimension_semantics = [#tpu.dimension_semantics<parallel>], iteration_bounds = array<i64: 2>, scalar_prefetch = 0 : i64, scratch_operands = 0 : i64, tpu.core_type = #tpu.core_type<tc>, window_params = [{transform_indices = @transform_0, window_bounds = array<i64: 128, 128>}, {transform_indices = @transform_1, window_bounds = array<i64: 128, 128>}, {transform_indices = @transform_2, window_bounds = array<i64: 128, 1>}, {pipeline_mode = #tpu.pipeline_mode<synchronous>, transform_indices = @transform_3, window_bounds = array<i64: 128, 128>}, {transform_indices = @transform_4, window_bounds = array<i64: 128, 128>}, {transform_indices = @transform_5, window_bounds = array<i64: 128, 128>}]} {
    %c0 = arith.constant 0 : index
    %c0_0 = arith.constant 0 : index
    %0 = vector.load %arg4[%c0, %c0_0] : memref<128x128xf32, #tpu.memory_space<vmem>>, vector<128x128xf32>
    %c0_1 = arith.constant 0 : index
    %c0_2 = arith.constant 0 : index
    %1 = vector.load %arg1[%c0_1, %c0_2] : memref<128x128xf32, #tpu.memory_space<vmem>>, vector<64x128xf32>
    %c64 = arith.constant 64 : index
    %c0_3 = arith.constant 0 : index
    %2 = vector.load %arg1[%c64, %c0_3] : memref<128x128xf32, #tpu.memory_space<vmem>>, vector<64x128xf32>
    %c0_4 = arith.constant 0 : index
    %c0_5 = arith.constant 0 : index
    %3 = vector.load %arg2[%c0_4, %c0_5] : memref<128x128xf32, #tpu.memory_space<vmem>>, vector<64x128xf32>
    %c64_6 = arith.constant 64 : index
    %c0_7 = arith.constant 0 : index
    %4 = vector.load %arg2[%c64_6, %c0_7] : memref<128x128xf32, #tpu.memory_space<vmem>>, vector<64x128xf32>
    %cst = arith.constant dense<0.000000e+00> : vector<64x128xf32>
    %5 = tpu.matmul %1, %0, %cst {dimension_numbers = #tpu.dot_dimension_numbers<[1], [0], [0], [1], [0, 0, 1, 1], [], []>} : vector<64x128xf32>, vector<128x128xf32>, vector<64x128xf32> -> vector<64x128xf32>
    %6 = arith.mulf %1, %5 : vector<64x128xf32>
    %cst_8 = arith.constant dense<0.000000e+00> : vector<64xf32>
    %7 = vector.multi_reduction <add>, %6, %cst_8 [1] : vector<64x128xf32> to vector<64xf32>
    %8 = vector.shape_cast %7 : vector<64xf32> to vector<64x1xf32>
    %cst_9 = arith.constant 5.000000e-01 : f32
    %9 = vector.broadcast %cst_9 : f32 to vector<64x1xf32>
    %10 = arith.mulf %9, %8 : vector<64x1xf32>
    %11 = arith.mulf %3, %3 : vector<64x128xf32>
    %cst_10 = arith.constant dense<0.000000e+00> : vector<64xf32>
    %12 = vector.multi_reduction <add>, %11, %cst_10 [1] : vector<64x128xf32> to vector<64xf32>
    %13 = vector.shape_cast %12 : vector<64xf32> to vector<64x1xf32>
    %cst_11 = arith.constant 5.000000e-01 : f32
    %14 = vector.broadcast %cst_11 : f32 to vector<64x1xf32>
    %15 = arith.mulf %14, %13 : vector<64x1xf32>
    %cst_12 = arith.constant 0.00999999977 : f32
    %16 = vector.broadcast %cst_12 : f32 to vector<64x128xf32>
    %17 = arith.mulf %16, %5 : vector<64x128xf32>
    %cst_13 = arith.constant 5.000000e-01 : f32
    %18 = vector.broadcast %cst_13 : f32 to vector<64x128xf32>
    %19 = arith.mulf %17, %18 : vector<64x128xf32>
    %20 = arith.subf %3, %19 : vector<64x128xf32>
    %cst_14 = arith.constant 0.00999999977 : f32
    %21 = vector.broadcast %cst_14 : f32 to vector<64x128xf32>
    %22 = arith.mulf %21, %20 : vector<64x128xf32>
    %23 = arith.subf %1, %22 : vector<64x128xf32>
    %cst_15 = arith.constant dense<0.000000e+00> : vector<64x128xf32>
    %24 = tpu.matmul %2, %0, %cst_15 {dimension_numbers = #tpu.dot_dimension_numbers<[1], [0], [0], [1], [0, 0, 1, 1], [], []>} : vector<64x128xf32>, vector<128x128xf32>, vector<64x128xf32> -> vector<64x128xf32>
    %25 = arith.mulf %2, %24 : vector<64x128xf32>
    %cst_16 = arith.constant dense<0.000000e+00> : vector<64xf32>
    %26 = vector.multi_reduction <add>, %25, %cst_16 [1] : vector<64x128xf32> to vector<64xf32>
    %27 = vector.shape_cast %26 : vector<64xf32> to vector<64x1xf32>
    %cst_17 = arith.constant 5.000000e-01 : f32
    %28 = vector.broadcast %cst_17 : f32 to vector<64x1xf32>
    %29 = arith.mulf %28, %27 : vector<64x1xf32>
    %30 = arith.mulf %4, %4 : vector<64x128xf32>
    %cst_18 = arith.constant dense<0.000000e+00> : vector<64xf32>
    %31 = vector.multi_reduction <add>, %30, %cst_18 [1] : vector<64x128xf32> to vector<64xf32>
    %32 = vector.shape_cast %31 : vector<64xf32> to vector<64x1xf32>
    %cst_19 = arith.constant 5.000000e-01 : f32
    %33 = vector.broadcast %cst_19 : f32 to vector<64x1xf32>
    %34 = arith.mulf %33, %32 : vector<64x1xf32>
    %cst_20 = arith.constant 0.00999999977 : f32
    %35 = vector.broadcast %cst_20 : f32 to vector<64x128xf32>
    %36 = arith.mulf %35, %24 : vector<64x128xf32>
    %cst_21 = arith.constant 5.000000e-01 : f32
    %37 = vector.broadcast %cst_21 : f32 to vector<64x128xf32>
    %38 = arith.mulf %36, %37 : vector<64x128xf32>
    %39 = arith.subf %4, %38 : vector<64x128xf32>
    %cst_22 = arith.constant 0.00999999977 : f32
    %40 = vector.broadcast %cst_22 : f32 to vector<64x128xf32>
    %41 = arith.mulf %40, %39 : vector<64x128xf32>
    %42 = arith.subf %2, %41 : vector<64x128xf32>
    %cst_23 = arith.constant dense<0.000000e+00> : vector<64x128xf32>
    %43 = tpu.matmul %23, %0, %cst_23 {dimension_numbers = #tpu.dot_dimension_numbers<[1], [0], [0], [1], [0, 0, 1, 1], [], []>} : vector<64x128xf32>, vector<128x128xf32>, vector<64x128xf32> -> vector<64x128xf32>
    %cst_24 = arith.constant dense<0.000000e+00> : vector<64x128xf32>
    %44 = tpu.matmul %42, %0, %cst_24 {dimension_numbers = #tpu.dot_dimension_numbers<[1], [0], [0], [1], [0, 0, 1, 1], [], []>} : vector<64x128xf32>, vector<128x128xf32>, vector<64x128xf32> -> vector<64x128xf32>
    %cst_25 = arith.constant 0.00999999977 : f32
    %c0_i32 = arith.constant 0 : i32
    %45 = vector.broadcast %cst_25 : f32 to vector<64x128xf32>
    %46 = arith.mulf %45, %43 : vector<64x128xf32>
    %47 = arith.subf %20, %46 : vector<64x128xf32>
    %48 = vector.broadcast %cst_25 : f32 to vector<64x128xf32>
    %49 = arith.mulf %48, %44 : vector<64x128xf32>
    %50 = arith.subf %39, %49 : vector<64x128xf32>
    %51 = vector.broadcast %cst_25 : f32 to vector<64x128xf32>
    %52 = arith.mulf %51, %47 : vector<64x128xf32>
    %53 = arith.subf %23, %52 : vector<64x128xf32>
    %54 = vector.broadcast %cst_25 : f32 to vector<64x128xf32>
    %55 = arith.mulf %54, %50 : vector<64x128xf32>
    %56 = arith.subf %42, %55 : vector<64x128xf32>
    %cst_26 = arith.constant dense<0.000000e+00> : vector<64x128xf32>
    %57 = tpu.matmul %53, %0, %cst_26 {dimension_numbers = #tpu.dot_dimension_numbers<[1], [0], [0], [1], [0, 0, 1, 1], [], []>} : vector<64x128xf32>, vector<128x128xf32>, vector<64x128xf32> -> vector<64x128xf32>
    %cst_27 = arith.constant dense<0.000000e+00> : vector<64x128xf32>
    %58 = tpu.matmul %56, %0, %cst_27 {dimension_numbers = #tpu.dot_dimension_numbers<[1], [0], [0], [1], [0, 0, 1, 1], [], []>} : vector<64x128xf32>, vector<128x128xf32>, vector<64x128xf32> -> vector<64x128xf32>
    %c1_i32 = arith.constant 1 : i32
    %59 = vector.broadcast %cst_25 : f32 to vector<64x128xf32>
    %60 = arith.mulf %59, %57 : vector<64x128xf32>
    %61 = arith.subf %47, %60 : vector<64x128xf32>
    %62 = vector.broadcast %cst_25 : f32 to vector<64x128xf32>
    %63 = arith.mulf %62, %58 : vector<64x128xf32>
    %64 = arith.subf %50, %63 : vector<64x128xf32>
    %65 = vector.broadcast %cst_25 : f32 to vector<64x128xf32>
    %66 = arith.mulf %65, %61 : vector<64x128xf32>
    %67 = arith.subf %53, %66 : vector<64x128xf32>
    %68 = vector.broadcast %cst_25 : f32 to vector<64x128xf32>
    %69 = arith.mulf %68, %64 : vector<64x128xf32>
    %70 = arith.subf %56, %69 : vector<64x128xf32>
    %cst_28 = arith.constant dense<0.000000e+00> : vector<64x128xf32>
    %71 = tpu.matmul %67, %0, %cst_28 {dimension_numbers = #tpu.dot_dimension_numbers<[1], [0], [0], [1], [0, 0, 1, 1], [], []>} : vector<64x128xf32>, vector<128x128xf32>, vector<64x128xf32> -> vector<64x128xf32>
    %cst_29 = arith.constant dense<0.000000e+00> : vector<64x128xf32>
    %72 = tpu.matmul %70, %0, %cst_29 {dimension_numbers = #tpu.dot_dimension_numbers<[1], [0], [0], [1], [0, 0, 1, 1], [], []>} : vector<64x128xf32>, vector<128x128xf32>, vector<64x128xf32> -> vector<64x128xf32>
    %c0_30 = arith.constant 0 : index
    %c0_31 = arith.constant 0 : index
    %73 = vector.load %arg3[%c0_30, %c0_31] : memref<128x1xf32, #tpu.memory_space<vmem>>, vector<64x1xf32>
    %cst_32 = arith.constant 0.00999999977 : f32
    %74 = vector.broadcast %cst_32 : f32 to vector<64x128xf32>
    %75 = arith.mulf %74, %71 : vector<64x128xf32>
    %cst_33 = arith.constant 5.000000e-01 : f32
    %76 = vector.broadcast %cst_33 : f32 to vector<64x128xf32>
    %77 = arith.mulf %75, %76 : vector<64x128xf32>
    %78 = arith.subf %61, %77 : vector<64x128xf32>
    %cst_34 = arith.constant 0.000000e+00 : f32
    %79 = vector.broadcast %cst_34 : f32 to vector<64x128xf32>
    %80 = arith.subf %79, %78 : vector<64x128xf32>
    %81 = arith.mulf %67, %71 : vector<64x128xf32>
    %cst_35 = arith.constant dense<0.000000e+00> : vector<64xf32>
    %82 = vector.multi_reduction <add>, %81, %cst_35 [1] : vector<64x128xf32> to vector<64xf32>
    %83 = vector.shape_cast %82 : vector<64xf32> to vector<64x1xf32>
    %cst_36 = arith.constant 5.000000e-01 : f32
    %84 = vector.broadcast %cst_36 : f32 to vector<64x1xf32>
    %85 = arith.mulf %84, %83 : vector<64x1xf32>
    %86 = arith.mulf %80, %80 : vector<64x128xf32>
    %cst_37 = arith.constant dense<0.000000e+00> : vector<64xf32>
    %87 = vector.multi_reduction <add>, %86, %cst_37 [1] : vector<64x128xf32> to vector<64xf32>
    %88 = vector.shape_cast %87 : vector<64xf32> to vector<64x1xf32>
    %cst_38 = arith.constant 5.000000e-01 : f32
    %89 = vector.broadcast %cst_38 : f32 to vector<64x1xf32>
    %90 = arith.mulf %89, %88 : vector<64x1xf32>
    %91 = arith.addf %10, %15 : vector<64x1xf32>
    %92 = arith.subf %91, %85 : vector<64x1xf32>
    %93 = arith.subf %92, %90 : vector<64x1xf32>
    %cst_39 = arith.constant 0.000000e+00 : f32
    %94 = vector.broadcast %cst_39 : f32 to vector<64x1xf32>
    %95 = arith.minimumf %93, %94 : vector<64x1xf32>
    %96 = math.exp %95 : vector<64x1xf32>
    %97 = arith.cmpf olt, %73, %96 : vector<64x1xf32>
    %98 = vector.shape_cast %97 : vector<64x1xi1> to vector<64x1xi1>
    %99 = vector.broadcast %98 : vector<64x1xi1> to vector<64x128xi1>
    %100 = arith.select %99, %67, %1 : vector<64x128xi1>, vector<64x128xf32>
    %101 = arith.select %97, %85, %10 : vector<64x1xi1>, vector<64x1xf32>
    %102 = arith.extui %97 : vector<64x1xi1> to vector<64x1xi32>
    %103 = arith.sitofp %102 : vector<64x1xi32> to vector<64x1xf32>
    %c64_40 = arith.constant 64 : index
    %c0_41 = arith.constant 0 : index
    %104 = vector.load %arg3[%c64_40, %c0_41] : memref<128x1xf32, #tpu.memory_space<vmem>>, vector<64x1xf32>
    %cst_42 = arith.constant 0.00999999977 : f32
    %105 = vector.broadcast %cst_42 : f32 to vector<64x128xf32>
    %106 = arith.mulf %105, %72 : vector<64x128xf32>
    %cst_43 = arith.constant 5.000000e-01 : f32
    %107 = vector.broadcast %cst_43 : f32 to vector<64x128xf32>
    %108 = arith.mulf %106, %107 : vector<64x128xf32>
    %109 = arith.subf %64, %108 : vector<64x128xf32>
    %cst_44 = arith.constant 0.000000e+00 : f32
    %110 = vector.broadcast %cst_44 : f32 to vector<64x128xf32>
    %111 = arith.subf %110, %109 : vector<64x128xf32>
    %112 = arith.mulf %70, %72 : vector<64x128xf32>
    %cst_45 = arith.constant dense<0.000000e+00> : vector<64xf32>
    %113 = vector.multi_reduction <add>, %112, %cst_45 [1] : vector<64x128xf32> to vector<64xf32>
    %114 = vector.shape_cast %113 : vector<64xf32> to vector<64x1xf32>
    %cst_46 = arith.constant 5.000000e-01 : f32
    %115 = vector.broadcast %cst_46 : f32 to vector<64x1xf32>
    %116 = arith.mulf %115, %114 : vector<64x1xf32>
    %117 = arith.mulf %111, %111 : vector<64x128xf32>
    %cst_47 = arith.constant dense<0.000000e+00> : vector<64xf32>
    %118 = vector.multi_reduction <add>, %117, %cst_47 [1] : vector<64x128xf32> to vector<64xf32>
    %119 = vector.shape_cast %118 : vector<64xf32> to vector<64x1xf32>
    %cst_48 = arith.constant 5.000000e-01 : f32
    %120 = vector.broadcast %cst_48 : f32 to vector<64x1xf32>
    %121 = arith.mulf %120, %119 : vector<64x1xf32>
    %122 = arith.addf %29, %34 : vector<64x1xf32>
    %123 = arith.subf %122, %116 : vector<64x1xf32>
    %124 = arith.subf %123, %121 : vector<64x1xf32>
    %cst_49 = arith.constant 0.000000e+00 : f32
    %125 = vector.broadcast %cst_49 : f32 to vector<64x1xf32>
    %126 = arith.minimumf %124, %125 : vector<64x1xf32>
    %127 = math.exp %126 : vector<64x1xf32>
    %128 = arith.cmpf olt, %104, %127 : vector<64x1xf32>
    %129 = vector.shape_cast %128 : vector<64x1xi1> to vector<64x1xi1>
    %130 = vector.broadcast %129 : vector<64x1xi1> to vector<64x128xi1>
    %131 = arith.select %130, %70, %2 : vector<64x128xi1>, vector<64x128xf32>
    %132 = arith.select %128, %116, %29 : vector<64x1xi1>, vector<64x1xf32>
    %133 = arith.extui %128 : vector<64x1xi1> to vector<64x1xi32>
    %134 = arith.sitofp %133 : vector<64x1xi32> to vector<64x1xf32>
    %c0_50 = arith.constant 0 : index
    %c0_51 = arith.constant 0 : index
    %135 = vector.load %arg5[%c0_50, %c0_51] : memref<128x128xf32, #tpu.memory_space<vmem>>, vector<64x128xf32>
    tpu.vector_store %arg5[%c0_50, %c0_51], %100 {strides = array<i32>} : memref<128x128xf32, #tpu.memory_space<vmem>>, vector<64x128xf32>,
    %c64_52 = arith.constant 64 : index
    %c0_53 = arith.constant 0 : index
    %136 = vector.load %arg5[%c64_52, %c0_53] : memref<128x128xf32, #tpu.memory_space<vmem>>, vector<64x128xf32>
    tpu.vector_store %arg5[%c64_52, %c0_53], %131 {strides = array<i32>} : memref<128x128xf32, #tpu.memory_space<vmem>>, vector<64x128xf32>,
    %137 = tpu.iota {dimensions = array<i32: 1>} : vector<64x128xi32>
    %c0_i32_54 = arith.constant 0 : i32
    %138 = vector.broadcast %c0_i32_54 : i32 to vector<64x128xi32>
    %139 = arith.cmpi eq, %137, %138 : vector<64x128xi32>
    %c1_i32_55 = arith.constant 1 : i32
    %140 = vector.broadcast %c1_i32_55 : i32 to vector<64x128xi32>
    %141 = arith.cmpi eq, %137, %140 : vector<64x128xi32>
    %cst_56 = arith.constant 0.000000e+00 : f32
    %142 = vector.shape_cast %103 : vector<64x1xf32> to vector<64x1xf32>
    %143 = vector.broadcast %142 : vector<64x1xf32> to vector<64x128xf32>
    %144 = vector.broadcast %cst_56 : f32 to vector<64x128xf32>
    %145 = arith.select %141, %143, %144 : vector<64x128xi1>, vector<64x128xf32>
    %146 = vector.shape_cast %101 : vector<64x1xf32> to vector<64x1xf32>
    %147 = vector.broadcast %146 : vector<64x1xf32> to vector<64x128xf32>
    %148 = arith.select %139, %147, %145 : vector<64x128xi1>, vector<64x128xf32>
    %c0_57 = arith.constant 0 : index
    %c0_58 = arith.constant 0 : index
    %149 = vector.load %arg6[%c0_57, %c0_58] : memref<128x128xf32, #tpu.memory_space<vmem>>, vector<64x128xf32>
    tpu.vector_store %arg6[%c0_57, %c0_58], %148 {strides = array<i32>} : memref<128x128xf32, #tpu.memory_space<vmem>>, vector<64x128xf32>,
    %c0_i32_59 = arith.constant 0 : i32
    %150 = vector.broadcast %c0_i32_59 : i32 to vector<64x128xi32>
    %151 = arith.cmpi eq, %137, %150 : vector<64x128xi32>
    %c1_i32_60 = arith.constant 1 : i32
    %152 = vector.broadcast %c1_i32_60 : i32 to vector<64x128xi32>
    %153 = arith.cmpi eq, %137, %152 : vector<64x128xi32>
    %cst_61 = arith.constant 0.000000e+00 : f32
    %154 = vector.shape_cast %134 : vector<64x1xf32> to vector<64x1xf32>
    %155 = vector.broadcast %154 : vector<64x1xf32> to vector<64x128xf32>
    %156 = vector.broadcast %cst_61 : f32 to vector<64x128xf32>
    %157 = arith.select %153, %155, %156 : vector<64x128xi1>, vector<64x128xf32>
    %158 = vector.shape_cast %132 : vector<64x1xf32> to vector<64x1xf32>
    %159 = vector.broadcast %158 : vector<64x1xf32> to vector<64x128xf32>
    %160 = arith.select %151, %159, %157 : vector<64x128xi1>, vector<64x128xf32>
    %c64_62 = arith.constant 64 : index
    %c0_63 = arith.constant 0 : index
    %161 = vector.load %arg6[%c64_62, %c0_63] : memref<128x128xf32, #tpu.memory_space<vmem>>, vector<64x128xf32>
    tpu.vector_store %arg6[%c64_62, %c0_63], %160 {strides = array<i32>} : memref<128x128xf32, #tpu.memory_space<vmem>>, vector<64x128xf32>,
    return
  }
  func.func @transform_0(%arg0: i32) -> (i32, i32) {
    %c0_i32 = arith.constant 0 : i32
    %c0_i32_0 = arith.constant 0 : i32
    return %arg0, %c0_i32 : i32, i32
  }
  func.func @transform_1(%arg0: i32) -> (i32, i32) {
    %c0_i32 = arith.constant 0 : i32
    %c0_i32_0 = arith.constant 0 : i32
    return %arg0, %c0_i32 : i32, i32
  }
  func.func @transform_2(%arg0: i32) -> (i32, i32) {
    %c0_i32 = arith.constant 0 : i32
    %c0_i32_0 = arith.constant 0 : i32
    return %arg0, %c0_i32 : i32, i32
  }
  func.func @transform_3(%arg0: i32) -> (i32, i32) {
    %c0_i32 = arith.constant 0 : i32
    %c0_i32_0 = arith.constant 0 : i32
    %c0_i32_1 = arith.constant 0 : i32
    return %c0_i32, %c0_i32_0 : i32, i32
  }
  func.func @transform_4(%arg0: i32) -> (i32, i32) {
    %c0_i32 = arith.constant 0 : i32
    %c0_i32_0 = arith.constant 0 : i32
    return %arg0, %c0_i32 : i32, i32
  }
  func.func @transform_5(%arg0: i32) -> (i32, i32) {
    %c0_i32 = arith.constant 0 : i32
    %c0_i32_0 = arith.constant 0 : i32
    return %arg0, %c0_i32 : i32, i32
  }
}

</mosaic_0001>

<llo_original>
// kernel: tpu_custom_call.1
$region0: #{tpu_custom_call.1}
  #allocation0 [shape = 'u32[]', space=smem, size = 0x4, offset = 0x4, fixed_abs, tag = 'smem constant byte address 0x4 - core index']
  #allocation1 [shape = 'u32[144,128]{1,0:T(1,128)}', space=vmem, size = 0x12000, scoped, tag = 'internal scratch']
  %s0 = inlined_call_operand.hbm [shape: f32[256,128], index: 0, kind: input, shape index: {}, may-alias: {0,4}]
  %s1 = inlined_call_operand.vmem [shape: f32[256,128], index: 1, kind: input, shape index: {}]
  %s2 = inlined_call_operand.vmem [shape: f32[256,1], index: 2, kind: input, shape index: {}]
  %s3 = inlined_call_operand.vmem [shape: f32[128,128], index: 3, kind: input, shape index: {}]
  %s4 = inlined_call_operand.hbm [shape: f32[256,128], index: 4, kind: output, shape index: {0}, may-alias: {0,4}]
  %s5 = inlined_call_operand.hbm [shape: f32[256,128], index: 5, kind: output, shape index: {1}]
  %6 = xla_tuple %s4, %s5
  %s7 = sld [smem:[#allocation0]]
  $region61: #{tpu_custom_call.1} parent=0
    _
  %s9 = ssub.s32 1, %s7
  %s10 = scalar_select 0, %s9, %s7
  $region1: #{tpu_custom_call.1} parent=0
    #allocation2 [shape = 'u8[131072]{0}', space=vmem, size = 0x20000, scoped, tag = 'input window, operand 0']
    #allocation3 [shape = 's32[2]{0}', space=sflag, size = 0x8, scoped, tag = 'scoped memory for tpu_custom_call.1']
    #allocation4 [shape = 's32[2]{0}', space=sflag, size = 0x8, scoped, tag = 'scoped memory for tpu_custom_call.1']
    #allocation5 [shape = 'u8[131072]{0}', space=vmem, size = 0x20000, scoped, tag = 'output window, operand 0']
    #allocation6 [shape = 'u8[131072]{0}', space=vmem, size = 0x20000, scoped, tag = 'output window, operand 1']
    #allocation7 [shape = 's32[2]{0}', space=sflag, size = 0x8, scoped, tag = 'scoped memory for tpu_custom_call.1']
    %11 = vsyncpa [#allocation3], 0
    %s12 = scalar_lea.sflag [#allocation3], 1
    %13 = vsyncpa %s12, 0
    %14 = vsyncpa [#allocation4], 0
    %s15 = scalar_lea.sflag [#allocation4], 1
    %16 = vsyncpa %s15, 0
    %17 = vsyncpa [#allocation7], 0
    %s18 = scalar_lea.sflag [#allocation7], 1
    %19 = vsyncpa %s18, 0
    loop: start=0, step=1, limit=4
    $region2: #{tpu_custom_call.1} parent=1 // loop_pre_header
      _
    $region3: #{tpu_custom_call.1} parent=1 // loop_header
      %s21 = sphi 0, %s25
      %p22 = scmp.ge.s32.totalorder %s21, 4
      %s31 = sphi 0, %s33
      %s34 = sphi 0, %s31
      %s35 = sphi 0, %s34
      %s51 = sphi 0, %s35
      %s57 = sphi 0, %s59
      %s60 = sphi 0, %s57
      %s61 = sphi 0, %s60
      %s77 = sphi 0, %s61
      %s83 = sphi 0, %s85
      %s86 = sphi 0, %s83
      %s87 = sphi 0, %s86
      %s103 = sphi 0, %s87
      %s107 = sphi 0, %s107
      %s109 = sphi 0, %s107
      %s110 = sphi 0, %s109
      %s124 = sphi 0, %s110
      %s130 = sphi 0, %s132
      %s133 = sphi 0, %s130
      %s134 = sphi 0, %s133
      %s150 = sphi 0, %s134
      %s156 = sphi 0, %s158
      %s159 = sphi 0, %s156
      %s160 = sphi 0, %s159
      %s176 = sphi 0, %s160
    $region4: #{tpu_custom_call.1} parent=1 // loop_header_branch
      %24 = sbr.rel (%p22) target = $region8
    $region5: #{tpu_custom_call.1} parent=1 // loop_body
      %s26 = ssub.s32 %s21, 1
      %s27 = ssub.s32 %s21, 2
      %s28 = sadd.s32 %s21, 1
      %s29 = ssub.s32 %s21, %s28
      %p30 = scmp.eq.s32.totalorder %s29, 0
      %s32 = sadd.s32 %s31, 1
      %s33 = scalar_select %p30, %s31, %s32
      %p36 = pneg %p30
      %p37 = scmp.eq.s32.totalorder %s21, 1
      %p38 = por %p36, %p37
      %p39 = scmp.ne.s32.totalorder %s31, %s34
      %p40 = scmp.eq.s32.totalorder %s21, 0
      %p41 = por %p39, %p40
      %p42 = scmp.ne.s32.totalorder %s31, %s34
      %p43 = scmp.eq.s32.totalorder %s26, 1
      %p44 = por %p42, %p43
      %p45 = scmp.ne.s32.totalorder %s34, %s35
      %p46 = scmp.eq.s32.totalorder %s26, 0
      %p47 = por %p45, %p46
      %p48 = scmp.ne.s32.totalorder %s34, %s35
      %p49 = scmp.eq.s32.totalorder %s27, 1
      %p50 = por %p48, %p49
      %p52 = scmp.ne.s32.totalorder %s35, %s51
      %p53 = scmp.eq.s32.totalorder %s27, 0
      %p54 = por %p52, %p53
      %s55 = ssub.s32 %s21, %s28
      %p56 = scmp.eq.s32.totalorder %s55, 0
      %s58 = sadd.s32 %s57, 1
      %s59 = scalar_select %p56, %s57, %s58
      %p62 = pneg %p56
      %p63 = scmp.eq.s32.totalorder %s21, 1
      %p64 = por %p62, %p63
      %p65 = scmp.ne.s32.totalorder %s57, %s60
      %p66 = scmp.eq.s32.totalorder %s21, 0
      %p67 = por %p65, %p66
      %p68 = scmp.ne.s32.totalorder %s57, %s60
      %p69 = scmp.eq.s32.totalorder %s26, 1
      %p70 = por %p68, %p69
      %p71 = scmp.ne.s32.totalorder %s60, %s61
      %p72 = scmp.eq.s32.totalorder %s26, 0
      %p73 = por %p71, %p72
      %p74 = scmp.ne.s32.totalorder %s60, %s61
      %p75 = scmp.eq.s32.totalorder %s27, 1
      %p76 = por %p74, %p75
      %p78 = scmp.ne.s32.totalorder %s61, %s77
      %p79 = scmp.eq.s32.totalorder %s27, 0
      %p80 = por %p78, %p79
      %s81 = ssub.s32 %s21, %s28
      %p82 = scmp.eq.s32.totalorder %s81, 0
      %s84 = sadd.s32 %s83, 1
      %s85 = scalar_select %p82, %s83, %s84
      %p88 = pneg %p82
      %p89 = scmp.eq.s32.totalorder %s21, 1
      %p90 = por %p88, %p89
      %p91 = scmp.ne.s32.totalorder %s83, %s86
      %p92 = scmp.eq.s32.totalorder %s21, 0
      %p93 = por %p91, %p92
      %p94 = scmp.ne.s32.totalorder %s83, %s86
      %p95 = scmp.eq.s32.totalorder %s26, 1
      %p96 = por %p94, %p95
      %p97 = scmp.ne.s32.totalorder %s86, %s87
      %p98 = scmp.eq.s32.totalorder %s26, 0
      %p99 = por %p97, %p98
      %p100 = scmp.ne.s32.totalorder %s86, %s87
      %p101 = scmp.eq.s32.totalorder %s27, 1
      %p102 = por %p100, %p101
      %p104 = scmp.ne.s32.totalorder %s87, %s103
      %p105 = scmp.eq.s32.totalorder %s27, 0
      %p106 = por %p104, %p105
      %s108 = sadd.s32 %s107, 1
      %p111 = scmp.eq.s32.totalorder %s21, 1
      %p112 = scmp.ne.s32.totalorder %s107, %s109
      %p113 = scmp.eq.s32.totalorder %s21, 0
      %p114 = por %p112, %p113
      %p115 = scmp.ne.s32.totalorder %s107, %s109
      %p116 = scmp.eq.s32.totalorder %s26, 1
      %p117 = por %p115, %p116
      %p118 = scmp.ne.s32.totalorder %s109, %s110
      %p119 = scmp.eq.s32.totalorder %s26, 0
      %p120 = por %p118, %p119
      %p121 = scmp.ne.s32.totalorder %s109, %s110
      %p122 = scmp.eq.s32.totalorder %s27, 1
      %p123 = por %p121, %p122
      %p125 = scmp.ne.s32.totalorder %s110, %s124
      %p126 = scmp.eq.s32.totalorder %s27, 0
      %p127 = por %p125, %p126
      %s128 = ssub.s32 %s21, %s28
      %p129 = scmp.eq.s32.totalorder %s128, 0
      %s131 = sadd.s32 %s130, 1
      %s132 = scalar_select %p129, %s130, %s131
      %p135 = pneg %p129
      %p136 = scmp.eq.s32.totalorder %s21, 1
      %p137 = por %p135, %p136
      %p138 = scmp.ne.s32.totalorder %s130, %s133
      %p139 = scmp.eq.s32.totalorder %s21, 0
      %p140 = por %p138, %p139
      %p141 = scmp.ne.s32.totalorder %s130, %s133
      %p142 = scmp.eq.s32.totalorder %s26, 1
      %p143 = por %p141, %p142
      %p144 = scmp.ne.s32.totalorder %s133, %s134
      %p145 = scmp.eq.s32.totalorder %s26, 0
      %p146 = por %p144, %p145
      %p147 = scmp.ne.s32.totalorder %s133, %s134
      %p148 = scmp.eq.s32.totalorder %s27, 1
      %p149 = por %p147, %p148
      %p151 = scmp.ne.s32.totalorder %s134, %s150
      %p152 = scmp.eq.s32.totalorder %s27, 0
      %p153 = por %p151, %p152
      %s154 = ssub.s32 %s21, %s28
      %p155 = scmp.eq.s32.totalorder %s154, 0
      %s157 = sadd.s32 %s156, 1
      %s158 = scalar_select %p155, %s156, %s157
      %p161 = pneg %p155
      %p162 = scmp.eq.s32.totalorder %s21, 1
      %p163 = por %p161, %p162
      %p164 = scmp.ne.s32.totalorder %s156, %s159
      %p165 = scmp.eq.s32.totalorder %s21, 0
      %p166 = por %p164, %p165
      %p167 = scmp.ne.s32.totalorder %s156, %s159
      %p168 = scmp.eq.s32.totalorder %s26, 1
      %p169 = por %p167, %p168
      %p170 = scmp.ne.s32.totalorder %s159, %s160
      %p171 = scmp.eq.s32.totalorder %s26, 0
      %p172 = por %p170, %p171
      %p173 = scmp.ne.s32.totalorder %s159, %s160
      %p174 = scmp.eq.s32.totalorder %s27, 1
      %p175 = por %p173, %p174
      %p177 = scmp.ne.s32.totalorder %s160, %s176
      %p178 = scmp.eq.s32.totalorder %s27, 0
      %p179 = por %p177, %p178
      %p180 = scmp.le.s32.totalorder 1, %s21
      %p181 = scmp.lt.s32.totalorder %s21, 3
      %p182 = pnand %p180, %p181
      %p183 = pneg %p182
      // Predicated region
      $region9: #{tpu_custom_call.1} parent=5 // pred_check
        _
      $region10: #{tpu_custom_call.1} parent=5 // pred_check_branch
        %185 = sbr.rel (%p182) target = $region12
      $region11: #{tpu_custom_call.1} parent=5 // pred_region
        %s186 = ssub.s32 %s21, 1
        // Predicated region
        $region13: #{tpu_custom_call.1} parent=11 // pred_check
          %p187 = pneg %p120
        $region14: #{tpu_custom_call.1} parent=11 // pred_check_branch
          %189 = sbr.rel (%p187) target = $region16
        $region15: #{tpu_custom_call.1} parent=11 // pred_region
          _
        $region16: #{tpu_custom_call.1} parent=11 // pred_fallthru
          _
      $region12: #{tpu_custom_call.1} parent=5 // pred_fallthru
        _
      %p190 = scmp.lt.s32.totalorder %s21, 2
      // Predicated region
      $region17: #{tpu_custom_call.1} parent=5 // pred_check
        %p191 = pneg %p190
      $region18: #{tpu_custom_call.1} parent=5 // pred_check_branch
        %193 = sbr.rel (%p191) target = $region20
      $region19: #{tpu_custom_call.1} parent=5 // pred_region
        // Predicated region
        $region21: #{tpu_custom_call.1} parent=19 // pred_check
          %p194 = pneg %p41
        $region22: #{tpu_custom_call.1} parent=19 // pred_check_branch
          %196 = sbr.rel (%p194) target = $region24
        $region23: #{tpu_custom_call.1} parent=19 // pred_region
          %s197 = sand.u32 %s31, 1
          %s198 = scalar_lea.sflag [#allocation3], %s197
          %s199 = sand.u32 %s31, 1
          %s200 = smul.addr %s199, 128
          %s201 = scalar_lea.vmem [#allocation2], %s200
          %s202 = smul.u32 16, %s21
          %s204 = ssub.s32 2048, 2048
          %205 = vsyncadd %s198, %s204
          %s206 = smul.addr %s202, 128
          %s207 = scalar_lea.hbm %s0, %s206
          %s208 = sshll.u32 %s201, 4
          %s209 = int_to_ptr.vmem [resolvable:$true] %s208
          %214 = dma.hbm_to_vmem [thread:$0]  %s207, 2048, %s209, %s198, 128, 128, 8
        $region24: #{tpu_custom_call.1} parent=19 // pred_fallthru
          _
        // Predicated region
        $region25: #{tpu_custom_call.1} parent=19 // pred_check
          %p215 = pneg %p67
        $region26: #{tpu_custom_call.1} parent=19 // pred_check_branch
          %217 = sbr.rel (%p215) target = $region28
        $region27: #{tpu_custom_call.1} parent=19 // pred_region
          %s218 = smul.u32 16, %s21
          %p219 = scmp.lt.s32.totalorder %s218, 31
          %s220 = scalar_select %p219, %s218, 31
          %s221 = smul.addr %s220, 8
          %s222 = scalar_lea.vmem %s1, %s221
          %s223 = smul.u32 16, %s21
        $region28: #{tpu_custom_call.1} parent=19 // pred_fallthru
          _
        // Predicated region
        $region29: #{tpu_custom_call.1} parent=19 // pred_check
          %p224 = pneg %p93
        $region30: #{tpu_custom_call.1} parent=19 // pred_check_branch
          %226 = sbr.rel (%p224) target = $region32
        $region31: #{tpu_custom_call.1} parent=19 // pred_region
          %s227 = smul.u32 16, %s21
          %p228 = scmp.lt.s32.totalorder %s227, 31
          %s229 = scalar_select %p228, %s227, 31
          %s230 = smul.addr %s229, 8
          %s231 = scalar_lea.vmem %s2, %s230
          %s232 = smul.u32 16, %s21
        $region32: #{tpu_custom_call.1} parent=19 // pred_fallthru
          _
      $region20: #{tpu_custom_call.1} parent=5 // pred_fallthru
        _
      %p233 = scmp.le.s32.totalorder 1, %s21
      %p234 = scmp.lt.s32.totalorder %s21, 3
      %p235 = pnand %p233, %p234
      %p236 = pneg %p235
      // Predicated region
      $region33: #{tpu_custom_call.1} parent=5 // pred_check
        _
      $region34: #{tpu_custom_call.1} parent=5 // pred_check_branch
        %238 = sbr.rel (%p235) target = $region36
      $region35: #{tpu_custom_call.1} parent=5 // pred_region
        %s239 = ssub.s32 %s21, 1
        %s240 = sand.u32 %s34, 1
        %s241 = scalar_lea.sflag [#allocation3], %s240
        %s242 = sand.u32 %s34, 1
        %s243 = smul.addr %s242, 128
        %s244 = scalar_lea.vmem [#allocation2], %s243
        // Predicated region
        $region37: #{tpu_custom_call.1} parent=35 // pred_check
          %p245 = pneg %p47
        $region38: #{tpu_custom_call.1} parent=35 // pred_check_branch
          %247 = sbr.rel (%p245) target = $region40
        $region39: #{tpu_custom_call.1} parent=35 // pred_region
          %248 = dma.done %s241, 2048
        $region40: #{tpu_custom_call.1} parent=35 // pred_fallthru
          _
        %s249 = sand.u32 %s34, 1
        %s250 = scalar_lea.sflag [#allocation3], %s249
        %s251 = sand.u32 %s34, 1
        %s252 = smul.addr %s251, 128
        %s253 = scalar_lea.vmem [#allocation2], %s252
        %p254 = pneg %p47
        %p255 = pneg %p44
        %s256 = smul.u32 16, %s26
        %p257 = scmp.lt.s32.totalorder %s256, 31
        %s258 = scalar_select %p257, %s256, 31
        %s259 = smul.addr %s258, 8
        %s260 = scalar_lea.vmem %s1, %s259
        %p261 = pneg %p73
        %p262 = pneg %p70
        %s263 = smul.u32 16, %s26
        %p264 = scmp.lt.s32.totalorder %s263, 31
        %s265 = scalar_select %p264, %s263, 31
        %s266 = smul.addr %s265, 8
        %s267 = scalar_lea.vmem %s2, %s266
        %p268 = pneg %p99
        %p269 = pneg %p96
        %p270 = pneg %p120
        %p271 = pneg %p117
        %p272 = pneg %p146
        %p273 = pneg %p143
        %s274 = sand.u32 %s133, 1
        %s275 = scalar_lea.sflag [#allocation4], %s274
        %s276 = sand.u32 %s133, 1
        %s277 = smul.addr %s276, 128
        %s278 = scalar_lea.vmem [#allocation5], %s277
        %p279 = pneg %p172
        %p280 = pneg %p169
        %s281 = sand.u32 %s159, 1
        %s282 = scalar_lea.sflag [#allocation7], %s281
        %s283 = sand.u32 %s159, 1
        %s284 = smul.addr %s283, 128
        %s285 = scalar_lea.vmem [#allocation6], %s284
        %s286 = smul.u32 16, %s26
        %s287 = smul.u32 16, %s26
        %p288 = scmp.lt.s32.totalorder %s287, 31
        %s289 = scalar_select %p288, %s287, 31
        %s290 = smul.addr %s289, 8
        %s291 = scalar_lea.vmem %s1, %s290
        %s292 = smul.u32 16, %s26
        %s293 = smul.u32 16, %s26
        %p294 = scmp.lt.s32.totalorder %s293, 31
        %s295 = scalar_select %p294, %s293, 31
        %s296 = smul.addr %s295, 8
        %s297 = scalar_lea.vmem %s2, %s296
        %s298 = smul.u32 16, %s26
        %s299 = smul.u32 16, %s26
        %s300 = smul.u32 16, %s26
        %v301 = vld [vmem:[%s3] sm:$0xff]
        %v302 = vld [vmem:[%s3 + $0x8] sm:$0xff]
        %v303 = vld [vmem:[%s3 + $0x10] sm:$0xff]
        %v304 = vld [vmem:[%s3 + $0x18] sm:$0xff]
        %v305 = vld [vmem:[%s3 + $0x20] sm:$0xff]
        %v306 = vld [vmem:[%s3 + $0x28] sm:$0xff]
        %v307 = vld [vmem:[%s3 + $0x30] sm:$0xff]
        %v308 = vld [vmem:[%s3 + $0x38] sm:$0xff]
        %v309 = vld [vmem:[%s3 + $0x40] sm:$0xff]
        %v310 = vld [vmem:[%s3 + $0x48] sm:$0xff]
        %v311 = vld [vmem:[%s3 + $0x50] sm:$0xff]
        %v312 = vld [vmem:[%s3 + $0x58] sm:$0xff]
        %v313 = vld [vmem:[%s3 + $0x60] sm:$0xff]
        %v314 = vld [vmem:[%s3 + $0x68] sm:$0xff]
        %v315 = vld [vmem:[%s3 + $0x70] sm:$0xff]
        %v316 = vld [vmem:[%s3 + $0x78] sm:$0xff]
        %v317 = vld [vmem:[%s244] sm:$0xff]
        %v318 = vld [vmem:[%s244 + $0x8] sm:$0xff]
        %v319 = vld [vmem:[%s244 + $0x10] sm:$0xff]
        %v320 = vld [vmem:[%s244 + $0x18] sm:$0xff]
        %v321 = vld [vmem:[%s244 + $0x20] sm:$0xff]
        %v322 = vld [vmem:[%s244 + $0x28] sm:$0xff]
        %v323 = vld [vmem:[%s244 + $0x30] sm:$0xff]
        %v324 = vld [vmem:[%s244 + $0x38] sm:$0xff]
        %v325 = vld [vmem:[%s244 + $0x40] sm:$0xff]
        %v326 = vld [vmem:[%s244 + $0x48] sm:$0xff]
        %v327 = vld [vmem:[%s244 + $0x50] sm:$0xff]
        %v328 = vld [vmem:[%s244 + $0x58] sm:$0xff]
        %v329 = vld [vmem:[%s244 + $0x60] sm:$0xff]
        %v330 = vld [vmem:[%s244 + $0x68] sm:$0xff]
        %v331 = vld [vmem:[%s244 + $0x70] sm:$0xff]
        %v332 = vld [vmem:[%s244 + $0x78] sm:$0xff]
        %v333 = vld [vmem:[%s291] sm:$0xff]
        %v334 = vld [vmem:[%s291 + $0x8] sm:$0xff]
        %v335 = vld [vmem:[%s291 + $0x10] sm:$0xff]
        %v336 = vld [vmem:[%s291 + $0x18] sm:$0xff]
        %v337 = vld [vmem:[%s291 + $0x20] sm:$0xff]
        %v338 = vld [vmem:[%s291 + $0x28] sm:$0xff]
        %v339 = vld [vmem:[%s291 + $0x30] sm:$0xff]
        %v340 = vld [vmem:[%s291 + $0x38] sm:$0xff]
        %v341 = vld [vmem:[%s291 + $0x40] sm:$0xff]
        %v342 = vld [vmem:[%s291 + $0x48] sm:$0xff]
        %v343 = vld [vmem:[%s291 + $0x50] sm:$0xff]
        %v344 = vld [vmem:[%s291 + $0x58] sm:$0xff]
        %v345 = vld [vmem:[%s291 + $0x60] sm:$0xff]
        %v346 = vld [vmem:[%s291 + $0x68] sm:$0xff]
        %v347 = vld [vmem:[%s291 + $0x70] sm:$0xff]
        %v348 = vld [vmem:[%s291 + $0x78] sm:$0xff]
        %349 = vmatprep.subr.mxu0 0.0
        %350 = vmatpush1.msra.mxu0 %v301
        %351 = vmatprep.subr.mxu0 0.0
        %352 = vmatpush1.msra.mxu0 %v302
        %353 = vmatprep.subr.mxu0 0.0
        %354 = vmatpush1.msra.mxu0 %v303
        %355 = vmatprep.subr.mxu0 0.0
        %356 = vmatpush1.msra.mxu0 %v304
        %357 = vmatprep.subr.mxu0 0.0
        %358 = vmatpush1.msra.mxu0 %v305
        %359 = vmatprep.subr.mxu0 0.0
        %360 = vmatpush1.msra.mxu0 %v306
        %361 = vmatprep.subr.mxu0 0.0
        %362 = vmatpush1.msra.mxu0 %v307
        %363 = vmatprep.subr.mxu0 0.0
        %364 = vmatpush1.msra.mxu0 %v308
        %365 = vmatprep.subr.mxu0 0.0
        %366 = vmatpush1.msra.mxu0 %v309
        %367 = vmatprep.subr.mxu0 0.0
        %368 = vmatpush1.msra.mxu0 %v310
        %369 = vmatprep.subr.mxu0 0.0
        %370 = vmatpush1.msra.mxu0 %v311
        %371 = vmatprep.subr.mxu0 0.0
        %372 = vmatpush1.msra.mxu0 %v312
        %373 = vmatprep.subr.mxu0 0.0
        %374 = vmatpush1.msra.mxu0 %v313
        %375 = vmatprep.subr.mxu0 0.0
        %376 = vmatpush1.msra.mxu0 %v314
        %377 = vmatprep.subr.mxu0 0.0
        %378 = vmatpush1.msra.mxu0 %v315
        %379 = vmatprep.subr.mxu0 0.0
        %380 = vmatpush1.msra.mxu0 %v316
        %381 = vmatprep.subr.mxu0 0.0
        %382 = vmatpush1.msra.mxu0 0.0
        %383 = vmatprep.subr.mxu0 0.0
        %384 = vmatpush1.msra.mxu0 0.0
        %385 = vmatprep.subr.mxu0 0.0
        %386 = vmatpush1.msra.mxu0 0.0
        %387 = vmatprep.subr.mxu0 0.0
        %388 = vmatpush1.msra.mxu0 0.0
        %389 = vmatprep.subr.mxu0 0.0
        %390 = vmatpush1.msra.mxu0 0.0
        %391 = vmatprep.subr.mxu0 0.0
        %392 = vmatpush1.msra.mxu0 0.0
        %393 = vmatprep.subr.mxu0 0.0
        %394 = vmatpush1.msra.mxu0 0.0
        %395 = vmatprep.subr.mxu0 0.0
        %396 = vmatpush1.msra.mxu0 0.0
        %397 = vmatprep.subr.mxu0 0.0
        %398 = vmatpush1.msra.mxu0 0.0
        %399 = vmatprep.subr.mxu0 0.0
        %400 = vmatpush1.msra.mxu0 0.0
        %401 = vmatprep.subr.mxu0 0.0
        %402 = vmatpush1.msra.mxu0 0.0
        %403 = vmatprep.subr.mxu0 0.0
        %404 = vmatpush1.msra.mxu0 0.0
        %405 = vmatprep.subr.mxu0 0.0
        %406 = vmatpush1.msra.mxu0 0.0
        %407 = vmatprep.subr.mxu0 0.0
        %408 = vmatpush1.msra.mxu0 0.0
        %409 = vmatprep.subr.mxu0 0.0
        %410 = vmatpush1.msra.mxu0 0.0
        %411 = vmatprep.subr.mxu0 0.0
        %412 = vmatpush1.msra.mxu0 0.0
        %413 = vmatprep.mubr.f32.mxu0 0.0
        %414 = vmatmul.mubr.f32.gmra.mrb[0].mxu0 %v317
        %v415 = vpop.f32.mrb[0].mxu0
        %v416 = vadd.f32 0.0, %v415
        %v417 = vpop.f32.mrb[0].mxu0
        %418 = vmatprep.mubr.f32.mxu0 0.0
        %419 = vmatmul.mubr.f32.gmra.mrb[0].mxu0 %v318
        %v420 = vpop.f32.mrb[0].mxu0
        %v421 = vadd.f32 0.0, %v420
        %v422 = vpop.f32.mrb[0].mxu0
        %423 = vmatprep.mubr.f32.mxu0 0.0
        %424 = vmatmul.mubr.f32.gmra.mrb[0].mxu0 %v319
        %v425 = vpop.f32.mrb[0].mxu0
        %v426 = vadd.f32 0.0, %v425
        %v427 = vpop.f32.mrb[0].mxu0
        %428 = vmatprep.mubr.f32.mxu0 0.0
        %429 = vmatmul.mubr.f32.gmra.mrb[0].mxu0 %v320
        %v430 = vpop.f32.mrb[0].mxu0
        %v431 = vadd.f32 0.0, %v430
        %v432 = vpop.f32.mrb[0].mxu0
        %433 = vmatprep.mubr.f32.mxu0 0.0
        %434 = vmatmul.mubr.f32.gmra.mrb[0].mxu0 %v321
        %v435 = vpop.f32.mrb[0].mxu0
        %v436 = vadd.f32 0.0, %v435
        %v437 = vpop.f32.mrb[0].mxu0
        %438 = vmatprep.mubr.f32.mxu0 0.0
        %439 = vmatmul.mubr.f32.gmra.mrb[0].mxu0 %v322
        %v440 = vpop.f32.mrb[0].mxu0
        %v441 = vadd.f32 0.0, %v440
        %v442 = vpop.f32.mrb[0].mxu0
        %443 = vmatprep.mubr.f32.mxu0 0.0
        %444 = vmatmul.mubr.f32.gmra.mrb[0].mxu0 %v323
        %v445 = vpop.f32.mrb[0].mxu0
        %v446 = vadd.f32 0.0, %v445
        %v447 = vpop.f32.mrb[0].mxu0
        %448 = vmatprep.mubr.f32.mxu0 0.0
        %449 = vmatmul.mubr.f32.gmra.mrb[0].mxu0 %v324
        %v450 = vpop.f32.mrb[0].mxu0
        %v451 = vadd.f32 0.0, %v450
        %v452 = vpop.f32.mrb[0].mxu0
        %453 = vdwg.mxu0
        %v454 = vmul.f32 %v317, %v416
        %v455 = vmul.f32 %v318, %v421
        %v456 = vmul.f32 %v319, %v426
        %v457 = vmul.f32 %v320, %v431
        %v458 = vmul.f32 %v321, %v436
        %v459 = vmul.f32 %v322, %v441
        %v460 = vmul.f32 %v323, %v446
        %v461 = vmul.f32 %v324, %v451
        %462 = vadd.xlane.f32.xlu0 %v454
        %v463 = vpop.xlane.xlu0 %462
        %464 = vadd.xlane.f32.xlu0 %v455
        %v465 = vpop.xlane.xlu0 %464
        %466 = vadd.xlane.f32.xlu0 %v456
        %v467 = vpop.xlane.xlu0 %466
        %468 = vadd.xlane.f32.xlu0 %v457
        %v469 = vpop.xlane.xlu0 %468
        %470 = vadd.xlane.f32.xlu0 %v458
        %v471 = vpop.xlane.xlu0 %470
        %472 = vadd.xlane.f32.xlu0 %v459
        %v473 = vpop.xlane.xlu0 %472
        %474 = vadd.xlane.f32.xlu0 %v460
        %v475 = vpop.xlane.xlu0 %474
        %476 = vadd.xlane.f32.xlu0 %v461
        %v477 = vpop.xlane.xlu0 %476
        %v478 = vmul.f32 %v463, 0.5
        %v479 = vmul.f32 %v465, 0.5
        %v480 = vmul.f32 %v467, 0.5
        %v481 = vmul.f32 %v469, 0.5
        %v482 = vmul.f32 %v471, 0.5
        %v483 = vmul.f32 %v473, 0.5
        %v484 = vmul.f32 %v475, 0.5
        %v485 = vmul.f32 %v477, 0.5
        %v486 = vmul.f32 %v333, %v333
        %v487 = vmul.f32 %v334, %v334
        %v488 = vmul.f32 %v335, %v335
        %v489 = vmul.f32 %v336, %v336
        %v490 = vmul.f32 %v337, %v337
        %v491 = vmul.f32 %v338, %v338
        %v492 = vmul.f32 %v339, %v339
        %v493 = vmul.f32 %v340, %v340
        %494 = vadd.xlane.f32.xlu0 %v486
        %v495 = vpop.xlane.xlu0 %494
        %496 = vadd.xlane.f32.xlu0 %v487
        %v497 = vpop.xlane.xlu0 %496
        %498 = vadd.xlane.f32.xlu0 %v488
        %v499 = vpop.xlane.xlu0 %498
        %500 = vadd.xlane.f32.xlu0 %v489
        %v501 = vpop.xlane.xlu0 %500
        %502 = vadd.xlane.f32.xlu0 %v490
        %v503 = vpop.xlane.xlu0 %502
        %504 = vadd.xlane.f32.xlu0 %v491
        %v505 = vpop.xlane.xlu0 %504
        %506 = vadd.xlane.f32.xlu0 %v492
        %v507 = vpop.xlane.xlu0 %506
        %508 = vadd.xlane.f32.xlu0 %v493
        %v509 = vpop.xlane.xlu0 %508
        %v510 = vmul.f32 %v495, 0.5
        %v511 = vmul.f32 %v497, 0.5
        %v512 = vmul.f32 %v499, 0.5
        %v513 = vmul.f32 %v501, 0.5
        %v514 = vmul.f32 %v503, 0.5
        %v515 = vmul.f32 %v505, 0.5
        %v516 = vmul.f32 %v507, 0.5
        %v517 = vmul.f32 %v509, 0.5
        %v518 = vmul.f32 %v416, 0.01
        %v519 = vmul.f32 %v421, 0.01
        %v520 = vmul.f32 %v426, 0.01
        %v521 = vmul.f32 %v431, 0.01
        %v522 = vmul.f32 %v436, 0.01
        %v523 = vmul.f32 %v441, 0.01
        %v524 = vmul.f32 %v446, 0.01
        %v525 = vmul.f32 %v451, 0.01
        %v526 = vmul.f32 %v518, 0.5
        %v527 = vmul.f32 %v519, 0.5
        %v528 = vmul.f32 %v520, 0.5
        %v529 = vmul.f32 %v521, 0.5
        %v530 = vmul.f32 %v522, 0.5
        %v531 = vmul.f32 %v523, 0.5
        %v532 = vmul.f32 %v524, 0.5
        %v533 = vmul.f32 %v525, 0.5
        %v534 = vsub.f32 %v333, %v526
        %v535 = vsub.f32 %v334, %v527
        %v536 = vsub.f32 %v335, %v528
        %v537 = vsub.f32 %v336, %v529
        %v538 = vsub.f32 %v337, %v530
        %v539 = vsub.f32 %v338, %v531
        %v540 = vsub.f32 %v339, %v532
        %v541 = vsub.f32 %v340, %v533
        %v542 = vmul.f32 %v534, 0.01
        %v543 = vmul.f32 %v535, 0.01
        %v544 = vmul.f32 %v536, 0.01
        %v545 = vmul.f32 %v537, 0.01
        %v546 = vmul.f32 %v538, 0.01
        %v547 = vmul.f32 %v539, 0.01
        %v548 = vmul.f32 %v540, 0.01
        %v549 = vmul.f32 %v541, 0.01
        %v550 = vsub.f32 %v317, %v542
        %v551 = vsub.f32 %v318, %v543
        %v552 = vsub.f32 %v319, %v544
        %v553 = vsub.f32 %v320, %v545
        %v554 = vsub.f32 %v321, %v546
        %v555 = vsub.f32 %v322, %v547
        %v556 = vsub.f32 %v323, %v548
        %v557 = vsub.f32 %v324, %v549
        %558 = vmatprep.subr.mxu0 0.0
        %559 = vmatpush1.msra.mxu0 %v301
        %560 = vmatprep.subr.mxu0 0.0
        %561 = vmatpush1.msra.mxu0 %v302
        %562 = vmatprep.subr.mxu0 0.0
        %563 = vmatpush1.msra.mxu0 %v303
        %564 = vmatprep.subr.mxu0 0.0
        %565 = vmatpush1.msra.mxu0 %v304
        %566 = vmatprep.subr.mxu0 0.0
        %567 = vmatpush1.msra.mxu0 %v305
        %568 = vmatprep.subr.mxu0 0.0
        %569 = vmatpush1.msra.mxu0 %v306
        %570 = vmatprep.subr.mxu0 0.0
        %571 = vmatpush1.msra.mxu0 %v307
        %572 = vmatprep.subr.mxu0 0.0
        %573 = vmatpush1.msra.mxu0 %v308
        %574 = vmatprep.subr.mxu0 0.0
        %575 = vmatpush1.msra.mxu0 %v309
        %576 = vmatprep.subr.mxu0 0.0
        %577 = vmatpush1.msra.mxu0 %v310
        %578 = vmatprep.subr.mxu0 0.0
        %579 = vmatpush1.msra.mxu0 %v311
        %580 = vmatprep.subr.mxu0 0.0
        %581 = vmatpush1.msra.mxu0 %v312
        %582 = vmatprep.subr.mxu0 0.0
        %583 = vmatpush1.msra.mxu0 %v313
        %584 = vmatprep.subr.mxu0 0.0
        %585 = vmatpush1.msra.mxu0 %v314
        %586 = vmatprep.subr.mxu0 0.0
        %587 = vmatpush1.msra.mxu0 %v315
        %588 = vmatprep.subr.mxu0 0.0
        %589 = vmatpush1.msra.mxu0 %v316
        %590 = vmatprep.subr.mxu0 0.0
        %591 = vmatpush1.msra.mxu0 0.0
        %592 = vmatprep.subr.mxu0 0.0
        %593 = vmatpush1.msra.mxu0 0.0
        %594 = vmatprep.subr.mxu0 0.0
        %595 = vmatpush1.msra.mxu0 0.0
        %596 = vmatprep.subr.mxu0 0.0
        %597 = vmatpush1.msra.mxu0 0.0
        %598 = vmatprep.subr.mxu0 0.0
        %599 = vmatpush1.msra.mxu0 0.0
        %600 = vmatprep.subr.mxu0 0.0
        %601 = vmatpush1.msra.mxu0 0.0
        %602 = vmatprep.subr.mxu0 0.0
        %603 = vmatpush1.msra.mxu0 0.0
        %604 = vmatprep.subr.mxu0 0.0
        %605 = vmatpush1.msra.mxu0 0.0
        %606 = vmatprep.subr.mxu0 0.0
        %607 = vmatpush1.msra.mxu0 0.0
        %608 = vmatprep.subr.mxu0 0.0
        %609 = vmatpush1.msra.mxu0 0.0
        %610 = vmatprep.subr.mxu0 0.0
        %611 = vmatpush1.msra.mxu0 0.0
        %612 = vmatprep.subr.mxu0 0.0
        %613 = vmatpush1.msra.mxu0 0.0
        %614 = vmatprep.subr.mxu0 0.0
        %615 = vmatpush1.msra.mxu0 0.0
        %616 = vmatprep.subr.mxu0 0.0
        %617 = vmatpush1.msra.mxu0 0.0
        %618 = vmatprep.subr.mxu0 0.0
        %619 = vmatpush1.msra.mxu0 0.0
        %620 = vmatprep.subr.mxu0 0.0
        %621 = vmatpush1.msra.mxu0 0.0
        %622 = vmatprep.mubr.f32.mxu0 0.0
        %623 = vmatmul.mubr.f32.gmra.mrb[0].mxu0 %v325
        %v624 = vpop.f32.mrb[0].mxu0
        %v625 = vadd.f32 0.0, %v624
        %v626 = vpop.f32.mrb[0].mxu0
        %627 = vmatprep.mubr.f32.mxu0 0.0
        %628 = vmatmul.mubr.f32.gmra.mrb[0].mxu0 %v326
        %v629 = vpop.f32.mrb[0].mxu0
        %v630 = vadd.f32 0.0, %v629
        %v631 = vpop.f32.mrb[0].mxu0
        %632 = vmatprep.mubr.f32.mxu0 0.0
        %633 = vmatmul.mubr.f32.gmra.mrb[0].mxu0 %v327
        %v634 = vpop.f32.mrb[0].mxu0
        %v635 = vadd.f32 0.0, %v634
        %v636 = vpop.f32.mrb[0].mxu0
        %637 = vmatprep.mubr.f32.mxu0 0.0
        %638 = vmatmul.mubr.f32.gmra.mrb[0].mxu0 %v328
        %v639 = vpop.f32.mrb[0].mxu0
        %v640 = vadd.f32 0.0, %v639
        %v641 = vpop.f32.mrb[0].mxu0
        %642 = vmatprep.mubr.f32.mxu0 0.0
        %643 = vmatmul.mubr.f32.gmra.mrb[0].mxu0 %v329
        %v644 = vpop.f32.mrb[0].mxu0
        %v645 = vadd.f32 0.0, %v644
        %v646 = vpop.f32.mrb[0].mxu0
        %647 = vmatprep.mubr.f32.mxu0 0.0
        %648 = vmatmul.mubr.f32.gmra.mrb[0].mxu0 %v330
        %v649 = vpop.f32.mrb[0].mxu0
        %v650 = vadd.f32 0.0, %v649
        %v651 = vpop.f32.mrb[0].mxu0
        %652 = vmatprep.mubr.f32.mxu0 0.0
        %653 = vmatmul.mubr.f32.gmra.mrb[0].mxu0 %v331
        %v654 = vpop.f32.mrb[0].mxu0
        %v655 = vadd.f32 0.0, %v654
        %v656 = vpop.f32.mrb[0].mxu0
        %657 = vmatprep.mubr.f32.mxu0 0.0
        %658 = vmatmul.mubr.f32.gmra.mrb[0].mxu0 %v332
        %v659 = vpop.f32.mrb[0].mxu0
        %v660 = vadd.f32 0.0, %v659
        %v661 = vpop.f32.mrb[0].mxu0
        %662 = vdwg.mxu0
        %v663 = vmul.f32 %v325, %v625
        %v664 = vmul.f32 %v326, %v630
        %v665 = vmul.f32 %v327, %v635
        %v666 = vmul.f32 %v328, %v640
        %v667 = vmul.f32 %v329, %v645
        %v668 = vmul.f32 %v330, %v650
        %v669 = vmul.f32 %v331, %v655
        %v670 = vmul.f32 %v332, %v660
        %671 = vadd.xlane.f32.xlu0 %v663
        %v672 = vpop.xlane.xlu0 %671
        %673 = vadd.xlane.f32.xlu0 %v664
        %v674 = vpop.xlane.xlu0 %673
        %675 = vadd.xlane.f32.xlu0 %v665
        %v676 = vpop.xlane.xlu0 %675
        %677 = vadd.xlane.f32.xlu0 %v666
        %v678 = vpop.xlane.xlu0 %677
        %679 = vadd.xlane.f32.xlu0 %v667
        %v680 = vpop.xlane.xlu0 %679
        %681 = vadd.xlane.f32.xlu0 %v668
        %v682 = vpop.xlane.xlu0 %681
        %683 = vadd.xlane.f32.xlu0 %v669
        %v684 = vpop.xlane.xlu0 %683
        %685 = vadd.xlane.f32.xlu0 %v670
        %v686 = vpop.xlane.xlu0 %685
        %v687 = vmul.f32 %v672, 0.5
        %v688 = vmul.f32 %v674, 0.5
        %v689 = vmul.f32 %v676, 0.5
        %v690 = vmul.f32 %v678, 0.5
        %v691 = vmul.f32 %v680, 0.5
        %v692 = vmul.f32 %v682, 0.5
        %v693 = vmul.f32 %v684, 0.5
        %v694 = vmul.f32 %v686, 0.5
        %v695 = vmul.f32 %v341, %v341
        %v696 = vmul.f32 %v342, %v342
        %v697 = vmul.f32 %v343, %v343
        %v698 = vmul.f32 %v344, %v344
        %v699 = vmul.f32 %v345, %v345
        %v700 = vmul.f32 %v346, %v346
        %v701 = vmul.f32 %v347, %v347
        %v702 = vmul.f32 %v348, %v348
        %703 = vadd.xlane.f32.xlu0 %v695
        %v704 = vpop.xlane.xlu0 %703
        %705 = vadd.xlane.f32.xlu0 %v696
        %v706 = vpop.xlane.xlu0 %705
        %707 = vadd.xlane.f32.xlu0 %v697
        %v708 = vpop.xlane.xlu0 %707
        %709 = vadd.xlane.f32.xlu0 %v698
        %v710 = vpop.xlane.xlu0 %709
        %711 = vadd.xlane.f32.xlu0 %v699
        %v712 = vpop.xlane.xlu0 %711
        %713 = vadd.xlane.f32.xlu0 %v700
        %v714 = vpop.xlane.xlu0 %713
        %715 = vadd.xlane.f32.xlu0 %v701
        %v716 = vpop.xlane.xlu0 %715
        %717 = vadd.xlane.f32.xlu0 %v702
        %v718 = vpop.xlane.xlu0 %717
        %v719 = vmul.f32 %v704, 0.5
        %v720 = vmul.f32 %v706, 0.5
        %v721 = vmul.f32 %v708, 0.5
        %v722 = vmul.f32 %v710, 0.5
        %v723 = vmul.f32 %v712, 0.5
        %v724 = vmul.f32 %v714, 0.5
        %v725 = vmul.f32 %v716, 0.5
        %v726 = vmul.f32 %v718, 0.5
        %v727 = vmul.f32 %v625, 0.01
        %v728 = vmul.f32 %v630, 0.01
        %v729 = vmul.f32 %v635, 0.01
        %v730 = vmul.f32 %v640, 0.01
        %v731 = vmul.f32 %v645, 0.01
        %v732 = vmul.f32 %v650, 0.01
        %v733 = vmul.f32 %v655, 0.01
        %v734 = vmul.f32 %v660, 0.01
        %v735 = vmul.f32 %v727, 0.5
        %v736 = vmul.f32 %v728, 0.5
        %v737 = vmul.f32 %v729, 0.5
        %v738 = vmul.f32 %v730, 0.5
        %v739 = vmul.f32 %v731, 0.5
        %v740 = vmul.f32 %v732, 0.5
        %v741 = vmul.f32 %v733, 0.5
        %v742 = vmul.f32 %v734, 0.5
        %v743 = vsub.f32 %v341, %v735
        %v744 = vsub.f32 %v342, %v736
        %v745 = vsub.f32 %v343, %v737
        %v746 = vsub.f32 %v344, %v738
        %v747 = vsub.f32 %v345, %v739
        %v748 = vsub.f32 %v346, %v740
        %v749 = vsub.f32 %v347, %v741
        %v750 = vsub.f32 %v348, %v742
        %v751 = vmul.f32 %v743, 0.01
        %v752 = vmul.f32 %v744, 0.01
        %v753 = vmul.f32 %v745, 0.01
        %v754 = vmul.f32 %v746, 0.01
        %v755 = vmul.f32 %v747, 0.01
        %v756 = vmul.f32 %v748, 0.01
        %v757 = vmul.f32 %v749, 0.01
        %v758 = vmul.f32 %v750, 0.01
        %v759 = vsub.f32 %v325, %v751
        %v760 = vsub.f32 %v326, %v752
        %v761 = vsub.f32 %v327, %v753
        %v762 = vsub.f32 %v328, %v754
        %v763 = vsub.f32 %v329, %v755
        %v764 = vsub.f32 %v330, %v756
        %v765 = vsub.f32 %v331, %v757
        %v766 = vsub.f32 %v332, %v758
        %767 = vmatprep.subr.mxu0 0.0
        %768 = vmatpush1.msra.mxu0 %v301
        %769 = vmatprep.subr.mxu0 0.0
        %770 = vmatpush1.msra.mxu0 %v302
        %771 = vmatprep.subr.mxu0 0.0
        %772 = vmatpush1.msra.mxu0 %v303
        %773 = vmatprep.subr.mxu0 0.0
        %774 = vmatpush1.msra.mxu0 %v304
        %775 = vmatprep.subr.mxu0 0.0
        %776 = vmatpush1.msra.mxu0 %v305
        %777 = vmatprep.subr.mxu0 0.0
        %778 = vmatpush1.msra.mxu0 %v306
        %779 = vmatprep.subr.mxu0 0.0
        %780 = vmatpush1.msra.mxu0 %v307
        %781 = vmatprep.subr.mxu0 0.0
        %782 = vmatpush1.msra.mxu0 %v308
        %783 = vmatprep.subr.mxu0 0.0
        %784 = vmatpush1.msra.mxu0 %v309
        %785 = vmatprep.subr.mxu0 0.0
        %786 = vmatpush1.msra.mxu0 %v310
        %787 = vmatprep.subr.mxu0 0.0
        %788 = vmatpush1.msra.mxu0 %v311
        %789 = vmatprep.subr.mxu0 0.0
        %790 = vmatpush1.msra.mxu0 %v312
        %791 = vmatprep.subr.mxu0 0.0
        %792 = vmatpush1.msra.mxu0 %v313
        %793 = vmatprep.subr.mxu0 0.0
        %794 = vmatpush1.msra.mxu0 %v314
        %795 = vmatprep.subr.mxu0 0.0
        %796 = vmatpush1.msra.mxu0 %v315
        %797 = vmatprep.subr.mxu0 0.0
        %798 = vmatpush1.msra.mxu0 %v316
        %799 = vmatprep.subr.mxu0 0.0
        %800 = vmatpush1.msra.mxu0 0.0
        %801 = vmatprep.subr.mxu0 0.0
        %802 = vmatpush1.msra.mxu0 0.0
        %803 = vmatprep.subr.mxu0 0.0
        %804 = vmatpush1.msra.mxu0 0.0
        %805 = vmatprep.subr.mxu0 0.0
        %806 = vmatpush1.msra.mxu0 0.0
        %807 = vmatprep.subr.mxu0 0.0
        %808 = vmatpush1.msra.mxu0 0.0
        %809 = vmatprep.subr.mxu0 0.0
        %810 = vmatpush1.msra.mxu0 0.0
        %811 = vmatprep.subr.mxu0 0.0
        %812 = vmatpush1.msra.mxu0 0.0
        %813 = vmatprep.subr.mxu0 0.0
        %814 = vmatpush1.msra.mxu0 0.0
        %815 = vmatprep.subr.mxu0 0.0
        %816 = vmatpush1.msra.mxu0 0.0
        %817 = vmatprep.subr.mxu0 0.0
        %818 = vmatpush1.msra.mxu0 0.0
        %819 = vmatprep.subr.mxu0 0.0
        %820 = vmatpush1.msra.mxu0 0.0
        %821 = vmatprep.subr.mxu0 0.0
        %822 = vmatpush1.msra.mxu0 0.0
        %823 = vmatprep.subr.mxu0 0.0
        %824 = vmatpush1.msra.mxu0 0.0
        %825 = vmatprep.subr.mxu0 0.0
        %826 = vmatpush1.msra.mxu0 0.0
        %827 = vmatprep.subr.mxu0 0.0
        %828 = vmatpush1.msra.mxu0 0.0
        %829 = vmatprep.subr.mxu0 0.0
        %830 = vmatpush1.msra.mxu0 0.0
        %831 = vmatprep.mubr.f32.mxu0 0.0
        %832 = vmatmul.mubr.f32.gmra.mrb[0].mxu0 %v550
        %v833 = vpop.f32.mrb[0].mxu0
        %v834 = vadd.f32 0.0, %v833
        %v835 = vpop.f32.mrb[0].mxu0
        %836 = vmatprep.mubr.f32.mxu0 0.0
        %837 = vmatmul.mubr.f32.gmra.mrb[0].mxu0 %v551
        %v838 = vpop.f32.mrb[0].mxu0
        %v839 = vadd.f32 0.0, %v838
        %v840 = vpop.f32.mrb[0].mxu0
        %841 = vmatprep.mubr.f32.mxu0 0.0
        %842 = vmatmul.mubr.f32.gmra.mrb[0].mxu0 %v552
        %v843 = vpop.f32.mrb[0].mxu0
        %v844 = vadd.f32 0.0, %v843
        %v845 = vpop.f32.mrb[0].mxu0
        %846 = vmatprep.mubr.f32.mxu0 0.0
        %847 = vmatmul.mubr.f32.gmra.mrb[0].mxu0 %v553
        %v848 = vpop.f32.mrb[0].mxu0
        %v849 = vadd.f32 0.0, %v848
        %v850 = vpop.f32.mrb[0].mxu0
        %851 = vmatprep.mubr.f32.mxu0 0.0
        %852 = vmatmul.mubr.f32.gmra.mrb[0].mxu0 %v554
        %v853 = vpop.f32.mrb[0].mxu0
        %v854 = vadd.f32 0.0, %v853
        %v855 = vpop.f32.mrb[0].mxu0
        %856 = vmatprep.mubr.f32.mxu0 0.0
        %857 = vmatmul.mubr.f32.gmra.mrb[0].mxu0 %v555
        %v858 = vpop.f32.mrb[0].mxu0
        %v859 = vadd.f32 0.0, %v858
        %v860 = vpop.f32.mrb[0].mxu0
        %861 = vmatprep.mubr.f32.mxu0 0.0
        %862 = vmatmul.mubr.f32.gmra.mrb[0].mxu0 %v556
        %v863 = vpop.f32.mrb[0].mxu0
        %v864 = vadd.f32 0.0, %v863
        %v865 = vpop.f32.mrb[0].mxu0
        %866 = vmatprep.mubr.f32.mxu0 0.0
        %867 = vmatmul.mubr.f32.gmra.mrb[0].mxu0 %v557
        %v868 = vpop.f32.mrb[0].mxu0
        %v869 = vadd.f32 0.0, %v868
        %v870 = vpop.f32.mrb[0].mxu0
        %871 = vdwg.mxu0
        %872 = vmatprep.subr.mxu0 0.0
        %873 = vmatpush1.msra.mxu0 %v301
        %874 = vmatprep.subr.mxu0 0.0
        %875 = vmatpush1.msra.mxu0 %v302
        %876 = vmatprep.subr.mxu0 0.0
        %877 = vmatpush1.msra.mxu0 %v303
        %878 = vmatprep.subr.mxu0 0.0
        %879 = vmatpush1.msra.mxu0 %v304
        %880 = vmatprep.subr.mxu0 0.0
        %881 = vmatpush1.msra.mxu0 %v305
        %882 = vmatprep.subr.mxu0 0.0
        %883 = vmatpush1.msra.mxu0 %v306
        %884 = vmatprep.subr.mxu0 0.0
        %885 = vmatpush1.msra.mxu0 %v307
        %886 = vmatprep.subr.mxu0 0.0
        %887 = vmatpush1.msra.mxu0 %v308
        %888 = vmatprep.subr.mxu0 0.0
        %889 = vmatpush1.msra.mxu0 %v309
        %890 = vmatprep.subr.mxu0 0.0
        %891 = vmatpush1.msra.mxu0 %v310
        %892 = vmatprep.subr.mxu0 0.0
        %893 = vmatpush1.msra.mxu0 %v311
        %894 = vmatprep.subr.mxu0 0.0
        %895 = vmatpush1.msra.mxu0 %v312
        %896 = vmatprep.subr.mxu0 0.0
        %897 = vmatpush1.msra.mxu0 %v313
        %898 = vmatprep.subr.mxu0 0.0
        %899 = vmatpush1.msra.mxu0 %v314
        %900 = vmatprep.subr.mxu0 0.0
        %901 = vmatpush1.msra.mxu0 %v315
        %902 = vmatprep.subr.mxu0 0.0
        %903 = vmatpush1.msra.mxu0 %v316
        %904 = vmatprep.subr.mxu0 0.0
        %905 = vmatpush1.msra.mxu0 0.0
        %906 = vmatprep.subr.mxu0 0.0
        %907 = vmatpush1.msra.mxu0 0.0
        %908 = vmatprep.subr.mxu0 0.0
        %909 = vmatpush1.msra.mxu0 0.0
        %910 = vmatprep.subr.mxu0 0.0
        %911 = vmatpush1.msra.mxu0 0.0
        %912 = vmatprep.subr.mxu0 0.0
        %913 = vmatpush1.msra.mxu0 0.0
        %914 = vmatprep.subr.mxu0 0.0
        %915 = vmatpush1.msra.mxu0 0.0
        %916 = vmatprep.subr.mxu0 0.0
        %917 = vmatpush1.msra.mxu0 0.0
        %918 = vmatprep.subr.mxu0 0.0
        %919 = vmatpush1.msra.mxu0 0.0
        %920 = vmatprep.subr.mxu0 0.0
        %921 = vmatpush1.msra.mxu0 0.0
        %922 = vmatprep.subr.mxu0 0.0
        %923 = vmatpush1.msra.mxu0 0.0
        %924 = vmatprep.subr.mxu0 0.0
        %925 = vmatpush1.msra.mxu0 0.0
        %926 = vmatprep.subr.mxu0 0.0
        %927 = vmatpush1.msra.mxu0 0.0
        %928 = vmatprep.subr.mxu0 0.0
        %929 = vmatpush1.msra.mxu0 0.0
        %930 = vmatprep.subr.mxu0 0.0
        %931 = vmatpush1.msra.mxu0 0.0
        %932 = vmatprep.subr.mxu0 0.0
        %933 = vmatpush1.msra.mxu0 0.0
        %934 = vmatprep.subr.mxu0 0.0
        %935 = vmatpush1.msra.mxu0 0.0
        %936 = vmatprep.mubr.f32.mxu0 0.0
        %937 = vmatmul.mubr.f32.gmra.mrb[0].mxu0 %v759
        %v938 = vpop.f32.mrb[0].mxu0
        %v939 = vadd.f32 0.0, %v938
        %v940 = vpop.f32.mrb[0].mxu0
        %941 = vmatprep.mubr.f32.mxu0 0.0
        %942 = vmatmul.mubr.f32.gmra.mrb[0].mxu0 %v760
        %v943 = vpop.f32.mrb[0].mxu0
        %v944 = vadd.f32 0.0, %v943
        %v945 = vpop.f32.mrb[0].mxu0
        %946 = vmatprep.mubr.f32.mxu0 0.0
        %947 = vmatmul.mubr.f32.gmra.mrb[0].mxu0 %v761
        %v948 = vpop.f32.mrb[0].mxu0
        %v949 = vadd.f32 0.0, %v948
        %v950 = vpop.f32.mrb[0].mxu0
        %951 = vmatprep.mubr.f32.mxu0 0.0
        %952 = vmatmul.mubr.f32.gmra.mrb[0].mxu0 %v762
        %v953 = vpop.f32.mrb[0].mxu0
        %v954 = vadd.f32 0.0, %v953
        %v955 = vpop.f32.mrb[0].mxu0
        %956 = vmatprep.mubr.f32.mxu0 0.0
        %957 = vmatmul.mubr.f32.gmra.mrb[0].mxu0 %v763
        %v958 = vpop.f32.mrb[0].mxu0
        %v959 = vadd.f32 0.0, %v958
        %v960 = vpop.f32.mrb[0].mxu0
        %961 = vmatprep.mubr.f32.mxu0 0.0
        %962 = vmatmul.mubr.f32.gmra.mrb[0].mxu0 %v764
        %v963 = vpop.f32.mrb[0].mxu0
        %v964 = vadd.f32 0.0, %v963
        %v965 = vpop.f32.mrb[0].mxu0
        %966 = vmatprep.mubr.f32.mxu0 0.0
        %967 = vmatmul.mubr.f32.gmra.mrb[0].mxu0 %v765
        %v968 = vpop.f32.mrb[0].mxu0
        %v969 = vadd.f32 0.0, %v968
        %v970 = vpop.f32.mrb[0].mxu0
        %971 = vmatprep.mubr.f32.mxu0 0.0
        %972 = vmatmul.mubr.f32.gmra.mrb[0].mxu0 %v766
        %v973 = vpop.f32.mrb[0].mxu0
        %v974 = vadd.f32 0.0, %v973
        %v975 = vpop.f32.mrb[0].mxu0
        %976 = vdwg.mxu0
        %v977 = vmul.f32 %v834, 0.01
        %v978 = vmul.f32 %v839, 0.01
        %v979 = vmul.f32 %v844, 0.01
        %v980 = vmul.f32 %v849, 0.01
        %v981 = vmul.f32 %v854, 0.01
        %v982 = vmul.f32 %v859, 0.01
        %v983 = vmul.f32 %v864, 0.01
        %v984 = vmul.f32 %v869, 0.01
        %v985 = vsub.f32 %v534, %v977
        %v986 = vsub.f32 %v535, %v978
        %v987 = vsub.f32 %v536, %v979
        %v988 = vsub.f32 %v537, %v980
        %v989 = vsub.f32 %v538, %v981
        %v990 = vsub.f32 %v539, %v982
        %v991 = vsub.f32 %v540, %v983
        %v992 = vsub.f32 %v541, %v984
        %v993 = vmul.f32 %v939, 0.01
        %v994 = vmul.f32 %v944, 0.01
        %v995 = vmul.f32 %v949, 0.01
        %v996 = vmul.f32 %v954, 0.01
        %v997 = vmul.f32 %v959, 0.01
        %v998 = vmul.f32 %v964, 0.01
        %v999 = vmul.f32 %v969, 0.01
        %v1000 = vmul.f32 %v974, 0.01
        %v1001 = vsub.f32 %v743, %v993
        %v1002 = vsub.f32 %v744, %v994
        %v1003 = vsub.f32 %v745, %v995
        %v1004 = vsub.f32 %v746, %v996
        %v1005 = vsub.f32 %v747, %v997
        %v1006 = vsub.f32 %v748, %v998
        %v1007 = vsub.f32 %v749, %v999
        %v1008 = vsub.f32 %v750, %v1000
        %v1009 = vmul.f32 %v985, 0.01
        %v1010 = vmul.f32 %v986, 0.01
        %v1011 = vmul.f32 %v987, 0.01
        %v1012 = vmul.f32 %v988, 0.01
        %v1013 = vmul.f32 %v989, 0.01
        %v1014 = vmul.f32 %v990, 0.01
        %v1015 = vmul.f32 %v991, 0.01
        %v1016 = vmul.f32 %v992, 0.01
        %v1017 = vsub.f32 %v550, %v1009
        %v1018 = vsub.f32 %v551, %v1010
        %v1019 = vsub.f32 %v552, %v1011
        %v1020 = vsub.f32 %v553, %v1012
        %v1021 = vsub.f32 %v554, %v1013
        %v1022 = vsub.f32 %v555, %v1014
        %v1023 = vsub.f32 %v556, %v1015
        %v1024 = vsub.f32 %v557, %v1016
        %v1025 = vmul.f32 %v1001, 0.01
        %v1026 = vmul.f32 %v1002, 0.01
        %v1027 = vmul.f32 %v1003, 0.01
        %v1028 = vmul.f32 %v1004, 0.01
        %v1029 = vmul.f32 %v1005, 0.01
        %v1030 = vmul.f32 %v1006, 0.01
        %v1031 = vmul.f32 %v1007, 0.01
        %v1032 = vmul.f32 %v1008, 0.01
        %v1033 = vsub.f32 %v759, %v1025
        %v1034 = vsub.f32 %v760, %v1026
        %v1035 = vsub.f32 %v761, %v1027
        %v1036 = vsub.f32 %v762, %v1028
        %v1037 = vsub.f32 %v763, %v1029
        %v1038 = vsub.f32 %v764, %v1030
        %v1039 = vsub.f32 %v765, %v1031
        %v1040 = vsub.f32 %v766, %v1032
        %1041 = vmatprep.subr.mxu0 0.0
        %1042 = vmatpush1.msra.mxu0 %v301
        %1043 = vmatprep.subr.mxu0 0.0
        %1044 = vmatpush1.msra.mxu0 %v302
        %1045 = vmatprep.subr.mxu0 0.0
        %1046 = vmatpush1.msra.mxu0 %v303
        %1047 = vmatprep.subr.mxu0 0.0
        %1048 = vmatpush1.msra.mxu0 %v304
        %1049 = vmatprep.subr.mxu0 0.0
        %1050 = vmatpush1.msra.mxu0 %v305
        %1051 = vmatprep.subr.mxu0 0.0
        %1052 = vmatpush1.msra.mxu0 %v306
        %1053 = vmatprep.subr.mxu0 0.0
        %1054 = vmatpush1.msra.mxu0 %v307
        %1055 = vmatprep.subr.mxu0 0.0
        %1056 = vmatpush1.msra.mxu0 %v308
        %1057 = vmatprep.subr.mxu0 0.0
        %1058 = vmatpush1.msra.mxu0 %v309
        %1059 = vmatprep.subr.mxu0 0.0
        %1060 = vmatpush1.msra.mxu0 %v310
        %1061 = vmatprep.subr.mxu0 0.0
        %1062 = vmatpush1.msra.mxu0 %v311
        %1063 = vmatprep.subr.mxu0 0.0
        %1064 = vmatpush1.msra.mxu0 %v312
        %1065 = vmatprep.subr.mxu0 0.0
        %1066 = vmatpush1.msra.mxu0 %v313
        %1067 = vmatprep.subr.mxu0 0.0
        %1068 = vmatpush1.msra.mxu0 %v314
        %1069 = vmatprep.subr.mxu0 0.0
        %1070 = vmatpush1.msra.mxu0 %v315
        %1071 = vmatprep.subr.mxu0 0.0
        %1072 = vmatpush1.msra.mxu0 %v316
        %1073 = vmatprep.subr.mxu0 0.0
        %1074 = vmatpush1.msra.mxu0 0.0
        %1075 = vmatprep.subr.mxu0 0.0
        %1076 = vmatpush1.msra.mxu0 0.0
        %1077 = vmatprep.subr.mxu0 0.0
        %1078 = vmatpush1.msra.mxu0 0.0
        %1079 = vmatprep.subr.mxu0 0.0
        %1080 = vmatpush1.msra.mxu0 0.0
        %1081 = vmatprep.subr.mxu0 0.0
        %1082 = vmatpush1.msra.mxu0 0.0
        %1083 = vmatprep.subr.mxu0 0.0
        %1084 = vmatpush1.msra.mxu0 0.0
        %1085 = vmatprep.subr.mxu0 0.0
        %1086 = vmatpush1.msra.mxu0 0.0
        %1087 = vmatprep.subr.mxu0 0.0
        %1088 = vmatpush1.msra.mxu0 0.0
        %1089 = vmatprep.subr.mxu0 0.0
        %1090 = vmatpush1.msra.mxu0 0.0
        %1091 = vmatprep.subr.mxu0 0.0
        %1092 = vmatpush1.msra.mxu0 0.0
        %1093 = vmatprep.subr.mxu0 0.0
        %1094 = vmatpush1.msra.mxu0 0.0
        %1095 = vmatprep.subr.mxu0 0.0
        %1096 = vmatpush1.msra.mxu0 0.0
        %1097 = vmatprep.subr.mxu0 0.0
        %1098 = vmatpush1.msra.mxu0 0.0
        %1099 = vmatprep.subr.mxu0 0.0
        %1100 = vmatpush1.msra.mxu0 0.0
        %1101 = vmatprep.subr.mxu0 0.0
        %1102 = vmatpush1.msra.mxu0 0.0
        %1103 = vmatprep.subr.mxu0 0.0
        %1104 = vmatpush1.msra.mxu0 0.0
        %1105 = vmatprep.mubr.f32.mxu0 0.0
        %1106 = vmatmul.mubr.f32.gmra.mrb[0].mxu0 %v1017
        %v1107 = vpop.f32.mrb[0].mxu0
        %v1108 = vadd.f32 0.0, %v1107
        %v1109 = vpop.f32.mrb[0].mxu0
        %1110 = vmatprep.mubr.f32.mxu0 0.0
        %1111 = vmatmul.mubr.f32.gmra.mrb[0].mxu0 %v1018
        %v1112 = vpop.f32.mrb[0].mxu0
        %v1113 = vadd.f32 0.0, %v1112
        %v1114 = vpop.f32.mrb[0].mxu0
        %1115 = vmatprep.mubr.f32.mxu0 0.0
        %1116 = vmatmul.mubr.f32.gmra.mrb[0].mxu0 %v1019
        %v1117 = vpop.f32.mrb[0].mxu0
        %v1118 = vadd.f32 0.0, %v1117
        %v1119 = vpop.f32.mrb[0].mxu0
        %1120 = vmatprep.mubr.f32.mxu0 0.0
        %1121 = vmatmul.mubr.f32.gmra.mrb[0].mxu0 %v1020
        %v1122 = vpop.f32.mrb[0].mxu0
        %v1123 = vadd.f32 0.0, %v1122
        %v1124 = vpop.f32.mrb[0].mxu0
        %1125 = vmatprep.mubr.f32.mxu0 0.0
        %1126 = vmatmul.mubr.f32.gmra.mrb[0].mxu0 %v1021
        %v1127 = vpop.f32.mrb[0].mxu0
        %v1128 = vadd.f32 0.0, %v1127
        %v1129 = vpop.f32.mrb[0].mxu0
        %1130 = vmatprep.mubr.f32.mxu0 0.0
        %1131 = vmatmul.mubr.f32.gmra.mrb[0].mxu0 %v1022
        %v1132 = vpop.f32.mrb[0].mxu0
        %v1133 = vadd.f32 0.0, %v1132
        %v1134 = vpop.f32.mrb[0].mxu0
        %1135 = vmatprep.mubr.f32.mxu0 0.0
        %1136 = vmatmul.mubr.f32.gmra.mrb[0].mxu0 %v1023
        %v1137 = vpop.f32.mrb[0].mxu0
        %v1138 = vadd.f32 0.0, %v1137
        %v1139 = vpop.f32.mrb[0].mxu0
        %1140 = vmatprep.mubr.f32.mxu0 0.0
        %1141 = vmatmul.mubr.f32.gmra.mrb[0].mxu0 %v1024
        %v1142 = vpop.f32.mrb[0].mxu0
        %v1143 = vadd.f32 0.0, %v1142
        %v1144 = vpop.f32.mrb[0].mxu0
        %1145 = vdwg.mxu0
        %1146 = vmatprep.subr.mxu0 0.0
        %1147 = vmatpush1.msra.mxu0 %v301
        %1148 = vmatprep.subr.mxu0 0.0
        %1149 = vmatpush1.msra.mxu0 %v302
        %1150 = vmatprep.subr.mxu0 0.0
        %1151 = vmatpush1.msra.mxu0 %v303
        %1152 = vmatprep.subr.mxu0 0.0
        %1153 = vmatpush1.msra.mxu0 %v304
        %1154 = vmatprep.subr.mxu0 0.0
        %1155 = vmatpush1.msra.mxu0 %v305
        %1156 = vmatprep.subr.mxu0 0.0
        %1157 = vmatpush1.msra.mxu0 %v306
        %1158 = vmatprep.subr.mxu0 0.0
        %1159 = vmatpush1.msra.mxu0 %v307
        %1160 = vmatprep.subr.mxu0 0.0
        %1161 = vmatpush1.msra.mxu0 %v308
        %1162 = vmatprep.subr.mxu0 0.0
        %1163 = vmatpush1.msra.mxu0 %v309
        %1164 = vmatprep.subr.mxu0 0.0
        %1165 = vmatpush1.msra.mxu0 %v310
        %1166 = vmatprep.subr.mxu0 0.0
        %1167 = vmatpush1.msra.mxu0 %v311
        %1168 = vmatprep.subr.mxu0 0.0
        %1169 = vmatpush1.msra.mxu0 %v312
        %1170 = vmatprep.subr.mxu0 0.0
        %1171 = vmatpush1.msra.mxu0 %v313
        %1172 = vmatprep.subr.mxu0 0.0
        %1173 = vmatpush1.msra.mxu0 %v314
        %1174 = vmatprep.subr.mxu0 0.0
        %1175 = vmatpush1.msra.mxu0 %v315
        %1176 = vmatprep.subr.mxu0 0.0
        %1177 = vmatpush1.msra.mxu0 %v316
        %1178 = vmatprep.subr.mxu0 0.0
        %1179 = vmatpush1.msra.mxu0 0.0
        %1180 = vmatprep.subr.mxu0 0.0
        %1181 = vmatpush1.msra.mxu0 0.0
        %1182 = vmatprep.subr.mxu0 0.0
        %1183 = vmatpush1.msra.mxu0 0.0
        %1184 = vmatprep.subr.mxu0 0.0
        %1185 = vmatpush1.msra.mxu0 0.0
        %1186 = vmatprep.subr.mxu0 0.0
        %1187 = vmatpush1.msra.mxu0 0.0
        %1188 = vmatprep.subr.mxu0 0.0
        %1189 = vmatpush1.msra.mxu0 0.0
        %1190 = vmatprep.subr.mxu0 0.0
        %1191 = vmatpush1.msra.mxu0 0.0
        %1192 = vmatprep.subr.mxu0 0.0
        %1193 = vmatpush1.msra.mxu0 0.0
        %1194 = vmatprep.subr.mxu0 0.0
        %1195 = vmatpush1.msra.mxu0 0.0
        %1196 = vmatprep.subr.mxu0 0.0
        %1197 = vmatpush1.msra.mxu0 0.0
        %1198 = vmatprep.subr.mxu0 0.0
        %1199 = vmatpush1.msra.mxu0 0.0
        %1200 = vmatprep.subr.mxu0 0.0
        %1201 = vmatpush1.msra.mxu0 0.0
        %1202 = vmatprep.subr.mxu0 0.0
        %1203 = vmatpush1.msra.mxu0 0.0
        %1204 = vmatprep.subr.mxu0 0.0
        %1205 = vmatpush1.msra.mxu0 0.0
        %1206 = vmatprep.subr.mxu0 0.0
        %1207 = vmatpush1.msra.mxu0 0.0
        %1208 = vmatprep.subr.mxu0 0.0
        %1209 = vmatpush1.msra.mxu0 0.0
        %1210 = vmatprep.mubr.f32.mxu0 0.0
        %1211 = vmatmul.mubr.f32.gmra.mrb[0].mxu0 %v1033
        %v1212 = vpop.f32.mrb[0].mxu0
        %v1213 = vadd.f32 0.0, %v1212
        %v1214 = vpop.f32.mrb[0].mxu0
        %1215 = vmatprep.mubr.f32.mxu0 0.0
        %1216 = vmatmul.mubr.f32.gmra.mrb[0].mxu0 %v1034
        %v1217 = vpop.f32.mrb[0].mxu0
        %v1218 = vadd.f32 0.0, %v1217
        %v1219 = vpop.f32.mrb[0].mxu0
        %1220 = vmatprep.mubr.f32.mxu0 0.0
        %1221 = vmatmul.mubr.f32.gmra.mrb[0].mxu0 %v1035
        %v1222 = vpop.f32.mrb[0].mxu0
        %v1223 = vadd.f32 0.0, %v1222
        %v1224 = vpop.f32.mrb[0].mxu0
        %1225 = vmatprep.mubr.f32.mxu0 0.0
        %1226 = vmatmul.mubr.f32.gmra.mrb[0].mxu0 %v1036
        %v1227 = vpop.f32.mrb[0].mxu0
        %v1228 = vadd.f32 0.0, %v1227
        %v1229 = vpop.f32.mrb[0].mxu0
        %1230 = vmatprep.mubr.f32.mxu0 0.0
        %1231 = vmatmul.mubr.f32.gmra.mrb[0].mxu0 %v1037
        %v1232 = vpop.f32.mrb[0].mxu0
        %v1233 = vadd.f32 0.0, %v1232
        %v1234 = vpop.f32.mrb[0].mxu0
        %1235 = vmatprep.mubr.f32.mxu0 0.0
        %1236 = vmatmul.mubr.f32.gmra.mrb[0].mxu0 %v1038
        %v1237 = vpop.f32.mrb[0].mxu0
        %v1238 = vadd.f32 0.0, %v1237
        %v1239 = vpop.f32.mrb[0].mxu0
        %1240 = vmatprep.mubr.f32.mxu0 0.0
        %1241 = vmatmul.mubr.f32.gmra.mrb[0].mxu0 %v1039
        %v1242 = vpop.f32.mrb[0].mxu0
        %v1243 = vadd.f32 0.0, %v1242
        %v1244 = vpop.f32.mrb[0].mxu0
        %1245 = vmatprep.mubr.f32.mxu0 0.0
        %1246 = vmatmul.mubr.f32.gmra.mrb[0].mxu0 %v1040
        %v1247 = vpop.f32.mrb[0].mxu0
        %v1248 = vadd.f32 0.0, %v1247
        %v1249 = vpop.f32.mrb[0].mxu0
        %1250 = vdwg.mxu0
        %v1251 = vmul.f32 %v1108, 0.01
        %v1252 = vmul.f32 %v1113, 0.01
        %v1253 = vmul.f32 %v1118, 0.01
        %v1254 = vmul.f32 %v1123, 0.01
        %v1255 = vmul.f32 %v1128, 0.01
        %v1256 = vmul.f32 %v1133, 0.01
        %v1257 = vmul.f32 %v1138, 0.01
        %v1258 = vmul.f32 %v1143, 0.01
        %v1259 = vsub.f32 %v985, %v1251
        %v1260 = vsub.f32 %v986, %v1252
        %v1261 = vsub.f32 %v987, %v1253
        %v1262 = vsub.f32 %v988, %v1254
        %v1263 = vsub.f32 %v989, %v1255
        %v1264 = vsub.f32 %v990, %v1256
        %v1265 = vsub.f32 %v991, %v1257
        %v1266 = vsub.f32 %v992, %v1258
        %v1267 = vmul.f32 %v1213, 0.01
        %v1268 = vmul.f32 %v1218, 0.01
        %v1269 = vmul.f32 %v1223, 0.01
        %v1270 = vmul.f32 %v1228, 0.01
        %v1271 = vmul.f32 %v1233, 0.01
        %v1272 = vmul.f32 %v1238, 0.01
        %v1273 = vmul.f32 %v1243, 0.01
        %v1274 = vmul.f32 %v1248, 0.01
        %v1275 = vsub.f32 %v1001, %v1267
        %v1276 = vsub.f32 %v1002, %v1268
        %v1277 = vsub.f32 %v1003, %v1269
        %v1278 = vsub.f32 %v1004, %v1270
        %v1279 = vsub.f32 %v1005, %v1271
        %v1280 = vsub.f32 %v1006, %v1272
        %v1281 = vsub.f32 %v1007, %v1273
        %v1282 = vsub.f32 %v1008, %v1274
        %v1283 = vmul.f32 %v1259, 0.01
        %v1284 = vmul.f32 %v1260, 0.01
        %v1285 = vmul.f32 %v1261, 0.01
        %v1286 = vmul.f32 %v1262, 0.01
        %v1287 = vmul.f32 %v1263, 0.01
        %v1288 = vmul.f32 %v1264, 0.01
        %v1289 = vmul.f32 %v1265, 0.01
        %v1290 = vmul.f32 %v1266, 0.01
        %v1291 = vsub.f32 %v1017, %v1283
        %v1292 = vsub.f32 %v1018, %v1284
        %v1293 = vsub.f32 %v1019, %v1285
        %v1294 = vsub.f32 %v1020, %v1286
        %v1295 = vsub.f32 %v1021, %v1287
        %v1296 = vsub.f32 %v1022, %v1288
        %v1297 = vsub.f32 %v1023, %v1289
        %v1298 = vsub.f32 %v1024, %v1290
        %v1299 = vmul.f32 %v1275, 0.01
        %v1300 = vmul.f32 %v1276, 0.01
        %v1301 = vmul.f32 %v1277, 0.01
        %v1302 = vmul.f32 %v1278, 0.01
        %v1303 = vmul.f32 %v1279, 0.01
        %v1304 = vmul.f32 %v1280, 0.01
        %v1305 = vmul.f32 %v1281, 0.01
        %v1306 = vmul.f32 %v1282, 0.01
        %v1307 = vsub.f32 %v1033, %v1299
        %v1308 = vsub.f32 %v1034, %v1300
        %v1309 = vsub.f32 %v1035, %v1301
        %v1310 = vsub.f32 %v1036, %v1302
        %v1311 = vsub.f32 %v1037, %v1303
        %v1312 = vsub.f32 %v1038, %v1304
        %v1313 = vsub.f32 %v1039, %v1305
        %v1314 = vsub.f32 %v1040, %v1306
        %1315 = vmatprep.subr.mxu0 0.0
        %1316 = vmatpush1.msra.mxu0 %v301
        %1317 = vmatprep.subr.mxu0 0.0
        %1318 = vmatpush1.msra.mxu0 %v302
        %1319 = vmatprep.subr.mxu0 0.0
        %1320 = vmatpush1.msra.mxu0 %v303
        %1321 = vmatprep.subr.mxu0 0.0
        %1322 = vmatpush1.msra.mxu0 %v304
        %1323 = vmatprep.subr.mxu0 0.0
        %1324 = vmatpush1.msra.mxu0 %v305
        %1325 = vmatprep.subr.mxu0 0.0
        %1326 = vmatpush1.msra.mxu0 %v306
        %1327 = vmatprep.subr.mxu0 0.0
        %1328 = vmatpush1.msra.mxu0 %v307
        %1329 = vmatprep.subr.mxu0 0.0
        %1330 = vmatpush1.msra.mxu0 %v308
        %1331 = vmatprep.subr.mxu0 0.0
        %1332 = vmatpush1.msra.mxu0 %v309
        %1333 = vmatprep.subr.mxu0 0.0
        %1334 = vmatpush1.msra.mxu0 %v310
        %1335 = vmatprep.subr.mxu0 0.0
        %1336 = vmatpush1.msra.mxu0 %v311
        %1337 = vmatprep.subr.mxu0 0.0
        %1338 = vmatpush1.msra.mxu0 %v312
        %1339 = vmatprep.subr.mxu0 0.0
        %1340 = vmatpush1.msra.mxu0 %v313
        %1341 = vmatprep.subr.mxu0 0.0
        %1342 = vmatpush1.msra.mxu0 %v314
        %1343 = vmatprep.subr.mxu0 0.0
        %1344 = vmatpush1.msra.mxu0 %v315
        %1345 = vmatprep.subr.mxu0 0.0
        %1346 = vmatpush1.msra.mxu0 %v316
        %1347 = vmatprep.subr.mxu0 0.0
        %1348 = vmatpush1.msra.mxu0 0.0
        %1349 = vmatprep.subr.mxu0 0.0
        %1350 = vmatpush1.msra.mxu0 0.0
        %1351 = vmatprep.subr.mxu0 0.0
        %1352 = vmatpush1.msra.mxu0 0.0
        %1353 = vmatprep.subr.mxu0 0.0
        %1354 = vmatpush1.msra.mxu0 0.0
        %1355 = vmatprep.subr.mxu0 0.0
        %1356 = vmatpush1.msra.mxu0 0.0
        %1357 = vmatprep.subr.mxu0 0.0
        %1358 = vmatpush1.msra.mxu0 0.0
        %1359 = vmatprep.subr.mxu0 0.0
        %1360 = vmatpush1.msra.mxu0 0.0
        %1361 = vmatprep.subr.mxu0 0.0
        %1362 = vmatpush1.msra.mxu0 0.0
        %1363 = vmatprep.subr.mxu0 0.0
        %1364 = vmatpush1.msra.mxu0 0.0
        %1365 = vmatprep.subr.mxu0 0.0
        %1366 = vmatpush1.msra.mxu0 0.0
        %1367 = vmatprep.subr.mxu0 0.0
        %1368 = vmatpush1.msra.mxu0 0.0
        %1369 = vmatprep.subr.mxu0 0.0
        %1370 = vmatpush1.msra.mxu0 0.0
        %1371 = vmatprep.subr.mxu0 0.0
        %1372 = vmatpush1.msra.mxu0 0.0
        %1373 = vmatprep.subr.mxu0 0.0
        %1374 = vmatpush1.msra.mxu0 0.0
        %1375 = vmatprep.subr.mxu0 0.0
        %1376 = vmatpush1.msra.mxu0 0.0
        %1377 = vmatprep.subr.mxu0 0.0
        %1378 = vmatpush1.msra.mxu0 0.0
        %1379 = vmatprep.mubr.f32.mxu0 0.0
        %1380 = vmatmul.mubr.f32.gmra.mrb[0].mxu0 %v1291
        %v1381 = vpop.f32.mrb[0].mxu0
        %v1382 = vadd.f32 0.0, %v1381
        %v1383 = vpop.f32.mrb[0].mxu0
        %1384 = vmatprep.mubr.f32.mxu0 0.0
        %1385 = vmatmul.mubr.f32.gmra.mrb[0].mxu0 %v1292
        %v1386 = vpop.f32.mrb[0].mxu0
        %v1387 = vadd.f32 0.0, %v1386
        %v1388 = vpop.f32.mrb[0].mxu0
        %1389 = vmatprep.mubr.f32.mxu0 0.0
        %1390 = vmatmul.mubr.f32.gmra.mrb[0].mxu0 %v1293
        %v1391 = vpop.f32.mrb[0].mxu0
        %v1392 = vadd.f32 0.0, %v1391
        %v1393 = vpop.f32.mrb[0].mxu0
        %1394 = vmatprep.mubr.f32.mxu0 0.0
        %1395 = vmatmul.mubr.f32.gmra.mrb[0].mxu0 %v1294
        %v1396 = vpop.f32.mrb[0].mxu0
        %v1397 = vadd.f32 0.0, %v1396
        %v1398 = vpop.f32.mrb[0].mxu0
        %1399 = vmatprep.mubr.f32.mxu0 0.0
        %1400 = vmatmul.mubr.f32.gmra.mrb[0].mxu0 %v1295
        %v1401 = vpop.f32.mrb[0].mxu0
        %v1402 = vadd.f32 0.0, %v1401
        %v1403 = vpop.f32.mrb[0].mxu0
        %1404 = vmatprep.mubr.f32.mxu0 0.0
        %1405 = vmatmul.mubr.f32.gmra.mrb[0].mxu0 %v1296
        %v1406 = vpop.f32.mrb[0].mxu0
        %v1407 = vadd.f32 0.0, %v1406
        %v1408 = vpop.f32.mrb[0].mxu0
        %1409 = vmatprep.mubr.f32.mxu0 0.0
        %1410 = vmatmul.mubr.f32.gmra.mrb[0].mxu0 %v1297
        %v1411 = vpop.f32.mrb[0].mxu0
        %v1412 = vadd.f32 0.0, %v1411
        %v1413 = vpop.f32.mrb[0].mxu0
        %1414 = vmatprep.mubr.f32.mxu0 0.0
        %1415 = vmatmul.mubr.f32.gmra.mrb[0].mxu0 %v1298
        %v1416 = vpop.f32.mrb[0].mxu0
        %v1417 = vadd.f32 0.0, %v1416
        %v1418 = vpop.f32.mrb[0].mxu0
        %1419 = vdwg.mxu0
        %1420 = vmatprep.subr.mxu0 0.0
        %1421 = vmatpush1.msra.mxu0 %v301
        %1422 = vmatprep.subr.mxu0 0.0
        %1423 = vmatpush1.msra.mxu0 %v302
        %1424 = vmatprep.subr.mxu0 0.0
        %1425 = vmatpush1.msra.mxu0 %v303
        %1426 = vmatprep.subr.mxu0 0.0
        %1427 = vmatpush1.msra.mxu0 %v304
        %1428 = vmatprep.subr.mxu0 0.0
        %1429 = vmatpush1.msra.mxu0 %v305
        %1430 = vmatprep.subr.mxu0 0.0
        %1431 = vmatpush1.msra.mxu0 %v306
        %1432 = vmatprep.subr.mxu0 0.0
        %1433 = vmatpush1.msra.mxu0 %v307
        %1434 = vmatprep.subr.mxu0 0.0
        %1435 = vmatpush1.msra.mxu0 %v308
        %1436 = vmatprep.subr.mxu0 0.0
        %1437 = vmatpush1.msra.mxu0 %v309
        %1438 = vmatprep.subr.mxu0 0.0
        %1439 = vmatpush1.msra.mxu0 %v310
        %1440 = vmatprep.subr.mxu0 0.0
        %1441 = vmatpush1.msra.mxu0 %v311
        %1442 = vmatprep.subr.mxu0 0.0
        %1443 = vmatpush1.msra.mxu0 %v312
        %1444 = vmatprep.subr.mxu0 0.0
        %1445 = vmatpush1.msra.mxu0 %v313
        %1446 = vmatprep.subr.mxu0 0.0
        %1447 = vmatpush1.msra.mxu0 %v314
        %1448 = vmatprep.subr.mxu0 0.0
        %1449 = vmatpush1.msra.mxu0 %v315
        %1450 = vmatprep.subr.mxu0 0.0
        %1451 = vmatpush1.msra.mxu0 %v316
        %1452 = vmatprep.subr.mxu0 0.0
        %1453 = vmatpush1.msra.mxu0 0.0
        %1454 = vmatprep.subr.mxu0 0.0
        %1455 = vmatpush1.msra.mxu0 0.0
        %1456 = vmatprep.subr.mxu0 0.0
        %1457 = vmatpush1.msra.mxu0 0.0
        %1458 = vmatprep.subr.mxu0 0.0
        %1459 = vmatpush1.msra.mxu0 0.0
        %1460 = vmatprep.subr.mxu0 0.0
        %1461 = vmatpush1.msra.mxu0 0.0
        %1462 = vmatprep.subr.mxu0 0.0
        %1463 = vmatpush1.msra.mxu0 0.0
        %1464 = vmatprep.subr.mxu0 0.0
        %1465 = vmatpush1.msra.mxu0 0.0
        %1466 = vmatprep.subr.mxu0 0.0
        %1467 = vmatpush1.msra.mxu0 0.0
        %1468 = vmatprep.subr.mxu0 0.0
        %1469 = vmatpush1.msra.mxu0 0.0
        %1470 = vmatprep.subr.mxu0 0.0
        %1471 = vmatpush1.msra.mxu0 0.0
        %1472 = vmatprep.subr.mxu0 0.0
        %1473 = vmatpush1.msra.mxu0 0.0
        %1474 = vmatprep.subr.mxu0 0.0
        %1475 = vmatpush1.msra.mxu0 0.0
        %1476 = vmatprep.subr.mxu0 0.0
        %1477 = vmatpush1.msra.mxu0 0.0
        %1478 = vmatprep.subr.mxu0 0.0
        %1479 = vmatpush1.msra.mxu0 0.0
        %1480 = vmatprep.subr.mxu0 0.0
        %1481 = vmatpush1.msra.mxu0 0.0
        %1482 = vmatprep.subr.mxu0 0.0
        %1483 = vmatpush1.msra.mxu0 0.0
        %1484 = vmatprep.mubr.f32.mxu0 0.0
        %1485 = vmatmul.mubr.f32.gmra.mrb[0].mxu0 %v1307
        %v1486 = vpop.f32.mrb[0].mxu0
        %v1487 = vadd.f32 0.0, %v1486
        %v1488 = vpop.f32.mrb[0].mxu0
        %1489 = vmatprep.mubr.f32.mxu0 0.0
        %1490 = vmatmul.mubr.f32.gmra.mrb[0].mxu0 %v1308
        %v1491 = vpop.f32.mrb[0].mxu0
        %v1492 = vadd.f32 0.0, %v1491
        %v1493 = vpop.f32.mrb[0].mxu0
        %1494 = vmatprep.mubr.f32.mxu0 0.0
        %1495 = vmatmul.mubr.f32.gmra.mrb[0].mxu0 %v1309
        %v1496 = vpop.f32.mrb[0].mxu0
        %v1497 = vadd.f32 0.0, %v1496
        %v1498 = vpop.f32.mrb[0].mxu0
        %1499 = vmatprep.mubr.f32.mxu0 0.0
        %1500 = vmatmul.mubr.f32.gmra.mrb[0].mxu0 %v1310
        %v1501 = vpop.f32.mrb[0].mxu0
        %v1502 = vadd.f32 0.0, %v1501
        %v1503 = vpop.f32.mrb[0].mxu0
        %1504 = vmatprep.mubr.f32.mxu0 0.0
        %1505 = vmatmul.mubr.f32.gmra.mrb[0].mxu0 %v1311
        %v1506 = vpop.f32.mrb[0].mxu0
        %v1507 = vadd.f32 0.0, %v1506
        %v1508 = vpop.f32.mrb[0].mxu0
        %1509 = vmatprep.mubr.f32.mxu0 0.0
        %1510 = vmatmul.mubr.f32.gmra.mrb[0].mxu0 %v1312
        %v1511 = vpop.f32.mrb[0].mxu0
        %v1512 = vadd.f32 0.0, %v1511
        %v1513 = vpop.f32.mrb[0].mxu0
        %1514 = vmatprep.mubr.f32.mxu0 0.0
        %1515 = vmatmul.mubr.f32.gmra.mrb[0].mxu0 %v1313
        %v1516 = vpop.f32.mrb[0].mxu0
        %v1517 = vadd.f32 0.0, %v1516
        %v1518 = vpop.f32.mrb[0].mxu0
        %1519 = vmatprep.mubr.f32.mxu0 0.0
        %1520 = vmatmul.mubr.f32.gmra.mrb[0].mxu0 %v1314
        %v1521 = vpop.f32.mrb[0].mxu0
        %v1522 = vadd.f32 0.0, %v1521
        %v1523 = vpop.f32.mrb[0].mxu0
        %1524 = vdwg.mxu0
        %v1525 = vld [vmem:[%s297] sm:$0xff]
        %v1526 = vld [vmem:[%s297 + $0x8] sm:$0xff]
        %v1527 = vld [vmem:[%s297 + $0x10] sm:$0xff]
        %v1528 = vld [vmem:[%s297 + $0x18] sm:$0xff]
        %v1529 = vld [vmem:[%s297 + $0x20] sm:$0xff]
        %v1530 = vld [vmem:[%s297 + $0x28] sm:$0xff]
        %v1531 = vld [vmem:[%s297 + $0x30] sm:$0xff]
        %v1532 = vld [vmem:[%s297 + $0x38] sm:$0xff]
        %v1533 = vmul.f32 %v1382, 0.01
        %v1534 = vmul.f32 %v1387, 0.01
        %v1535 = vmul.f32 %v1392, 0.01
        %v1536 = vmul.f32 %v1397, 0.01
        %v1537 = vmul.f32 %v1402, 0.01
        %v1538 = vmul.f32 %v1407, 0.01
        %v1539 = vmul.f32 %v1412, 0.01
        %v1540 = vmul.f32 %v1417, 0.01
        %v1541 = vmul.f32 %v1533, 0.5
        %v1542 = vmul.f32 %v1534, 0.5
        %v1543 = vmul.f32 %v1535, 0.5
        %v1544 = vmul.f32 %v1536, 0.5
        %v1545 = vmul.f32 %v1537, 0.5
        %v1546 = vmul.f32 %v1538, 0.5
        %v1547 = vmul.f32 %v1539, 0.5
        %v1548 = vmul.f32 %v1540, 0.5
        %v1549 = vsub.f32 %v1259, %v1541
        %v1550 = vsub.f32 %v1260, %v1542
        %v1551 = vsub.f32 %v1261, %v1543
        %v1552 = vsub.f32 %v1262, %v1544
        %v1553 = vsub.f32 %v1263, %v1545
        %v1554 = vsub.f32 %v1264, %v1546
        %v1555 = vsub.f32 %v1265, %v1547
        %v1556 = vsub.f32 %v1266, %v1548
        %v1557 = vsub.f32 0.0, %v1549
        %v1558 = vsub.f32 0.0, %v1550
        %v1559 = vsub.f32 0.0, %v1551
        %v1560 = vsub.f32 0.0, %v1552
        %v1561 = vsub.f32 0.0, %v1553
        %v1562 = vsub.f32 0.0, %v1554
        %v1563 = vsub.f32 0.0, %v1555
        %v1564 = vsub.f32 0.0, %v1556
        %v1565 = vmul.f32 %v1291, %v1382
        %v1566 = vmul.f32 %v1292, %v1387
        %v1567 = vmul.f32 %v1293, %v1392
        %v1568 = vmul.f32 %v1294, %v1397
        %v1569 = vmul.f32 %v1295, %v1402
        %v1570 = vmul.f32 %v1296, %v1407
        %v1571 = vmul.f32 %v1297, %v1412
        %v1572 = vmul.f32 %v1298, %v1417
        %1573 = vadd.xlane.f32.xlu0 %v1565
        %v1574 = vpop.xlane.xlu0 %1573
        %1575 = vadd.xlane.f32.xlu0 %v1566
        %v1576 = vpop.xlane.xlu0 %1575
        %1577 = vadd.xlane.f32.xlu0 %v1567
        %v1578 = vpop.xlane.xlu0 %1577
        %1579 = vadd.xlane.f32.xlu0 %v1568
        %v1580 = vpop.xlane.xlu0 %1579
        %1581 = vadd.xlane.f32.xlu0 %v1569
        %v1582 = vpop.xlane.xlu0 %1581
        %1583 = vadd.xlane.f32.xlu0 %v1570
        %v1584 = vpop.xlane.xlu0 %1583
        %1585 = vadd.xlane.f32.xlu0 %v1571
        %v1586 = vpop.xlane.xlu0 %1585
        %1587 = vadd.xlane.f32.xlu0 %v1572
        %v1588 = vpop.xlane.xlu0 %1587
        %v1589 = vmul.f32 %v1574, 0.5
        %v1590 = vmul.f32 %v1576, 0.5
        %v1591 = vmul.f32 %v1578, 0.5
        %v1592 = vmul.f32 %v1580, 0.5
        %v1593 = vmul.f32 %v1582, 0.5
        %v1594 = vmul.f32 %v1584, 0.5
        %v1595 = vmul.f32 %v1586, 0.5
        %v1596 = vmul.f32 %v1588, 0.5
        %v1597 = vmul.f32 %v1557, %v1557
        %v1598 = vmul.f32 %v1558, %v1558
        %v1599 = vmul.f32 %v1559, %v1559
        %v1600 = vmul.f32 %v1560, %v1560
        %v1601 = vmul.f32 %v1561, %v1561
        %v1602 = vmul.f32 %v1562, %v1562
        %v1603 = vmul.f32 %v1563, %v1563
        %v1604 = vmul.f32 %v1564, %v1564
        %1605 = vadd.xlane.f32.xlu0 %v1597
        %v1606 = vpop.xlane.xlu0 %1605
        %1607 = vadd.xlane.f32.xlu0 %v1598
        %v1608 = vpop.xlane.xlu0 %1607
        %1609 = vadd.xlane.f32.xlu0 %v1599
        %v1610 = vpop.xlane.xlu0 %1609
        %1611 = vadd.xlane.f32.xlu0 %v1600
        %v1612 = vpop.xlane.xlu0 %1611
        %1613 = vadd.xlane.f32.xlu0 %v1601
        %v1614 = vpop.xlane.xlu0 %1613
        %1615 = vadd.xlane.f32.xlu0 %v1602
        %v1616 = vpop.xlane.xlu0 %1615
        %1617 = vadd.xlane.f32.xlu0 %v1603
        %v1618 = vpop.xlane.xlu0 %1617
        %1619 = vadd.xlane.f32.xlu0 %v1604
        %v1620 = vpop.xlane.xlu0 %1619
        %v1621 = vmul.f32 %v1606, 0.5
        %v1622 = vmul.f32 %v1608, 0.5
        %v1623 = vmul.f32 %v1610, 0.5
        %v1624 = vmul.f32 %v1612, 0.5
        %v1625 = vmul.f32 %v1614, 0.5
        %v1626 = vmul.f32 %v1616, 0.5
        %v1627 = vmul.f32 %v1618, 0.5
        %v1628 = vmul.f32 %v1620, 0.5
        %v1629 = vadd.f32 %v478, %v510
        %v1630 = vadd.f32 %v479, %v511
        %v1631 = vadd.f32 %v480, %v512
        %v1632 = vadd.f32 %v481, %v513
        %v1633 = vadd.f32 %v482, %v514
        %v1634 = vadd.f32 %v483, %v515
        %v1635 = vadd.f32 %v484, %v516
        %v1636 = vadd.f32 %v485, %v517
        %v1637 = vsub.f32 %v1629, %v1589
        %v1638 = vsub.f32 %v1630, %v1590
        %v1639 = vsub.f32 %v1631, %v1591
        %v1640 = vsub.f32 %v1632, %v1592
        %v1641 = vsub.f32 %v1633, %v1593
        %v1642 = vsub.f32 %v1634, %v1594
        %v1643 = vsub.f32 %v1635, %v1595
        %v1644 = vsub.f32 %v1636, %v1596
        %v1645 = vsub.f32 %v1637, %v1621
        %v1646 = vsub.f32 %v1638, %v1622
        %v1647 = vsub.f32 %v1639, %v1623
        %v1648 = vsub.f32 %v1640, %v1624
        %v1649 = vsub.f32 %v1641, %v1625
        %v1650 = vsub.f32 %v1642, %v1626
        %v1651 = vsub.f32 %v1643, %v1627
        %v1652 = vsub.f32 %v1644, %v1628
        %v1653 = vmin.f32 %v1645, 0.0
        %v1654 = vmin.f32 %v1646, 0.0
        %v1655 = vmin.f32 %v1647, 0.0
        %v1656 = vmin.f32 %v1648, 0.0
        %v1657 = vmin.f32 %v1649, 0.0
        %v1658 = vmin.f32 %v1650, 0.0
        %v1659 = vmin.f32 %v1651, 0.0
        %v1660 = vmin.f32 %v1652, 0.0
        %v1661 = vmul.f32 %v1653, 1.442695
        %v1662 = vpow.pop %v1661
        %v1663 = vmul.f32 %v1654, 1.442695
        %v1664 = vpow.pop %v1663
        %v1665 = vmul.f32 %v1655, 1.442695
        %v1666 = vpow.pop %v1665
        %v1667 = vmul.f32 %v1656, 1.442695
        %v1668 = vpow.pop %v1667
        %v1669 = vmul.f32 %v1657, 1.442695
        %v1670 = vpow.pop %v1669
        %v1671 = vmul.f32 %v1658, 1.442695
        %v1672 = vpow.pop %v1671
        %v1673 = vmul.f32 %v1659, 1.442695
        %v1674 = vpow.pop %v1673
        %v1675 = vmul.f32 %v1660, 1.442695
        %v1676 = vpow.pop %v1675
        %vm1677 = vcmp.lt.f32.partialorder %v1525, %v1662
        %vm1678 = vcmp.lt.f32.partialorder %v1526, %v1664
        %vm1679 = vcmp.lt.f32.partialorder %v1527, %v1666
        %vm1680 = vcmp.lt.f32.partialorder %v1528, %v1668
        %vm1681 = vcmp.lt.f32.partialorder %v1529, %v1670
        %vm1682 = vcmp.lt.f32.partialorder %v1530, %v1672
        %vm1683 = vcmp.lt.f32.partialorder %v1531, %v1674
        %vm1684 = vcmp.lt.f32.partialorder %v1532, %v1676
        %v1685 = vsel %vm1677, 1, 0
        %v1686 = vsel %vm1678, 1, 0
        %v1687 = vsel %vm1679, 1, 0
        %v1688 = vsel %vm1680, 1, 0
        %v1689 = vsel %vm1681, 1, 0
        %v1690 = vsel %vm1682, 1, 0
        %v1691 = vsel %vm1683, 1, 0
        %v1692 = vsel %vm1684, 1, 0
        %1693 = vset.pattern.permute.xlu0 0
        %1694 = vperm.xlu0 %1693, %v1685
        %v1695 = vpop.permute.xlu0 %1694
        %1696 = vset.pattern.permute.xlu0 0
        %1697 = vperm.xlu0 %1696, %v1686
        %v1698 = vpop.permute.xlu0 %1697
        %1699 = vset.pattern.permute.xlu0 0
        %1700 = vperm.xlu0 %1699, %v1687
        %v1701 = vpop.permute.xlu0 %1700
        %1702 = vset.pattern.permute.xlu0 0
        %1703 = vperm.xlu0 %1702, %v1688
        %v1704 = vpop.permute.xlu0 %1703
        %1705 = vset.pattern.permute.xlu0 0
        %1706 = vperm.xlu0 %1705, %v1689
        %v1707 = vpop.permute.xlu0 %1706
        %1708 = vset.pattern.permute.xlu0 0
        %1709 = vperm.xlu0 %1708, %v1690
        %v1710 = vpop.permute.xlu0 %1709
        %1711 = vset.pattern.permute.xlu0 0
        %1712 = vperm.xlu0 %1711, %v1691
        %v1713 = vpop.permute.xlu0 %1712
        %1714 = vset.pattern.permute.xlu0 0
        %1715 = vperm.xlu0 %1714, %v1692
        %v1716 = vpop.permute.xlu0 %1715
        %vm1717 = vcmp.eq.s32.totalorder %v1695, 1
        %vm1718 = vcmp.eq.s32.totalorder %v1698, 1
        %vm1719 = vcmp.eq.s32.totalorder %v1701, 1
        %vm1720 = vcmp.eq.s32.totalorder %v1704, 1
        %vm1721 = vcmp.eq.s32.totalorder %v1707, 1
        %vm1722 = vcmp.eq.s32.totalorder %v1710, 1
        %vm1723 = vcmp.eq.s32.totalorder %v1713, 1
        %vm1724 = vcmp.eq.s32.totalorder %v1716, 1
        %v1725 = vsel %vm1717, %v1291, %v317
        %v1726 = vsel %vm1718, %v1292, %v318
        %v1727 = vsel %vm1719, %v1293, %v319
        %v1728 = vsel %vm1720, %v1294, %v320
        %v1729 = vsel %vm1721, %v1295, %v321
        %v1730 = vsel %vm1722, %v1296, %v322
        %v1731 = vsel %vm1723, %v1297, %v323
        %v1732 = vsel %vm1724, %v1298, %v324
        %v1733 = vsel %vm1677, %v1589, %v478
        %v1734 = vsel %vm1678, %v1590, %v479
        %v1735 = vsel %vm1679, %v1591, %v480
        %v1736 = vsel %vm1680, %v1592, %v481
        %v1737 = vsel %vm1681, %v1593, %v482
        %v1738 = vsel %vm1682, %v1594, %v483
        %v1739 = vsel %vm1683, %v1595, %v484
        %v1740 = vsel %vm1684, %v1596, %v485
        %v1741 = vcvt.s32.f32 %v1685
        %v1742 = vcvt.s32.f32 %v1686
        %v1743 = vcvt.s32.f32 %v1687
        %v1744 = vcvt.s32.f32 %v1688
        %v1745 = vcvt.s32.f32 %v1689
        %v1746 = vcvt.s32.f32 %v1690
        %v1747 = vcvt.s32.f32 %v1691
        %v1748 = vcvt.s32.f32 %v1692
        %v1749 = vld [vmem:[%s297 + $0x40] sm:$0xff]
        %v1750 = vld [vmem:[%s297 + $0x48] sm:$0xff]
        %v1751 = vld [vmem:[%s297 + $0x50] sm:$0xff]
        %v1752 = vld [vmem:[%s297 + $0x58] sm:$0xff]
        %v1753 = vld [vmem:[%s297 + $0x60] sm:$0xff]
        %v1754 = vld [vmem:[%s297 + $0x68] sm:$0xff]
        %v1755 = vld [vmem:[%s297 + $0x70] sm:$0xff]
        %v1756 = vld [vmem:[%s297 + $0x78] sm:$0xff]
        %v1757 = vmul.f32 %v1487, 0.01
        %v1758 = vmul.f32 %v1492, 0.01
        %v1759 = vmul.f32 %v1497, 0.01
        %v1760 = vmul.f32 %v1502, 0.01
        %v1761 = vmul.f32 %v1507, 0.01
        %v1762 = vmul.f32 %v1512, 0.01
        %v1763 = vmul.f32 %v1517, 0.01
        %v1764 = vmul.f32 %v1522, 0.01
        %v1765 = vmul.f32 %v1757, 0.5
        %v1766 = vmul.f32 %v1758, 0.5
        %v1767 = vmul.f32 %v1759, 0.5
        %v1768 = vmul.f32 %v1760, 0.5
        %v1769 = vmul.f32 %v1761, 0.5
        %v1770 = vmul.f32 %v1762, 0.5
        %v1771 = vmul.f32 %v1763, 0.5
        %v1772 = vmul.f32 %v1764, 0.5
        %v1773 = vsub.f32 %v1275, %v1765
        %v1774 = vsub.f32 %v1276, %v1766
        %v1775 = vsub.f32 %v1277, %v1767
        %v1776 = vsub.f32 %v1278, %v1768
        %v1777 = vsub.f32 %v1279, %v1769
        %v1778 = vsub.f32 %v1280, %v1770
        %v1779 = vsub.f32 %v1281, %v1771
        %v1780 = vsub.f32 %v1282, %v1772
        %v1781 = vsub.f32 0.0, %v1773
        %v1782 = vsub.f32 0.0, %v1774
        %v1783 = vsub.f32 0.0, %v1775
        %v1784 = vsub.f32 0.0, %v1776
        %v1785 = vsub.f32 0.0, %v1777
        %v1786 = vsub.f32 0.0, %v1778
        %v1787 = vsub.f32 0.0, %v1779
        %v1788 = vsub.f32 0.0, %v1780
        %v1789 = vmul.f32 %v1307, %v1487
        %v1790 = vmul.f32 %v1308, %v1492
        %v1791 = vmul.f32 %v1309, %v1497
        %v1792 = vmul.f32 %v1310, %v1502
        %v1793 = vmul.f32 %v1311, %v1507
        %v1794 = vmul.f32 %v1312, %v1512
        %v1795 = vmul.f32 %v1313, %v1517
        %v1796 = vmul.f32 %v1314, %v1522
        %1797 = vadd.xlane.f32.xlu0 %v1789
        %v1798 = vpop.xlane.xlu0 %1797
        %1799 = vadd.xlane.f32.xlu0 %v1790
        %v1800 = vpop.xlane.xlu0 %1799
        %1801 = vadd.xlane.f32.xlu0 %v1791
        %v1802 = vpop.xlane.xlu0 %1801
        %1803 = vadd.xlane.f32.xlu0 %v1792
        %v1804 = vpop.xlane.xlu0 %1803
        %1805 = vadd.xlane.f32.xlu0 %v1793
        %v1806 = vpop.xlane.xlu0 %1805
        %1807 = vadd.xlane.f32.xlu0 %v1794
        %v1808 = vpop.xlane.xlu0 %1807
        %1809 = vadd.xlane.f32.xlu0 %v1795
        %v1810 = vpop.xlane.xlu0 %1809
        %1811 = vadd.xlane.f32.xlu0 %v1796
        %v1812 = vpop.xlane.xlu0 %1811
        %v1813 = vmul.f32 %v1798, 0.5
        %v1814 = vmul.f32 %v1800, 0.5
        %v1815 = vmul.f32 %v1802, 0.5
        %v1816 = vmul.f32 %v1804, 0.5
        %v1817 = vmul.f32 %v1806, 0.5
        %v1818 = vmul.f32 %v1808, 0.5
        %v1819 = vmul.f32 %v1810, 0.5
        %v1820 = vmul.f32 %v1812, 0.5
        %v1821 = vmul.f32 %v1781, %v1781
        %v1822 = vmul.f32 %v1782, %v1782
        %v1823 = vmul.f32 %v1783, %v1783
        %v1824 = vmul.f32 %v1784, %v1784
        %v1825 = vmul.f32 %v1785, %v1785
        %v1826 = vmul.f32 %v1786, %v1786
        %v1827 = vmul.f32 %v1787, %v1787
        %v1828 = vmul.f32 %v1788, %v1788
        %1829 = vadd.xlane.f32.xlu0 %v1821
        %v1830 = vpop.xlane.xlu0 %1829
        %1831 = vadd.xlane.f32.xlu0 %v1822
        %v1832 = vpop.xlane.xlu0 %1831
        %1833 = vadd.xlane.f32.xlu0 %v1823
        %v1834 = vpop.xlane.xlu0 %1833
        %1835 = vadd.xlane.f32.xlu0 %v1824
        %v1836 = vpop.xlane.xlu0 %1835
        %1837 = vadd.xlane.f32.xlu0 %v1825
        %v1838 = vpop.xlane.xlu0 %1837
        %1839 = vadd.xlane.f32.xlu0 %v1826
        %v1840 = vpop.xlane.xlu0 %1839
        %1841 = vadd.xlane.f32.xlu0 %v1827
        %v1842 = vpop.xlane.xlu0 %1841
        %1843 = vadd.xlane.f32.xlu0 %v1828
        %v1844 = vpop.xlane.xlu0 %1843
        %v1845 = vmul.f32 %v1830, 0.5
        %v1846 = vmul.f32 %v1832, 0.5
        %v1847 = vmul.f32 %v1834, 0.5
        %v1848 = vmul.f32 %v1836, 0.5
        %v1849 = vmul.f32 %v1838, 0.5
        %v1850 = vmul.f32 %v1840, 0.5
        %v1851 = vmul.f32 %v1842, 0.5
        %v1852 = vmul.f32 %v1844, 0.5
        %v1853 = vadd.f32 %v687, %v719
        %v1854 = vadd.f32 %v688, %v720
        %v1855 = vadd.f32 %v689, %v721
        %v1856 = vadd.f32 %v690, %v722
        %v1857 = vadd.f32 %v691, %v723
        %v1858 = vadd.f32 %v692, %v724
        %v1859 = vadd.f32 %v693, %v725
        %v1860 = vadd.f32 %v694, %v726
        %v1861 = vsub.f32 %v1853, %v1813
        %v1862 = vsub.f32 %v1854, %v1814
        %v1863 = vsub.f32 %v1855, %v1815
        %v1864 = vsub.f32 %v1856, %v1816
        %v1865 = vsub.f32 %v1857, %v1817
        %v1866 = vsub.f32 %v1858, %v1818
        %v1867 = vsub.f32 %v1859, %v1819
        %v1868 = vsub.f32 %v1860, %v1820
        %v1869 = vsub.f32 %v1861, %v1845
        %v1870 = vsub.f32 %v1862, %v1846
        %v1871 = vsub.f32 %v1863, %v1847
        %v1872 = vsub.f32 %v1864, %v1848
        %v1873 = vsub.f32 %v1865, %v1849
        %v1874 = vsub.f32 %v1866, %v1850
        %v1875 = vsub.f32 %v1867, %v1851
        %v1876 = vsub.f32 %v1868, %v1852
        %v1877 = vmin.f32 %v1869, 0.0
        %v1878 = vmin.f32 %v1870, 0.0
        %v1879 = vmin.f32 %v1871, 0.0
        %v1880 = vmin.f32 %v1872, 0.0
        %v1881 = vmin.f32 %v1873, 0.0
        %v1882 = vmin.f32 %v1874, 0.0
        %v1883 = vmin.f32 %v1875, 0.0
        %v1884 = vmin.f32 %v1876, 0.0
        %v1885 = vmul.f32 %v1877, 1.442695
        %v1886 = vpow.pop %v1885
        %v1887 = vmul.f32 %v1878, 1.442695
        %v1888 = vpow.pop %v1887
        %v1889 = vmul.f32 %v1879, 1.442695
        %v1890 = vpow.pop %v1889
        %v1891 = vmul.f32 %v1880, 1.442695
        %v1892 = vpow.pop %v1891
        %v1893 = vmul.f32 %v1881, 1.442695
        %v1894 = vpow.pop %v1893
        %v1895 = vmul.f32 %v1882, 1.442695
        %v1896 = vpow.pop %v1895
        %v1897 = vmul.f32 %v1883, 1.442695
        %v1898 = vpow.pop %v1897
        %v1899 = vmul.f32 %v1884, 1.442695
        %v1900 = vpow.pop %v1899
        %vm1901 = vcmp.lt.f32.partialorder %v1749, %v1886
        %vm1902 = vcmp.lt.f32.partialorder %v1750, %v1888
        %vm1903 = vcmp.lt.f32.partialorder %v1751, %v1890
        %vm1904 = vcmp.lt.f32.partialorder %v1752, %v1892
        %vm1905 = vcmp.lt.f32.partialorder %v1753, %v1894
        %vm1906 = vcmp.lt.f32.partialorder %v1754, %v1896
        %vm1907 = vcmp.lt.f32.partialorder %v1755, %v1898
        %vm1908 = vcmp.lt.f32.partialorder %v1756, %v1900
        %v1909 = vsel %vm1901, 1, 0
        %v1910 = vsel %vm1902, 1, 0
        %v1911 = vsel %vm1903, 1, 0
        %v1912 = vsel %vm1904, 1, 0
        %v1913 = vsel %vm1905, 1, 0
        %v1914 = vsel %vm1906, 1, 0
        %v1915 = vsel %vm1907, 1, 0
        %v1916 = vsel %vm1908, 1, 0
        %1917 = vset.pattern.permute.xlu0 0
        %1918 = vperm.xlu0 %1917, %v1909
        %v1919 = vpop.permute.xlu0 %1918
        %1920 = vset.pattern.permute.xlu0 0
        %1921 = vperm.xlu0 %1920, %v1910
        %v1922 = vpop.permute.xlu0 %1921
        %1923 = vset.pattern.permute.xlu0 0
        %1924 = vperm.xlu0 %1923, %v1911
        %v1925 = vpop.permute.xlu0 %1924
        %1926 = vset.pattern.permute.xlu0 0
        %1927 = vperm.xlu0 %1926, %v1912
        %v1928 = vpop.permute.xlu0 %1927
        %1929 = vset.pattern.permute.xlu0 0
        %1930 = vperm.xlu0 %1929, %v1913
        %v1931 = vpop.permute.xlu0 %1930
        %1932 = vset.pattern.permute.xlu0 0
        %1933 = vperm.xlu0 %1932, %v1914
        %v1934 = vpop.permute.xlu0 %1933
        %1935 = vset.pattern.permute.xlu0 0
        %1936 = vperm.xlu0 %1935, %v1915
        %v1937 = vpop.permute.xlu0 %1936
        %1938 = vset.pattern.permute.xlu0 0
        %1939 = vperm.xlu0 %1938, %v1916
        %v1940 = vpop.permute.xlu0 %1939
        %vm1941 = vcmp.eq.s32.totalorder %v1919, 1
        %vm1942 = vcmp.eq.s32.totalorder %v1922, 1
        %vm1943 = vcmp.eq.s32.totalorder %v1925, 1
        %vm1944 = vcmp.eq.s32.totalorder %v1928, 1
        %vm1945 = vcmp.eq.s32.totalorder %v1931, 1
        %vm1946 = vcmp.eq.s32.totalorder %v1934, 1
        %vm1947 = vcmp.eq.s32.totalorder %v1937, 1
        %vm1948 = vcmp.eq.s32.totalorder %v1940, 1
        %v1949 = vsel %vm1941, %v1307, %v325
        %v1950 = vsel %vm1942, %v1308, %v326
        %v1951 = vsel %vm1943, %v1309, %v327
        %v1952 = vsel %vm1944, %v1310, %v328
        %v1953 = vsel %vm1945, %v1311, %v329
        %v1954 = vsel %vm1946, %v1312, %v330
        %v1955 = vsel %vm1947, %v1313, %v331
        %v1956 = vsel %vm1948, %v1314, %v332
        %v1957 = vsel %vm1901, %v1813, %v687
        %v1958 = vsel %vm1902, %v1814, %v688
        %v1959 = vsel %vm1903, %v1815, %v689
        %v1960 = vsel %vm1904, %v1816, %v690
        %v1961 = vsel %vm1905, %v1817, %v691
        %v1962 = vsel %vm1906, %v1818, %v692
        %v1963 = vsel %vm1907, %v1819, %v693
        %v1964 = vsel %vm1908, %v1820, %v694
        %v1965 = vcvt.s32.f32 %v1909
        %v1966 = vcvt.s32.f32 %v1910
        %v1967 = vcvt.s32.f32 %v1911
        %v1968 = vcvt.s32.f32 %v1912
        %v1969 = vcvt.s32.f32 %v1913
        %v1970 = vcvt.s32.f32 %v1914
        %v1971 = vcvt.s32.f32 %v1915
        %v1972 = vcvt.s32.f32 %v1916
        %1973 = vst [vmem:[%s278] sm:$0xff] %v1725
        %1974 = vst [vmem:[%s278 + $0x8] sm:$0xff] %v1726
        %1975 = vst [vmem:[%s278 + $0x10] sm:$0xff] %v1727
        %1976 = vst [vmem:[%s278 + $0x18] sm:$0xff] %v1728
        %1977 = vst [vmem:[%s278 + $0x20] sm:$0xff] %v1729
        %1978 = vst [vmem:[%s278 + $0x28] sm:$0xff] %v1730
        %1979 = vst [vmem:[%s278 + $0x30] sm:$0xff] %v1731
        %1980 = vst [vmem:[%s278 + $0x38] sm:$0xff] %v1732
        %1981 = vst [vmem:[%s278 + $0x40] sm:$0xff] %v1949
        %1982 = vst [vmem:[%s278 + $0x48] sm:$0xff] %v1950
        %1983 = vst [vmem:[%s278 + $0x50] sm:$0xff] %v1951
        %1984 = vst [vmem:[%s278 + $0x58] sm:$0xff] %v1952
        %1985 = vst [vmem:[%s278 + $0x60] sm:$0xff] %v1953
        %1986 = vst [vmem:[%s278 + $0x68] sm:$0xff] %v1954
        %1987 = vst [vmem:[%s278 + $0x70] sm:$0xff] %v1955
        %1988 = vst [vmem:[%s278 + $0x78] sm:$0xff] %v1956
        %v1989 = vlaneseq
        %v1990 = vand.u32 %v1989, 127
        %vm1991 = vcmp.eq.s32.totalorder %v1990, 0
        %vm1992 = vcmp.eq.s32.totalorder %v1990, 1
        %1994 = vset.pattern.permute.xlu0 0
        %1995 = vperm.xlu0 %1994, %v1741
        %v1996 = vpop.permute.xlu0 %1995
        %1999 = vset.pattern.permute.xlu0 0
        %2000 = vperm.xlu0 %1999, %v1742
        %v2001 = vpop.permute.xlu0 %2000
        %2004 = vset.pattern.permute.xlu0 0
        %2005 = vperm.xlu0 %2004, %v1743
        %v2006 = vpop.permute.xlu0 %2005
        %2009 = vset.pattern.permute.xlu0 0
        %2010 = vperm.xlu0 %2009, %v1744
        %v2011 = vpop.permute.xlu0 %2010
        %2014 = vset.pattern.permute.xlu0 0
        %2015 = vperm.xlu0 %2014, %v1745
        %v2016 = vpop.permute.xlu0 %2015
        %2019 = vset.pattern.permute.xlu0 0
        %2020 = vperm.xlu0 %2019, %v1746
        %v2021 = vpop.permute.xlu0 %2020
        %2024 = vset.pattern.permute.xlu0 0
        %2025 = vperm.xlu0 %2024, %v1747
        %v2026 = vpop.permute.xlu0 %2025
        %2029 = vset.pattern.permute.xlu0 0
        %2030 = vperm.xlu0 %2029, %v1748
        %v2031 = vpop.permute.xlu0 %2030
        %v2033 = vsel %vm1992, %v1996, 0.0
        %v2034 = vsel %vm1992, %v2001, 0.0
        %v2035 = vsel %vm1992, %v2006, 0.0
        %v2036 = vsel %vm1992, %v2011, 0.0
        %v2037 = vsel %vm1992, %v2016, 0.0
        %v2038 = vsel %vm1992, %v2021, 0.0
        %v2039 = vsel %vm1992, %v2026, 0.0
        %v2040 = vsel %vm1992, %v2031, 0.0
        %2042 = vset.pattern.permute.xlu0 0
        %2043 = vperm.xlu0 %2042, %v1733
        %v2044 = vpop.permute.xlu0 %2043
        %2047 = vset.pattern.permute.xlu0 0
        %2048 = vperm.xlu0 %2047, %v1734
        %v2049 = vpop.permute.xlu0 %2048
        %2052 = vset.pattern.permute.xlu0 0
        %2053 = vperm.xlu0 %2052, %v1735
        %v2054 = vpop.permute.xlu0 %2053
        %2057 = vset.pattern.permute.xlu0 0
        %2058 = vperm.xlu0 %2057, %v1736
        %v2059 = vpop.permute.xlu0 %2058
        %2062 = vset.pattern.permute.xlu0 0
        %2063 = vperm.xlu0 %2062, %v1737
        %v2064 = vpop.permute.xlu0 %2063
        %2067 = vset.pattern.permute.xlu0 0
        %2068 = vperm.xlu0 %2067, %v1738
        %v2069 = vpop.permute.xlu0 %2068
        %2072 = vset.pattern.permute.xlu0 0
        %2073 = vperm.xlu0 %2072, %v1739
        %v2074 = vpop.permute.xlu0 %2073
        %2077 = vset.pattern.permute.xlu0 0
        %2078 = vperm.xlu0 %2077, %v1740
        %v2079 = vpop.permute.xlu0 %2078
        %v2081 = vsel %vm1991, %v2044, %v2033
        %v2082 = vsel %vm1991, %v2049, %v2034
        %v2083 = vsel %vm1991, %v2054, %v2035
        %v2084 = vsel %vm1991, %v2059, %v2036
        %v2085 = vsel %vm1991, %v2064, %v2037
        %v2086 = vsel %vm1991, %v2069, %v2038
        %v2087 = vsel %vm1991, %v2074, %v2039
        %v2088 = vsel %vm1991, %v2079, %v2040
        %2089 = vst [vmem:[%s285] sm:$0xff] %v2081
        %2090 = vst [vmem:[%s285 + $0x8] sm:$0xff] %v2082
        %2091 = vst [vmem:[%s285 + $0x10] sm:$0xff] %v2083
        %2092 = vst [vmem:[%s285 + $0x18] sm:$0xff] %v2084
        %2093 = vst [vmem:[%s285 + $0x20] sm:$0xff] %v2085
        %2094 = vst [vmem:[%s285 + $0x28] sm:$0xff] %v2086
        %2095 = vst [vmem:[%s285 + $0x30] sm:$0xff] %v2087
        %2096 = vst [vmem:[%s285 + $0x38] sm:$0xff] %v2088
        %2098 = vset.pattern.permute.xlu0 0
        %2099 = vperm.xlu0 %2098, %v1965
        %v2100 = vpop.permute.xlu0 %2099
        %2103 = vset.pattern.permute.xlu0 0
        %2104 = vperm.xlu0 %2103, %v1966
        %v2105 = vpop.permute.xlu0 %2104
        %2108 = vset.pattern.permute.xlu0 0
        %2109 = vperm.xlu0 %2108, %v1967
        %v2110 = vpop.permute.xlu0 %2109
        %2113 = vset.pattern.permute.xlu0 0
        %2114 = vperm.xlu0 %2113, %v1968
        %v2115 = vpop.permute.xlu0 %2114
        %2118 = vset.pattern.permute.xlu0 0
        %2119 = vperm.xlu0 %2118, %v1969
        %v2120 = vpop.permute.xlu0 %2119
        %2123 = vset.pattern.permute.xlu0 0
        %2124 = vperm.xlu0 %2123, %v1970
        %v2125 = vpop.permute.xlu0 %2124
        %2128 = vset.pattern.permute.xlu0 0
        %2129 = vperm.xlu0 %2128, %v1971
        %v2130 = vpop.permute.xlu0 %2129
        %2133 = vset.pattern.permute.xlu0 0
        %2134 = vperm.xlu0 %2133, %v1972
        %v2135 = vpop.permute.xlu0 %2134
        %v2137 = vsel %vm1992, %v2100, 0.0
        %v2138 = vsel %vm1992, %v2105, 0.0
        %v2139 = vsel %vm1992, %v2110, 0.0
        %v2140 = vsel %vm1992, %v2115, 0.0
        %v2141 = vsel %vm1992, %v2120, 0.0
        %v2142 = vsel %vm1992, %v2125, 0.0
        %v2143 = vsel %vm1992, %v2130, 0.0
        %v2144 = vsel %vm1992, %v2135, 0.0
        %2146 = vset.pattern.permute.xlu0 0
        %2147 = vperm.xlu0 %2146, %v1957
        %v2148 = vpop.permute.xlu0 %2147
        %2151 = vset.pattern.permute.xlu0 0
        %2152 = vperm.xlu0 %2151, %v1958
        %v2153 = vpop.permute.xlu0 %2152
        %2156 = vset.pattern.permute.xlu0 0
        %2157 = vperm.xlu0 %2156, %v1959
        %v2158 = vpop.permute.xlu0 %2157
        %2161 = vset.pattern.permute.xlu0 0
        %2162 = vperm.xlu0 %2161, %v1960
        %v2163 = vpop.permute.xlu0 %2162
        %2166 = vset.pattern.permute.xlu0 0
        %2167 = vperm.xlu0 %2166, %v1961
        %v2168 = vpop.permute.xlu0 %2167
        %2171 = vset.pattern.permute.xlu0 0
        %2172 = vperm.xlu0 %2171, %v1962
        %v2173 = vpop.permute.xlu0 %2172
        %2176 = vset.pattern.permute.xlu0 0
        %2177 = vperm.xlu0 %2176, %v1963
        %v2178 = vpop.permute.xlu0 %2177
        %2181 = vset.pattern.permute.xlu0 0
        %2182 = vperm.xlu0 %2181, %v1964
        %v2183 = vpop.permute.xlu0 %2182
        %v2185 = vsel %vm1991, %v2148, %v2137
        %v2186 = vsel %vm1991, %v2153, %v2138
        %v2187 = vsel %vm1991, %v2158, %v2139
        %v2188 = vsel %vm1991, %v2163, %v2140
        %v2189 = vsel %vm1991, %v2168, %v2141
        %v2190 = vsel %vm1991, %v2173, %v2142
        %v2191 = vsel %vm1991, %v2178, %v2143
        %v2192 = vsel %vm1991, %v2183, %v2144
        %2193 = vst [vmem:[%s285 + $0x40] sm:$0xff] %v2185
        %2194 = vst [vmem:[%s285 + $0x48] sm:$0xff] %v2186
        %2195 = vst [vmem:[%s285 + $0x50] sm:$0xff] %v2187
        %2196 = vst [vmem:[%s285 + $0x58] sm:$0xff] %v2188
        %2197 = vst [vmem:[%s285 + $0x60] sm:$0xff] %v2189
        %2198 = vst [vmem:[%s285 + $0x68] sm:$0xff] %v2190
        %2199 = vst [vmem:[%s285 + $0x70] sm:$0xff] %v2191
        %2200 = vst [vmem:[%s285 + $0x78] sm:$0xff] %v2192
        %s2201 = sand.u32 %s133, 1
        %s2202 = scalar_lea.sflag [#allocation4], %s2201
        %s2203 = sand.u32 %s133, 1
        %s2204 = smul.addr %s2203, 128
        %s2205 = scalar_lea.vmem [#allocation5], %s2204
        %s2206 = sand.u32 %s159, 1
        %s2207 = scalar_lea.sflag [#allocation7], %s2206
        %s2208 = sand.u32 %s159, 1
        %s2209 = smul.addr %s2208, 128
        %s2210 = scalar_lea.vmem [#allocation6], %s2209
        // Predicated region
        $region41: #{tpu_custom_call.1} parent=35 // pred_check
          %p2211 = pneg %p143
        $region42: #{tpu_custom_call.1} parent=35 // pred_check_branch
          %2213 = sbr.rel (%p2211) target = $region44
        $region43: #{tpu_custom_call.1} parent=35 // pred_region
          %s2214 = smul.u32 16, %s26
          %s2216 = ssub.s32 2048, 2048
          %2217 = vsyncadd %s2202, %s2216
          %s2218 = smul.addr %s2214, 128
          %s2219 = scalar_lea.hbm %s4, %s2218
          %s2220 = sshll.u32 %s2205, 4
          %s2221 = int_to_ptr.vmem [resolvable:$true] %s2220
          %2226 = dma.vmem_to_hbm [thread:$0]  %s2221, 2048, %s2219, %s2202, 128, 128, 8
        $region44: #{tpu_custom_call.1} parent=35 // pred_fallthru
          _
        // Predicated region
        $region45: #{tpu_custom_call.1} parent=35 // pred_check
          %p2227 = pneg %p169
        $region46: #{tpu_custom_call.1} parent=35 // pred_check_branch
          %2229 = sbr.rel (%p2227) target = $region48
        $region47: #{tpu_custom_call.1} parent=35 // pred_region
          %s2230 = smul.u32 16, %s26
          %s2232 = ssub.s32 2048, 2048
          %2233 = vsyncadd %s2207, %s2232
          %s2234 = smul.addr %s2230, 128
          %s2235 = scalar_lea.hbm %s5, %s2234
          %s2236 = sshll.u32 %s2210, 4
          %s2237 = int_to_ptr.vmem [resolvable:$true] %s2236
          %2242 = dma.vmem_to_hbm [thread:$0]  %s2237, 2048, %s2235, %s2207, 128, 128, 8
        $region48: #{tpu_custom_call.1} parent=35 // pred_fallthru
          _
      $region36: #{tpu_custom_call.1} parent=5 // pred_fallthru
        _
      %p2243 = scmp.le.s32.totalorder 2, %s21
      // Predicated region
      $region49: #{tpu_custom_call.1} parent=5 // pred_check
        %p2244 = pneg %p2243
      $region50: #{tpu_custom_call.1} parent=5 // pred_check_branch
        %2246 = sbr.rel (%p2244) target = $region52
      $region51: #{tpu_custom_call.1} parent=5 // pred_region
        %s2247 = ssub.s32 %s21, 2
        // Predicated region
        $region53: #{tpu_custom_call.1} parent=51 // pred_check
          %p2248 = pneg %p149
        $region54: #{tpu_custom_call.1} parent=51 // pred_check_branch
          %2250 = sbr.rel (%p2248) target = $region56
        $region55: #{tpu_custom_call.1} parent=51 // pred_region
          %s2251 = sand.u32 %s134, 1
          %s2252 = scalar_lea.sflag [#allocation4], %s2251
          %s2253 = sand.u32 %s134, 1
          %s2254 = smul.addr %s2253, 128
          %s2255 = scalar_lea.vmem [#allocation5], %s2254
          %2256 = dma.done %s2252, 2048
        $region56: #{tpu_custom_call.1} parent=51 // pred_fallthru
          _
        // Predicated region
        $region57: #{tpu_custom_call.1} parent=51 // pred_check
          %p2257 = pneg %p175
        $region58: #{tpu_custom_call.1} parent=51 // pred_check_branch
          %2259 = sbr.rel (%p2257) target = $region60
        $region59: #{tpu_custom_call.1} parent=51 // pred_region
          %s2260 = sand.u32 %s160, 1
          %s2261 = scalar_lea.sflag [#allocation7], %s2260
          %s2262 = sand.u32 %s160, 1
          %s2263 = smul.addr %s2262, 128
          %s2264 = scalar_lea.vmem [#allocation6], %s2263
          %2265 = dma.done %s2261, 2048
        $region60: #{tpu_custom_call.1} parent=51 // pred_fallthru
          _
      $region52: #{tpu_custom_call.1} parent=5 // pred_fallthru
        _
    $region6: #{tpu_custom_call.1} parent=1 // loop_footer
      %s25 = sadd.s32 1, %s21
    $region7: #{tpu_custom_call.1} parent=1 // loop_footer_branch
      %20 = sbr.rel target = $region3
    $region8: #{tpu_custom_call.1} parent=1 // loop_exit
      _
    %2266 = vsyncpa [#allocation3], 1
    %s2267 = scalar_lea.sflag [#allocation3], 1
    %2268 = vsyncpa %s2267, 1
    %2269 = vsyncpa [#allocation4], 1
    %s2270 = scalar_lea.sflag [#allocation4], 1
    %2271 = vsyncpa %s2270, 1
    %2272 = vsyncpa [#allocation7], 1
    %s2273 = scalar_lea.sflag [#allocation7], 1
    %2274 = vsyncpa %s2273, 1

// kernel: tpu_custom_call.1
$region0: #{tpu_custom_call.1}
  #allocation0 [shape = 'u32[]', space=smem, size = 0x4, offset = 0x4, fixed_abs, tag = 'smem constant byte address 0x4 - core index']
  #allocation1 [shape = 'u32[144,128]{1,0:T(1,128)}', space=vmem, size = 0x12000, scoped, tag = 'internal scratch']
  %s0 = inlined_call_operand.hbm [shape: f32[256,128], index: 0, kind: input, shape index: {}, may-alias: {0,4}]
  %s1 = inlined_call_operand.vmem [shape: f32[256,128], index: 1, kind: input, shape index: {}]
  %s2 = inlined_call_operand.vmem [shape: f32[256,1], index: 2, kind: input, shape index: {}]
  %s3 = inlined_call_operand.vmem [shape: f32[128,128], index: 3, kind: input, shape index: {}]
  %s4 = inlined_call_operand.hbm [shape: f32[256,128], index: 4, kind: output, shape index: {0}, may-alias: {0,4}]
  %s5 = inlined_call_operand.hbm [shape: f32[256,128], index: 5, kind: output, shape index: {1}]
  %6 = xla_tuple %s4, %s5
  %s7 = sld [smem:[#allocation0]]
  $region61: #{tpu_custom_call.1} parent=0
    _
  %s9 = ssub.s32 1, %s7
  %s10 = scalar_select 0, %s9, %s7
  $region1: #{tpu_custom_call.1} parent=0
    #allocation2 [shape = 'u8[131072]{0}', space=vmem, size = 0x20000, scoped, tag = 'input window, operand 0']
    #allocation3 [shape = 's32[2]{0}', space=sflag, size = 0x8, scoped, tag = 'scoped memory for tpu_custom_call.1']
    #allocation4 [shape = 's32[2]{0}', space=sflag, size = 0x8, scoped, tag = 'scoped memory for tpu_custom_call.1']
    #allocation5 [shape = 'u8[131072]{0}', space=vmem, size = 0x20000, scoped, tag = 'output window, operand 0']
    #allocation6 [shape = 'u8[131072]{0}', space=vmem, size = 0x20000, scoped, tag = 'output window, operand 1']
    #allocation7 [shape = 's32[2]{0}', space=sflag, size = 0x8, scoped, tag = 'scoped memory for tpu_custom_call.1']
    %11 = vsyncpa [#allocation3], 0
    %s12 = scalar_lea.sflag [#allocation3], 1
    %13 = vsyncpa %s12, 0
    %14 = vsyncpa [#allocation4], 0
    %s15 = scalar_lea.sflag [#allocation4], 1
    %16 = vsyncpa %s15, 0
    %17 = vsyncpa [#allocation7], 0
    %s18 = scalar_lea.sflag [#allocation7], 1
    %19 = vsyncpa %s18, 0
    loop: start=0, step=1, limit=4
    $region2: #{tpu_custom_call.1} parent=1 // loop_pre_header
      _
    $region3: #{tpu_custom_call.1} parent=1 // loop_header
      %s21 = sphi 0, %s25
      %p22 = scmp.ge.s32.totalorder %s21, 4
      %s31 = sphi 0, %s33
      %s34 = sphi 0, %s31
      %s35 = sphi 0, %s34
      %s51 = sphi 0, %s35
      %s57 = sphi 0, %s59
      %s60 = sphi 0, %s57
      %s61 = sphi 0, %s60
      %s77 = sphi 0, %s61
      %s83 = sphi 0, %s85
      %s86 = sphi 0, %s83
      %s87 = sphi 0, %s86
      %s103 = sphi 0, %s87
      %s107 = sphi 0, %s107
      %s109 = sphi 0, %s107
      %s110 = sphi 0, %s109
      %s124 = sphi 0, %s110
      %s130 = sphi 0, %s132
      %s133 = sphi 0, %s130
      %s134 = sphi 0, %s133
      %s150 = sphi 0, %s134
      %s156 = sphi 0, %s158
      %s159 = sphi 0, %s156
      %s160 = sphi 0, %s159
      %s176 = sphi 0, %s160
    $region4: #{tpu_custom_call.1} parent=1 // loop_header_branch
      %24 = sbr.rel (%p22) target = $region8
    $region5: #{tpu_custom_call.1} parent=1 // loop_body
      %s26 = ssub.s32 %s21, 1
      %s27 = ssub.s32 %s21, 2
      %s28 = sadd.s32 %s21, 1
      %s29 = ssub.s32 %s21, %s28
      %p30 = scmp.eq.s32.totalorder %s29, 0
      %s32 = sadd.s32 %s31, 1
      %s33 = scalar_select %p30, %s31, %s32
      %p36 = pneg %p30
      %p37 = scmp.eq.s32.totalorder %s21, 1
      %p38 = por %p36, %p37
      %p39 = scmp.ne.s32.totalorder %s31, %s34
      %p40 = scmp.eq.s32.totalorder %s21, 0
      %p41 = por %p39, %p40
      %p42 = scmp.ne.s32.totalorder %s31, %s34
      %p43 = scmp.eq.s32.totalorder %s26, 1
      %p44 = por %p42, %p43
      %p45 = scmp.ne.s32.totalorder %s34, %s35
      %p46 = scmp.eq.s32.totalorder %s26, 0
      %p47 = por %p45, %p46
      %p48 = scmp.ne.s32.totalorder %s34, %s35
      %p49 = scmp.eq.s32.totalorder %s27, 1
      %p50 = por %p48, %p49
      %p52 = scmp.ne.s32.totalorder %s35, %s51
      %p53 = scmp.eq.s32.totalorder %s27, 0
      %p54 = por %p52, %p53
      %s55 = ssub.s32 %s21, %s28
      %p56 = scmp.eq.s32.totalorder %s55, 0
      %s58 = sadd.s32 %s57, 1
      %s59 = scalar_select %p56, %s57, %s58
      %p62 = pneg %p56
      %p63 = scmp.eq.s32.totalorder %s21, 1
      %p64 = por %p62, %p63
      %p65 = scmp.ne.s32.totalorder %s57, %s60
      %p66 = scmp.eq.s32.totalorder %s21, 0
      %p67 = por %p65, %p66
      %p68 = scmp.ne.s32.totalorder %s57, %s60
      %p69 = scmp.eq.s32.totalorder %s26, 1
      %p70 = por %p68, %p69
      %p71 = scmp.ne.s32.totalorder %s60, %s61
      %p72 = scmp.eq.s32.totalorder %s26, 0
      %p73 = por %p71, %p72
      %p74 = scmp.ne.s32.totalorder %s60, %s61
      %p75 = scmp.eq.s32.totalorder %s27, 1
      %p76 = por %p74, %p75
      %p78 = scmp.ne.s32.totalorder %s61, %s77
      %p79 = scmp.eq.s32.totalorder %s27, 0
      %p80 = por %p78, %p79
      %s81 = ssub.s32 %s21, %s28
      %p82 = scmp.eq.s32.totalorder %s81, 0
      %s84 = sadd.s32 %s83, 1
      %s85 = scalar_select %p82, %s83, %s84
      %p88 = pneg %p82
      %p89 = scmp.eq.s32.totalorder %s21, 1
      %p90 = por %p88, %p89
      %p91 = scmp.ne.s32.totalorder %s83, %s86
      %p92 = scmp.eq.s32.totalorder %s21, 0
      %p93 = por %p91, %p92
      %p94 = scmp.ne.s32.totalorder %s83, %s86
      %p95 = scmp.eq.s32.totalorder %s26, 1
      %p96 = por %p94, %p95
      %p97 = scmp.ne.s32.totalorder %s86, %s87
      %p98 = scmp.eq.s32.totalorder %s26, 0
      %p99 = por %p97, %p98
      %p100 = scmp.ne.s32.totalorder %s86, %s87
      %p101 = scmp.eq.s32.totalorder %s27, 1
      %p102 = por %p100, %p101
      %p104 = scmp.ne.s32.totalorder %s87, %s103
      %p105 = scmp.eq.s32.totalorder %s27, 0
      %p106 = por %p104, %p105
      %s108 = sadd.s32 %s107, 1
      %p111 = scmp.eq.s32.totalorder %s21, 1
      %p112 = scmp.ne.s32.totalorder %s107, %s109
      %p113 = scmp.eq.s32.totalorder %s21, 0
      %p114 = por %p112, %p113
      %p115 = scmp.ne.s32.totalorder %s107, %s109
      %p116 = scmp.eq.s32.totalorder %s26, 1
      %p117 = por %p115, %p116
      %p118 = scmp.ne.s32.totalorder %s109, %s110
      %p119 = scmp.eq.s32.totalorder %s26, 0
      %p120 = por %p118, %p119
      %p121 = scmp.ne.s32.totalorder %s109, %s110
      %p122 = scmp.eq.s32.totalorder %s27, 1
      %p123 = por %p121, %p122
      %p125 = scmp.ne.s32.totalorder %s110, %s124
      %p126 = scmp.eq.s32.totalorder %s27, 0
      %p127 = por %p125, %p126
      %s128 = ssub.s32 %s21, %s28
      %p129 = scmp.eq.s32.totalorder %s128, 0
      %s131 = sadd.s32 %s130, 1
      %s132 = scalar_select %p129, %s130, %s131
      %p135 = pneg %p129
      %p136 = scmp.eq.s32.totalorder %s21, 1
      %p137 = por %p135, %p136
      %p138 = scmp.ne.s32.totalorder %s130, %s133
      %p139 = scmp.eq.s32.totalorder %s21, 0
      %p140 = por %p138, %p139
      %p141 = scmp.ne.s32.totalorder %s130, %s133
      %p142 = scmp.eq.s32.totalorder %s26, 1
      %p143 = por %p141, %p142
      %p144 = scmp.ne.s32.totalorder %s133, %s134
      %p145 = scmp.eq.s32.totalorder %s26, 0
      %p146 = por %p144, %p145
      %p147 = scmp.ne.s32.totalorder %s133, %s134
      %p148 = scmp.eq.s32.totalorder %s27, 1
      %p149 = por %p147, %p148
      %p151 = scmp.ne.s32.totalorder %s134, %s150
      %p152 = scmp.eq.s32.totalorder %s27, 0
      %p153 = por %p151, %p152
      %s154 = ssub.s32 %s21, %s28
      %p155 = scmp.eq.s32.totalorder %s154, 0
      %s157 = sadd.s32 %s156, 1
      %s158 = scalar_select %p155, %s156, %s157
      %p161 = pneg %p155
      %p162 = scmp.eq.s32.totalorder %s21, 1
      %p163 = por %p161, %p162
      %p164 = scmp.ne.s32.totalorder %s156, %s159
      %p165 = scmp.eq.s32.totalorder %s21, 0
      %p166 = por %p164, %p165
      %p167 = scmp.ne.s32.totalorder %s156, %s159
      %p168 = scmp.eq.s32.totalorder %s26, 1
      %p169 = por %p167, %p168
      %p170 = scmp.ne.s32.totalorder %s159, %s160
      %p171 = scmp.eq.s32.totalorder %s26, 0
      %p172 = por %p170, %p171
      %p173 = scmp.ne.s32.totalorder %s159, %s160
      %p174 = scmp.eq.s32.totalorder %s27, 1
      %p175 = por %p173, %p174
      %p177 = scmp.ne.s32.totalorder %s160, %s176
      %p178 = scmp.eq.s32.totalorder %s27, 0
      %p179 = por %p177, %p178
      %p180 = scmp.le.s32.totalorder 1, %s21
      %p181 = scmp.lt.s32.totalorder %s21, 3
      %p182 = pnand %p180, %p181
      %p183 = pneg %p182
      // Predicated region
      $region9: #{tpu_custom_call.1} parent=5 // pred_check
        _
      $region10: #{tpu_custom_call.1} parent=5 // pred_check_branch
        %185 = sbr.rel (%p182) target = $region12
      $region11: #{tpu_custom_call.1} parent=5 // pred_region
        %s186 = ssub.s32 %s21, 1
        // Predicated region
        $region13: #{tpu_custom_call.1} parent=11 // pred_check
          %p187 = pneg %p120
        $region14: #{tpu_custom_call.1} parent=11 // pred_check_branch
          %189 = sbr.rel (%p187) target = $region16
        $region15: #{tpu_custom_call.1} parent=11 // pred_region
          _
        $region16: #{tpu_custom_call.1} parent=11 // pred_fallthru
          _
      $region12: #{tpu_custom_call.1} parent=5 // pred_fallthru
        _
      %p190 = scmp.lt.s32.totalorder %s21, 2
      // Predicated region
      $region17: #{tpu_custom_call.1} parent=5 // pred_check
        %p191 = pneg %p190
      $region18: #{tpu_custom_call.1} parent=5 // pred_check_branch
        %193 = sbr.rel (%p191) target = $region20
      $region19: #{tpu_custom_call.1} parent=5 // pred_region
        // Predicated region
        $region21: #{tpu_custom_call.1} parent=19 // pred_check
          %p194 = pneg %p41
        $region22: #{tpu_custom_call.1} parent=19 // pred_check_branch
          %196 = sbr.rel (%p194) target = $region24
        $region23: #{tpu_custom_call.1} parent=19 // pred_region
          %s197 = sand.u32 %s31, 1
          %s198 = scalar_lea.sflag [#allocation3], %s197
          %s199 = sand.u32 %s31, 1
          %s200 = smul.addr %s199, 128
          %s201 = scalar_lea.vmem [#allocation2], %s200
          %s202 = smul.u32 16, %s21
          %s204 = ssub.s32 2048, 2048
          %205 = vsyncadd %s198, %s204
          %s206 = smul.addr %s202, 128
          %s207 = scalar_lea.hbm %s0, %s206
          %s208 = sshll.u32 %s201, 4
          %s209 = int_to_ptr.vmem [resolvable:$true] %s208
          %214 = dma.hbm_to_vmem [thread:$0]  %s207, 2048, %s209, %s198, 128, 128, 8
        $region24: #{tpu_custom_call.1} parent=19 // pred_fallthru
          _
        // Predicated region
        $region25: #{tpu_custom_call.1} parent=19 // pred_check
          %p215 = pneg %p67
        $region26: #{tpu_custom_call.1} parent=19 // pred_check_branch
          %217 = sbr.rel (%p215) target = $region28
        $region27: #{tpu_custom_call.1} parent=19 // pred_region
          %s218 = smul.u32 16, %s21
          %p219 = scmp.lt.s32.totalorder %s218, 31
          %s220 = scalar_select %p219, %s218, 31
          %s221 = smul.addr %s220, 8
          %s222 = scalar_lea.vmem %s1, %s221
          %s223 = smul.u32 16, %s21
        $region28: #{tpu_custom_call.1} parent=19 // pred_fallthru
          _
        // Predicated region
        $region29: #{tpu_custom_call.1} parent=19 // pred_check
          %p224 = pneg %p93
        $region30: #{tpu_custom_call.1} parent=19 // pred_check_branch
          %226 = sbr.rel (%p224) target = $region32
        $region31: #{tpu_custom_call.1} parent=19 // pred_region
          %s227 = smul.u32 16, %s21
          %p228 = scmp.lt.s32.totalorder %s227, 31
          %s229 = scalar_select %p228, %s227, 31
          %s230 = smul.addr %s229, 8
          %s231 = scalar_lea.vmem %s2, %s230
          %s232 = smul.u32 16, %s21
        $region32: #{tpu_custom_call.1} parent=19 // pred_fallthru
          _
      $region20: #{tpu_custom_call.1} parent=5 // pred_fallthru
        _
      %p233 = scmp.le.s32.totalorder 1, %s21
      %p234 = scmp.lt.s32.totalorder %s21, 3
      %p235 = pnand %p233, %p234
      %p236 = pneg %p235
      // Predicated region
      $region33: #{tpu_custom_call.1} parent=5 // pred_check
        _
      $region34: #{tpu_custom_call.1} parent=5 // pred_check_branch
        %238 = sbr.rel (%p235) target = $region36
      $region35: #{tpu_custom_call.1} parent=5 // pred_region
        %s239 = ssub.s32 %s21, 1
        %s240 = sand.u32 %s34, 1
        %s241 = scalar_lea.sflag [#allocation3], %s240
        %s242 = sand.u32 %s34, 1
        %s243 = smul.addr %s242, 128
        %s244 = scalar_lea.vmem [#allocation2], %s243
        // Predicated region
        $region37: #{tpu_custom_call.1} parent=35 // pred_check
          %p245 = pneg %p47
        $region38: #{tpu_custom_call.1} parent=35 // pred_check_branch
          %247 = sbr.rel (%p245) target = $region40
        $region39: #{tpu_custom_call.1} parent=35 // pred_region
          %248 = dma.done %s241, 2048
        $region40: #{tpu_custom_call.1} parent=35 // pred_fallthru
          _
        %s249 = sand.u32 %s34, 1
        %s250 = scalar_lea.sflag [#allocation3], %s249
        %s251 = sand.u32 %s34, 1
        %s252 = smul.addr %s251, 128
        %s253 = scalar_lea.vmem [#allocation2], %s252
        %p254 = pneg %p47
        %p255 = pneg %p44
        %s256 = smul.u32 16, %s26
        %p257 = scmp.lt.s32.totalorder %s256, 31
        %s258 = scalar_select %p257, %s256, 31
        %s259 = smul.addr %s258, 8
        %s260 = scalar_lea.vmem %s1, %s259
        %p261 = pneg %p73
        %p262 = pneg %p70
        %s263 = smul.u32 16, %s26
        %p264 = scmp.lt.s32.totalorder %s263, 31
        %s265 = scalar_select %p264, %s263, 31
        %s266 = smul.addr %s265, 8
        %s267 = scalar_lea.vmem %s2, %s266
        %p268 = pneg %p99
        %p269 = pneg %p96
        %p270 = pneg %p120
        %p271 = pneg %p117
        %p272 = pneg %p146
        %p273 = pneg %p143
        %s274 = sand.u32 %s133, 1
        %s275 = scalar_lea.sflag [#allocation4], %s274
        %s276 = sand.u32 %s133, 1
        %s277 = smul.addr %s276, 128
        %s278 = scalar_lea.vmem [#allocation5], %s277
        %p279 = pneg %p172
        %p280 = pneg %p169
        %s281 = sand.u32 %s159, 1
        %s282 = scalar_lea.sflag [#allocation7], %s281
        %s283 = sand.u32 %s159, 1
        %s284 = smul.addr %s283, 128
        %s285 = scalar_lea.vmem [#allocation6], %s284
        %s286 = smul.u32 16, %s26
        %s287 = smul.u32 16, %s26
        %p288 = scmp.lt.s32.totalorder %s287, 31
        %s289 = scalar_select %p288, %s287, 31
        %s290 = smul.addr %s289, 8
        %s291 = scalar_lea.vmem %s1, %s290
        %s292 = smul.u32 16, %s26
        %s293 = smul.u32 16, %s26
        %p294 = scmp.lt.s32.totalorder %s293, 31
        %s295 = scalar_select %p294, %s293, 31
        %s296 = smul.addr %s295, 8
        %s297 = scalar_lea.vmem %s2, %s296
        %s298 = smul.u32 16, %s26
        %s299 = smul.u32 16, %s26
        %s300 = smul.u32 16, %s26
        %v301 = vld [vmem:[%s3] sm:$0xff]
        %v302 = vld [vmem:[%s3 + $0x8] sm:$0xff]
        %v303 = vld [vmem:[%s3 + $0x10] sm:$0xff]
        %v304 = vld [vmem:[%s3 + $0x18] sm:$0xff]
        %v305 = vld [vmem:[%s3 + $0x20] sm:$0xff]
        %v306 = vld [vmem:[%s3 + $0x28] sm:$0xff]
        %v307 = vld [vmem:[%s3 + $0x30] sm:$0xff]
        %v308 = vld [vmem:[%s3 + $0x38] sm:$0xff]
        %v309 = vld [vmem:[%s3 + $0x40] sm:$0xff]
        %v310 = vld [vmem:[%s3 + $0x48] sm:$0xff]
        %v311 = vld [vmem:[%s3 + $0x50] sm:$0xff]
        %v312 = vld [vmem:[%s3 + $0x58] sm:$0xff]
        %v313 = vld [vmem:[%s3 + $0x60] sm:$0xff]
        %v314 = vld [vmem:[%s3 + $0x68] sm:$0xff]
        %v315 = vld [vmem:[%s3 + $0x70] sm:$0xff]
        %v316 = vld [vmem:[%s3 + $0x78] sm:$0xff]
        %v317 = vld [vmem:[%s244] sm:$0xff]
        %v318 = vld [vmem:[%s244 + $0x8] sm:$0xff]
        %v319 = vld [vmem:[%s244 + $0x10] sm:$0xff]
        %v320 = vld [vmem:[%s244 + $0x18] sm:$0xff]
        %v321 = vld [vmem:[%s244 + $0x20] sm:$0xff]
        %v322 = vld [vmem:[%s244 + $0x28] sm:$0xff]
        %v323 = vld [vmem:[%s244 + $0x30] sm:$0xff]
        %v324 = vld [vmem:[%s244 + $0x38] sm:$0xff]
        %v325 = vld [vmem:[%s244 + $0x40] sm:$0xff]
        %v326 = vld [vmem:[%s244 + $0x48] sm:$0xff]
        %v327 = vld [vmem:[%s244 + $0x50] sm:$0xff]
        %v328 = vld [vmem:[%s244 + $0x58] sm:$0xff]
        %v329 = vld [vmem:[%s244 + $0x60] sm:$0xff]
        %v330 = vld [vmem:[%s244 + $0x68] sm:$0xff]
        %v331 = vld [vmem:[%s244 + $0x70] sm:$0xff]
        %v332 = vld [vmem:[%s244 + $0x78] sm:$0xff]
        %v333 = vld [vmem:[%s291] sm:$0xff]
        %v334 = vld [vmem:[%s291 + $0x8] sm:$0xff]
        %v335 = vld [vmem:[%s291 + $0x10] sm:$0xff]
        %v336 = vld [vmem:[%s291 + $0x18] sm:$0xff]
        %v337 = vld [vmem:[%s291 + $0x20] sm:$0xff]
        %v338 = vld [vmem:[%s291 + $0x28] sm:$0xff]
        %v339 = vld [vmem:[%s291 + $0x30] sm:$0xff]
        %v340 = vld [vmem:[%s291 + $0x38] sm:$0xff]
        %v341 = vld [vmem:[%s291 + $0x40] sm:$0xff]
        %v342 = vld [vmem:[%s291 + $0x48] sm:$0xff]
        %v343 = vld [vmem:[%s291 + $0x50] sm:$0xff]
        %v344 = vld [vmem:[%s291 + $0x58] sm:$0xff]
        %v345 = vld [vmem:[%s291 + $0x60] sm:$0xff]
        %v346 = vld [vmem:[%s291 + $0x68] sm:$0xff]
        %v347 = vld [vmem:[%s291 + $0x70] sm:$0xff]
        %v348 = vld [vmem:[%s291 + $0x78] sm:$0xff]
        %349 = vmatprep.subr.mxu0 0.0
        %350 = vmatpush1.msra.mxu0 %v301
        %351 = vmatprep.subr.mxu0 0.0
        %352 = vmatpush1.msra.mxu0 %v302
        %353 = vmatprep.subr.mxu0 0.0
        %354 = vmatpush1.msra.mxu0 %v303
        %355 = vmatprep.subr.mxu0 0.0
        %356 = vmatpush1.msra.mxu0 %v304
        %357 = vmatprep.subr.mxu0 0.0
        %358 = vmatpush1.msra.mxu0 %v305
        %359 = vmatprep.subr.mxu0 0.0
        %360 = vmatpush1.msra.mxu0 %v306
        %361 = vmatprep.subr.mxu0 0.0
        %362 = vmatpush1.msra.mxu0 %v307
        %363 = vmatprep.subr.mxu0 0.0
        %364 = vmatpush1.msra.mxu0 %v308
        %365 = vmatprep.subr.mxu0 0.0
        %366 = vmatpush1.msra.mxu0 %v309
        %367 = vmatprep.subr.mxu0 0.0
        %368 = vmatpush1.msra.mxu0 %v310
        %369 = vmatprep.subr.mxu0 0.0
        %370 = vmatpush1.msra.mxu0 %v311
        %371 = vmatprep.subr.mxu0 0.0
        %372 = vmatpush1.msra.mxu0 %v312
        %373 = vmatprep.subr.mxu0 0.0
        %374 = vmatpush1.msra.mxu0 %v313
        %375 = vmatprep.subr.mxu0 0.0
        %376 = vmatpush1.msra.mxu0 %v314
        %377 = vmatprep.subr.mxu0 0.0
        %378 = vmatpush1.msra.mxu0 %v315
        %379 = vmatprep.subr.mxu0 0.0
        %380 = vmatpush1.msra.mxu0 %v316
        %381 = vmatprep.subr.mxu0 0.0
        %382 = vmatpush1.msra.mxu0 0.0
        %383 = vmatprep.subr.mxu0 0.0
        %384 = vmatpush1.msra.mxu0 0.0
        %385 = vmatprep.subr.mxu0 0.0
        %386 = vmatpush1.msra.mxu0 0.0
        %387 = vmatprep.subr.mxu0 0.0
        %388 = vmatpush1.msra.mxu0 0.0
        %389 = vmatprep.subr.mxu0 0.0
        %390 = vmatpush1.msra.mxu0 0.0
        %391 = vmatprep.subr.mxu0 0.0
        %392 = vmatpush1.msra.mxu0 0.0
        %393 = vmatprep.subr.mxu0 0.0
        %394 = vmatpush1.msra.mxu0 0.0
        %395 = vmatprep.subr.mxu0 0.0
        %396 = vmatpush1.msra.mxu0 0.0
        %397 = vmatprep.subr.mxu0 0.0
        %398 = vmatpush1.msra.mxu0 0.0
        %399 = vmatprep.subr.mxu0 0.0
        %400 = vmatpush1.msra.mxu0 0.0
        %401 = vmatprep.subr.mxu0 0.0
        %402 = vmatpush1.msra.mxu0 0.0
        %403 = vmatprep.subr.mxu0 0.0
        %404 = vmatpush1.msra.mxu0 0.0
        %405 = vmatprep.subr.mxu0 0.0
        %406 = vmatpush1.msra.mxu0 0.0
        %407 = vmatprep.subr.mxu0 0.0
        %408 = vmatpush1.msra.mxu0 0.0
        %409 = vmatprep.subr.mxu0 0.0
        %410 = vmatpush1.msra.mxu0 0.0
        %411 = vmatprep.subr.mxu0 0.0
        %412 = vmatpush1.msra.mxu0 0.0
        %413 = vmatprep.mubr.f32.mxu0 0.0
        %414 = vmatmul.mubr.f32.gmra.mrb[0].mxu0 %v317
        %v415 = vpop.f32.mrb[0].mxu0
        %v416 = vadd.f32 0.0, %v415
        %v417 = vpop.f32.mrb[0].mxu0
        %418 = vmatprep.mubr.f32.mxu0 0.0
        %419 = vmatmul.mubr.f32.gmra.mrb[0].mxu0 %v318
        %v420 = vpop.f32.mrb[0].mxu0
        %v421 = vadd.f32 0.0, %v420
        %v422 = vpop.f32.mrb[0].mxu0
        %423 = vmatprep.mubr.f32.mxu0 0.0
        %424 = vmatmul.mubr.f32.gmra.mrb[0].mxu0 %v319
        %v425 = vpop.f32.mrb[0].mxu0
        %v426 = vadd.f32 0.0, %v425
        %v427 = vpop.f32.mrb[0].mxu0
        %428 = vmatprep.mubr.f32.mxu0 0.0
        %429 = vmatmul.mubr.f32.gmra.mrb[0].mxu0 %v320
        %v430 = vpop.f32.mrb[0].mxu0
        %v431 = vadd.f32 0.0, %v430
        %v432 = vpop.f32.mrb[0].mxu0
        %433 = vmatprep.mubr.f32.mxu0 0.0
        %434 = vmatmul.mubr.f32.gmra.mrb[0].mxu0 %v321
        %v435 = vpop.f32.mrb[0].mxu0
        %v436 = vadd.f32 0.0, %v435
        %v437 = vpop.f32.mrb[0].mxu0
        %438 = vmatprep.mubr.f32.mxu0 0.0
        %439 = vmatmul.mubr.f32.gmra.mrb[0].mxu0 %v322
        %v440 = vpop.f32.mrb[0].mxu0
        %v441 = vadd.f32 0.0, %v440
        %v442 = vpop.f32.mrb[0].mxu0
        %443 = vmatprep.mubr.f32.mxu0 0.0
        %444 = vmatmul.mubr.f32.gmra.mrb[0].mxu0 %v323
        %v445 = vpop.f32.mrb[0].mxu0
        %v446 = vadd.f32 0.0, %v445
        %v447 = vpop.f32.mrb[0].mxu0
        %448 = vmatprep.mubr.f32.mxu0 0.0
        %449 = vmatmul.mubr.f32.gmra.mrb[0].mxu0 %v324
        %v450 = vpop.f32.mrb[0].mxu0
        %v451 = vadd.f32 0.0, %v450
        %v452 = vpop.f32.mrb[0].mxu0
        %453 = vdwg.mxu0
        %v454 = vmul.f32 %v317, %v416
        %v455 = vmul.f32 %v318, %v421
        %v456 = vmul.f32 %v319, %v426
        %v457 = vmul.f32 %v320, %v431
        %v458 = vmul.f32 %v321, %v436
        %v459 = vmul.f32 %v322, %v441
        %v460 = vmul.f32 %v323, %v446
        %v461 = vmul.f32 %v324, %v451
        %462 = vadd.xlane.f32.xlu0 %v454
        %v463 = vpop.xlane.xlu0 %462
        %464 = vadd.xlane.f32.xlu0 %v455
        %v465 = vpop.xlane.xlu0 %464
        %466 = vadd.xlane.f32.xlu0 %v456
        %v467 = vpop.xlane.xlu0 %466
        %468 = vadd.xlane.f32.xlu0 %v457
        %v469 = vpop.xlane.xlu0 %468
        %470 = vadd.xlane.f32.xlu0 %v458
        %v471 = vpop.xlane.xlu0 %470
        %472 = vadd.xlane.f32.xlu0 %v459
        %v473 = vpop.xlane.xlu0 %472
        %474 = vadd.xlane.f32.xlu0 %v460
        %v475 = vpop.xlane.xlu0 %474
        %476 = vadd.xlane.f32.xlu0 %v461
        %v477 = vpop.xlane.xlu0 %476
        %v478 = vmul.f32 %v463, 0.5
        %v479 = vmul.f32 %v465, 0.5
        %v480 = vmul.f32 %v467, 0.5
        %v481 = vmul.f32 %v469, 0.5
        %v482 = vmul.f32 %v471, 0.5
        %v483 = vmul.f32 %v473, 0.5
        %v484 = vmul.f32 %v475, 0.5
        %v485 = vmul.f32 %v477, 0.5
        %v486 = vmul.f32 %v333, %v333
        %v487 = vmul.f32 %v334, %v334
        %v488 = vmul.f32 %v335, %v335
        %v489 = vmul.f32 %v336, %v336
        %v490 = vmul.f32 %v337, %v337
        %v491 = vmul.f32 %v338, %v338
        %v492 = vmul.f32 %v339, %v339
        %v493 = vmul.f32 %v340, %v340
        %494 = vadd.xlane.f32.xlu0 %v486
        %v495 = vpop.xlane.xlu0 %494
        %496 = vadd.xlane.f32.xlu0 %v487
        %v497 = vpop.xlane.xlu0 %496
        %498 = vadd.xlane.f32.xlu0 %v488
        %v499 = vpop.xlane.xlu0 %498
        %500 = vadd.xlane.f32.xlu0 %v489
        %v501 = vpop.xlane.xlu0 %500
        %502 = vadd.xlane.f32.xlu0 %v490
        %v503 = vpop.xlane.xlu0 %502
        %504 = vadd.xlane.f32.xlu0 %v491
        %v505 = vpop.xlane.xlu0 %504
        %506 = vadd.xlane.f32.xlu0 %v492
        %v507 = vpop.xlane.xlu0 %506
        %508 = vadd.xlane.f32.xlu0 %v493
        %v509 = vpop.xlane.xlu0 %508
        %v510 = vmul.f32 %v495, 0.5
        %v511 = vmul.f32 %v497, 0.5
        %v512 = vmul.f32 %v499, 0.5
        %v513 = vmul.f32 %v501, 0.5
        %v514 = vmul.f32 %v503, 0.5
        %v515 = vmul.f32 %v505, 0.5
        %v516 = vmul.f32 %v507, 0.5
        %v517 = vmul.f32 %v509, 0.5
        %v518 = vmul.f32 %v416, 0.01
        %v519 = vmul.f32 %v421, 0.01
        %v520 = vmul.f32 %v426, 0.01
        %v521 = vmul.f32 %v431, 0.01
        %v522 = vmul.f32 %v436, 0.01
        %v523 = vmul.f32 %v441, 0.01
        %v524 = vmul.f32 %v446, 0.01
        %v525 = vmul.f32 %v451, 0.01
        %v526 = vmul.f32 %v518, 0.5
        %v527 = vmul.f32 %v519, 0.5
        %v528 = vmul.f32 %v520, 0.5
        %v529 = vmul.f32 %v521, 0.5
        %v530 = vmul.f32 %v522, 0.5
        %v531 = vmul.f32 %v523, 0.5
        %v532 = vmul.f32 %v524, 0.5
        %v533 = vmul.f32 %v525, 0.5
        %v534 = vsub.f32 %v333, %v526
        %v535 = vsub.f32 %v334, %v527
        %v536 = vsub.f32 %v335, %v528
        %v537 = vsub.f32 %v336, %v529
        %v538 = vsub.f32 %v337, %v530
        %v539 = vsub.f32 %v338, %v531
        %v540 = vsub.f32 %v339, %v532
        %v541 = vsub.f32 %v340, %v533
        %v542 = vmul.f32 %v534, 0.01
        %v543 = vmul.f32 %v535, 0.01
        %v544 = vmul.f32 %v536, 0.01
        %v545 = vmul.f32 %v537, 0.01
        %v546 = vmul.f32 %v538, 0.01
        %v547 = vmul.f32 %v539, 0.01
        %v548 = vmul.f32 %v540, 0.01
        %v549 = vmul.f32 %v541, 0.01
        %v550 = vsub.f32 %v317, %v542
        %v551 = vsub.f32 %v318, %v543
        %v552 = vsub.f32 %v319, %v544
        %v553 = vsub.f32 %v320, %v545
        %v554 = vsub.f32 %v321, %v546
        %v555 = vsub.f32 %v322, %v547
        %v556 = vsub.f32 %v323, %v548
        %v557 = vsub.f32 %v324, %v549
        %558 = vmatprep.subr.mxu0 0.0
        %559 = vmatpush1.msra.mxu0 %v301
        %560 = vmatprep.subr.mxu0 0.0
        %561 = vmatpush1.msra.mxu0 %v302
        %562 = vmatprep.subr.mxu0 0.0
        %563 = vmatpush1.msra.mxu0 %v303
        %564 = vmatprep.subr.mxu0 0.0
        %565 = vmatpush1.msra.mxu0 %v304
        %566 = vmatprep.subr.mxu0 0.0
        %567 = vmatpush1.msra.mxu0 %v305
        %568 = vmatprep.subr.mxu0 0.0
        %569 = vmatpush1.msra.mxu0 %v306
        %570 = vmatprep.subr.mxu0 0.0
        %571 = vmatpush1.msra.mxu0 %v307
        %572 = vmatprep.subr.mxu0 0.0
        %573 = vmatpush1.msra.mxu0 %v308
        %574 = vmatprep.subr.mxu0 0.0
        %575 = vmatpush1.msra.mxu0 %v309
        %576 = vmatprep.subr.mxu0 0.0
        %577 = vmatpush1.msra.mxu0 %v310
        %578 = vmatprep.subr.mxu0 0.0
        %579 = vmatpush1.msra.mxu0 %v311
        %580 = vmatprep.subr.mxu0 0.0
        %581 = vmatpush1.msra.mxu0 %v312
        %582 = vmatprep.subr.mxu0 0.0
        %583 = vmatpush1.msra.mxu0 %v313
        %584 = vmatprep.subr.mxu0 0.0
        %585 = vmatpush1.msra.mxu0 %v314
        %586 = vmatprep.subr.mxu0 0.0
        %587 = vmatpush1.msra.mxu0 %v315
        %588 = vmatprep.subr.mxu0 0.0
        %589 = vmatpush1.msra.mxu0 %v316
        %590 = vmatprep.subr.mxu0 0.0
        %591 = vmatpush1.msra.mxu0 0.0
        %592 = vmatprep.subr.mxu0 0.0
        %593 = vmatpush1.msra.mxu0 0.0
        %594 = vmatprep.subr.mxu0 0.0
        %595 = vmatpush1.msra.mxu0 0.0
        %596 = vmatprep.subr.mxu0 0.0
        %597 = vmatpush1.msra.mxu0 0.0
        %598 = vmatprep.subr.mxu0 0.0
        %599 = vmatpush1.msra.mxu0 0.0
        %600 = vmatprep.subr.mxu0 0.0
        %601 = vmatpush1.msra.mxu0 0.0
        %602 = vmatprep.subr.mxu0 0.0
        %603 = vmatpush1.msra.mxu0 0.0
        %604 = vmatprep.subr.mxu0 0.0
        %605 = vmatpush1.msra.mxu0 0.0
        %606 = vmatprep.subr.mxu0 0.0
        %607 = vmatpush1.msra.mxu0 0.0
        %608 = vmatprep.subr.mxu0 0.0
        %609 = vmatpush1.msra.mxu0 0.0
        %610 = vmatprep.subr.mxu0 0.0
        %611 = vmatpush1.msra.mxu0 0.0
        %612 = vmatprep.subr.mxu0 0.0
        %613 = vmatpush1.msra.mxu0 0.0
        %614 = vmatprep.subr.mxu0 0.0
        %615 = vmatpush1.msra.mxu0 0.0
        %616 = vmatprep.subr.mxu0 0.0
        %617 = vmatpush1.msra.mxu0 0.0
        %618 = vmatprep.subr.mxu0 0.0
        %619 = vmatpush1.msra.mxu0 0.0
        %620 = vmatprep.subr.mxu0 0.0
        %621 = vmatpush1.msra.mxu0 0.0
        %622 = vmatprep.mubr.f32.mxu0 0.0
        %623 = vmatmul.mubr.f32.gmra.mrb[0].mxu0 %v325
        %v624 = vpop.f32.mrb[0].mxu0
        %v625 = vadd.f32 0.0, %v624
        %v626 = vpop.f32.mrb[0].mxu0
        %627 = vmatprep.mubr.f32.mxu0 0.0
        %628 = vmatmul.mubr.f32.gmra.mrb[0].mxu0 %v326
        %v629 = vpop.f32.mrb[0].mxu0
        %v630 = vadd.f32 0.0, %v629
        %v631 = vpop.f32.mrb[0].mxu0
        %632 = vmatprep.mubr.f32.mxu0 0.0
        %633 = vmatmul.mubr.f32.gmra.mrb[0].mxu0 %v327
        %v634 = vpop.f32.mrb[0].mxu0
        %v635 = vadd.f32 0.0, %v634
        %v636 = vpop.f32.mrb[0].mxu0
        %637 = vmatprep.mubr.f32.mxu0 0.0
        %638 = vmatmul.mubr.f32.gmra.mrb[0].mxu0 %v328
        %v639 = vpop.f32.mrb[0].mxu0
        %v640 = vadd.f32 0.0, %v639
        %v641 = vpop.f32.mrb[0].mxu0
        %642 = vmatprep.mubr.f32.mxu0 0.0
        %643 = vmatmul.mubr.f32.gmra.mrb[0].mxu0 %v329
        %v644 = vpop.f32.mrb[0].mxu0
        %v645 = vadd.f32 0.0, %v644
        %v646 = vpop.f32.mrb[0].mxu0
        %647 = vmatprep.mubr.f32.mxu0 0.0
        %648 = vmatmul.mubr.f32.gmra.mrb[0].mxu0 %v330
        %v649 = vpop.f32.mrb[0].mxu0
        %v650 = vadd.f32 0.0, %v649
        %v651 = vpop.f32.mrb[0].mxu0
        %652 = vmatprep.mubr.f32.mxu0 0.0
        %653 = vmatmul.mubr.f32.gmra.mrb[0].mxu0 %v331
        %v654 = vpop.f32.mrb[0].mxu0
        %v655 = vadd.f32 0.0, %v654
        %v656 = vpop.f32.mrb[0].mxu0
        %657 = vmatprep.mubr.f32.mxu0 0.0
        %658 = vmatmul.mubr.f32.gmra.mrb[0].mxu0 %v332
        %v659 = vpop.f32.mrb[0].mxu0
        %v660 = vadd.f32 0.0, %v659
        %v661 = vpop.f32.mrb[0].mxu0
        %662 = vdwg.mxu0
        %v663 = vmul.f32 %v325, %v625
        %v664 = vmul.f32 %v326, %v630
        %v665 = vmul.f32 %v327, %v635
        %v666 = vmul.f32 %v328, %v640
        %v667 = vmul.f32 %v329, %v645
        %v668 = vmul.f32 %v330, %v650
        %v669 = vmul.f32 %v331, %v655
        %v670 = vmul.f32 %v332, %v660
        %671 = vadd.xlane.f32.xlu0 %v663
        %v672 = vpop.xlane.xlu0 %671
        %673 = vadd.xlane.f32.xlu0 %v664
        %v674 = vpop.xlane.xlu0 %673
        %675 = vadd.xlane.f32.xlu0 %v665
        %v676 = vpop.xlane.xlu0 %675
        %677 = vadd.xlane.f32.xlu0 %v666
        %v678 = vpop.xlane.xlu0 %677
        %679 = vadd.xlane.f32.xlu0 %v667
        %v680 = vpop.xlane.xlu0 %679
        %681 = vadd.xlane.f32.xlu0 %v668
        %v682 = vpop.xlane.xlu0 %681
        %683 = vadd.xlane.f32.xlu0 %v669
        %v684 = vpop.xlane.xlu0 %683
        %685 = vadd.xlane.f32.xlu0 %v670
        %v686 = vpop.xlane.xlu0 %685
        %v687 = vmul.f32 %v672, 0.5
        %v688 = vmul.f32 %v674, 0.5
        %v689 = vmul.f32 %v676, 0.5
        %v690 = vmul.f32 %v678, 0.5
        %v691 = vmul.f32 %v680, 0.5
        %v692 = vmul.f32 %v682, 0.5
        %v693 = vmul.f32 %v684, 0.5
        %v694 = vmul.f32 %v686, 0.5
        %v695 = vmul.f32 %v341, %v341
        %v696 = vmul.f32 %v342, %v342
        %v697 = vmul.f32 %v343, %v343
        %v698 = vmul.f32 %v344, %v344
        %v699 = vmul.f32 %v345, %v345
        %v700 = vmul.f32 %v346, %v346
        %v701 = vmul.f32 %v347, %v347
        %v702 = vmul.f32 %v348, %v348
        %703 = vadd.xlane.f32.xlu0 %v695
        %v704 = vpop.xlane.xlu0 %703
        %705 = vadd.xlane.f32.xlu0 %v696
        %v706 = vpop.xlane.xlu0 %705
        %707 = vadd.xlane.f32.xlu0 %v697
        %v708 = vpop.xlane.xlu0 %707
        %709 = vadd.xlane.f32.xlu0 %v698
        %v710 = vpop.xlane.xlu0 %709
        %711 = vadd.xlane.f32.xlu0 %v699
        %v712 = vpop.xlane.xlu0 %711
        %713 = vadd.xlane.f32.xlu0 %v700
        %v714 = vpop.xlane.xlu0 %713
        %715 = vadd.xlane.f32.xlu0 %v701
        %v716 = vpop.xlane.xlu0 %715
        %717 = vadd.xlane.f32.xlu0 %v702
        %v718 = vpop.xlane.xlu0 %717
        %v719 = vmul.f32 %v704, 0.5
        %v720 = vmul.f32 %v706, 0.5
        %v721 = vmul.f32 %v708, 0.5
        %v722 = vmul.f32 %v710, 0.5
        %v723 = vmul.f32 %v712, 0.5
        %v724 = vmul.f32 %v714, 0.5
        %v725 = vmul.f32 %v716, 0.5
        %v726 = vmul.f32 %v718, 0.5
        %v727 = vmul.f32 %v625, 0.01
        %v728 = vmul.f32 %v630, 0.01
        %v729 = vmul.f32 %v635, 0.01
        %v730 = vmul.f32 %v640, 0.01
        %v731 = vmul.f32 %v645, 0.01
        %v732 = vmul.f32 %v650, 0.01
        %v733 = vmul.f32 %v655, 0.01
        %v734 = vmul.f32 %v660, 0.01
        %v735 = vmul.f32 %v727, 0.5
        %v736 = vmul.f32 %v728, 0.5
        %v737 = vmul.f32 %v729, 0.5
        %v738 = vmul.f32 %v730, 0.5
        %v739 = vmul.f32 %v731, 0.5
        %v740 = vmul.f32 %v732, 0.5
        %v741 = vmul.f32 %v733, 0.5
        %v742 = vmul.f32 %v734, 0.5
        %v743 = vsub.f32 %v341, %v735
        %v744 = vsub.f32 %v342, %v736
        %v745 = vsub.f32 %v343, %v737
        %v746 = vsub.f32 %v344, %v738
        %v747 = vsub.f32 %v345, %v739
        %v748 = vsub.f32 %v346, %v740
        %v749 = vsub.f32 %v347, %v741
        %v750 = vsub.f32 %v348, %v742
        %v751 = vmul.f32 %v743, 0.01
        %v752 = vmul.f32 %v744, 0.01
        %v753 = vmul.f32 %v745, 0.01
        %v754 = vmul.f32 %v746, 0.01
        %v755 = vmul.f32 %v747, 0.01
        %v756 = vmul.f32 %v748, 0.01
        %v757 = vmul.f32 %v749, 0.01
        %v758 = vmul.f32 %v750, 0.01
        %v759 = vsub.f32 %v325, %v751
        %v760 = vsub.f32 %v326, %v752
        %v761 = vsub.f32 %v327, %v753
        %v762 = vsub.f32 %v328, %v754
        %v763 = vsub.f32 %v329, %v755
        %v764 = vsub.f32 %v330, %v756
        %v765 = vsub.f32 %v331, %v757
        %v766 = vsub.f32 %v332, %v758
        %767 = vmatprep.subr.mxu0 0.0
        %768 = vmatpush1.msra.mxu0 %v301
        %769 = vmatprep.subr.mxu0 0.0
        %770 = vmatpush1.msra.mxu0 %v302
        %771 = vmatprep.subr.mxu0 0.0
        %772 = vmatpush1.msra.mxu0 %v303
        %773 = vmatprep.subr.mxu0 0.0
        %774 = vmatpush1.msra.mxu0 %v304
        %775 = vmatprep.subr.mxu0 0.0
        %776 = vmatpush1.msra.mxu0 %v305
        %777 = vmatprep.subr.mxu0 0.0
        %778 = vmatpush1.msra.mxu0 %v306
        %779 = vmatprep.subr.mxu0 0.0
        %780 = vmatpush1.msra.mxu0 %v307
        %781 = vmatprep.subr.mxu0 0.0
        %782 = vmatpush1.msra.mxu0 %v308
        %783 = vmatprep.subr.mxu0 0.0
        %784 = vmatpush1.msra.mxu0 %v309
        %785 = vmatprep.subr.mxu0 0.0
        %786 = vmatpush1.msra.mxu0 %v310
        %787 = vmatprep.subr.mxu0 0.0
        %788 = vmatpush1.msra.mxu0 %v311
        %789 = vmatprep.subr.mxu0 0.0
        %790 = vmatpush1.msra.mxu0 %v312
        %791 = vmatprep.subr.mxu0 0.0
        %792 = vmatpush1.msra.mxu0 %v313
        %793 = vmatprep.subr.mxu0 0.0
        %794 = vmatpush1.msra.mxu0 %v314
        %795 = vmatprep.subr.mxu0 0.0
        %796 = vmatpush1.msra.mxu0 %v315
        %797 = vmatprep.subr.mxu0 0.0
        %798 = vmatpush1.msra.mxu0 %v316
        %799 = vmatprep.subr.mxu0 0.0
        %800 = vmatpush1.msra.mxu0 0.0
        %801 = vmatprep.subr.mxu0 0.0
        %802 = vmatpush1.msra.mxu0 0.0
        %803 = vmatprep.subr.mxu0 0.0
        %804 = vmatpush1.msra.mxu0 0.0
        %805 = vmatprep.subr.mxu0 0.0
        %806 = vmatpush1.msra.mxu0 0.0
        %807 = vmatprep.subr.mxu0 0.0
        %808 = vmatpush1.msra.mxu0 0.0
        %809 = vmatprep.subr.mxu0 0.0
        %810 = vmatpush1.msra.mxu0 0.0
        %811 = vmatprep.subr.mxu0 0.0
        %812 = vmatpush1.msra.mxu0 0.0
        %813 = vmatprep.subr.mxu0 0.0
        %814 = vmatpush1.msra.mxu0 0.0
        %815 = vmatprep.subr.mxu0 0.0
        %816 = vmatpush1.msra.mxu0 0.0
        %817 = vmatprep.subr.mxu0 0.0
        %818 = vmatpush1.msra.mxu0 0.0
        %819 = vmatprep.subr.mxu0 0.0
        %820 = vmatpush1.msra.mxu0 0.0
        %821 = vmatprep.subr.mxu0 0.0
        %822 = vmatpush1.msra.mxu0 0.0
        %823 = vmatprep.subr.mxu0 0.0
        %824 = vmatpush1.msra.mxu0 0.0
        %825 = vmatprep.subr.mxu0 0.0
        %826 = vmatpush1.msra.mxu0 0.0
        %827 = vmatprep.subr.mxu0 0.0
        %828 = vmatpush1.msra.mxu0 0.0
        %829 = vmatprep.subr.mxu0 0.0
        %830 = vmatpush1.msra.mxu0 0.0
        %831 = vmatprep.mubr.f32.mxu0 0.0
        %832 = vmatmul.mubr.f32.gmra.mrb[0].mxu0 %v550
        %v833 = vpop.f32.mrb[0].mxu0
        %v834 = vadd.f32 0.0, %v833
        %v835 = vpop.f32.mrb[0].mxu0
        %836 = vmatprep.mubr.f32.mxu0 0.0
        %837 = vmatmul.mubr.f32.gmra.mrb[0].mxu0 %v551
        %v838 = vpop.f32.mrb[0].mxu0
        %v839 = vadd.f32 0.0, %v838
        %v840 = vpop.f32.mrb[0].mxu0
        %841 = vmatprep.mubr.f32.mxu0 0.0
        %842 = vmatmul.mubr.f32.gmra.mrb[0].mxu0 %v552
        %v843 = vpop.f32.mrb[0].mxu0
        %v844 = vadd.f32 0.0, %v843
        %v845 = vpop.f32.mrb[0].mxu0
        %846 = vmatprep.mubr.f32.mxu0 0.0
        %847 = vmatmul.mubr.f32.gmra.mrb[0].mxu0 %v553
        %v848 = vpop.f32.mrb[0].mxu0
        %v849 = vadd.f32 0.0, %v848
        %v850 = vpop.f32.mrb[0].mxu0
        %851 = vmatprep.mubr.f32.mxu0 0.0
        %852 = vmatmul.mubr.f32.gmra.mrb[0].mxu0 %v554
        %v853 = vpop.f32.mrb[0].mxu0
        %v854 = vadd.f32 0.0, %v853
        %v855 = vpop.f32.mrb[0].mxu0
        %856 = vmatprep.mubr.f32.mxu0 0.0
        %857 = vmatmul.mubr.f32.gmra.mrb[0].mxu0 %v555
        %v858 = vpop.f32.mrb[0].mxu0
        %v859 = vadd.f32 0.0, %v858
        %v860 = vpop.f32.mrb[0].mxu0
        %861 = vmatprep.mubr.f32.mxu0 0.0
        %862 = vmatmul.mubr.f32.gmra.mrb[0].mxu0 %v556
        %v863 = vpop.f32.mrb[0].mxu0
        %v864 = vadd.f32 0.0, %v863
        %v865 = vpop.f32.mrb[0].mxu0
        %866 = vmatprep.mubr.f32.mxu0 0.0
        %867 = vmatmul.mubr.f32.gmra.mrb[0].mxu0 %v557
        %v868 = vpop.f32.mrb[0].mxu0
        %v869 = vadd.f32 0.0, %v868
        %v870 = vpop.f32.mrb[0].mxu0
        %871 = vdwg.mxu0
        %872 = vmatprep.subr.mxu0 0.0
        %873 = vmatpush1.msra.mxu0 %v301
        %874 = vmatprep.subr.mxu0 0.0
        %875 = vmatpush1.msra.mxu0 %v302
        %876 = vmatprep.subr.mxu0 0.0
        %877 = vmatpush1.msra.mxu0 %v303
        %878 = vmatprep.subr.mxu0 0.0
        %879 = vmatpush1.msra.mxu0 %v304
        %880 = vmatprep.subr.mxu0 0.0
        %881 = vmatpush1.msra.mxu0 %v305
        %882 = vmatprep.subr.mxu0 0.0
        %883 = vmatpush1.msra.mxu0 %v306
        %884 = vmatprep.subr.mxu0 0.0
        %885 = vmatpush1.msra.mxu0 %v307
        %886 = vmatprep.subr.mxu0 0.0
        %887 = vmatpush1.msra.mxu0 %v308
        %888 = vmatprep.subr.mxu0 0.0
        %889 = vmatpush1.msra.mxu0 %v309
        %890 = vmatprep.subr.mxu0 0.0
        %891 = vmatpush1.msra.mxu0 %v310
        %892 = vmatprep.subr.mxu0 0.0
        %893 = vmatpush1.msra.mxu0 %v311
        %894 = vmatprep.subr.mxu0 0.0
        %895 = vmatpush1.msra.mxu0 %v312
        %896 = vmatprep.subr.mxu0 0.0
        %897 = vmatpush1.msra.mxu0 %v313
        %898 = vmatprep.subr.mxu0 0.0
        %899 = vmatpush1.msra.mxu0 %v314
        %900 = vmatprep.subr.mxu0 0.0
        %901 = vmatpush1.msra.mxu0 %v315
        %902 = vmatprep.subr.mxu0 0.0
        %903 = vmatpush1.msra.mxu0 %v316
        %904 = vmatprep.subr.mxu0 0.0
        %905 = vmatpush1.msra.mxu0 0.0
        %906 = vmatprep.subr.mxu0 0.0
        %907 = vmatpush1.msra.mxu0 0.0
        %908 = vmatprep.subr.mxu0 0.0
        %909 = vmatpush1.msra.mxu0 0.0
        %910 = vmatprep.subr.mxu0 0.0
        %911 = vmatpush1.msra.mxu0 0.0
        %912 = vmatprep.subr.mxu0 0.0
        %913 = vmatpush1.msra.mxu0 0.0
        %914 = vmatprep.subr.mxu0 0.0
        %915 = vmatpush1.msra.mxu0 0.0
        %916 = vmatprep.subr.mxu0 0.0
        %917 = vmatpush1.msra.mxu0 0.0
        %918 = vmatprep.subr.mxu0 0.0
        %919 = vmatpush1.msra.mxu0 0.0
        %920 = vmatprep.subr.mxu0 0.0
        %921 = vmatpush1.msra.mxu0 0.0
        %922 = vmatprep.subr.mxu0 0.0
        %923 = vmatpush1.msra.mxu0 0.0
        %924 = vmatprep.subr.mxu0 0.0
        %925 = vmatpush1.msra.mxu0 0.0
        %926 = vmatprep.subr.mxu0 0.0
        %927 = vmatpush1.msra.mxu0 0.0
        %928 = vmatprep.subr.mxu0 0.0
        %929 = vmatpush1.msra.mxu0 0.0
        %930 = vmatprep.subr.mxu0 0.0
        %931 = vmatpush1.msra.mxu0 0.0
        %932 = vmatprep.subr.mxu0 0.0
        %933 = vmatpush1.msra.mxu0 0.0
        %934 = vmatprep.subr.mxu0 0.0
        %935 = vmatpush1.msra.mxu0 0.0
        %936 = vmatprep.mubr.f32.mxu0 0.0
        %937 = vmatmul.mubr.f32.gmra.mrb[0].mxu0 %v759
        %v938 = vpop.f32.mrb[0].mxu0
        %v939 = vadd.f32 0.0, %v938
        %v940 = vpop.f32.mrb[0].mxu0
        %941 = vmatprep.mubr.f32.mxu0 0.0
        %942 = vmatmul.mubr.f32.gmra.mrb[0].mxu0 %v760
        %v943 = vpop.f32.mrb[0].mxu0
        %v944 = vadd.f32 0.0, %v943
        %v945 = vpop.f32.mrb[0].mxu0
        %946 = vmatprep.mubr.f32.mxu0 0.0
        %947 = vmatmul.mubr.f32.gmra.mrb[0].mxu0 %v761
        %v948 = vpop.f32.mrb[0].mxu0
        %v949 = vadd.f32 0.0, %v948
        %v950 = vpop.f32.mrb[0].mxu0
        %951 = vmatprep.mubr.f32.mxu0 0.0
        %952 = vmatmul.mubr.f32.gmra.mrb[0].mxu0 %v762
        %v953 = vpop.f32.mrb[0].mxu0
        %v954 = vadd.f32 0.0, %v953
        %v955 = vpop.f32.mrb[0].mxu0
        %956 = vmatprep.mubr.f32.mxu0 0.0
        %957 = vmatmul.mubr.f32.gmra.mrb[0].mxu0 %v763
        %v958 = vpop.f32.mrb[0].mxu0
        %v959 = vadd.f32 0.0, %v958
        %v960 = vpop.f32.mrb[0].mxu0
        %961 = vmatprep.mubr.f32.mxu0 0.0
        %962 = vmatmul.mubr.f32.gmra.mrb[0].mxu0 %v764
        %v963 = vpop.f32.mrb[0].mxu0
        %v964 = vadd.f32 0.0, %v963
        %v965 = vpop.f32.mrb[0].mxu0
        %966 = vmatprep.mubr.f32.mxu0 0.0
        %967 = vmatmul.mubr.f32.gmra.mrb[0].mxu0 %v765
        %v968 = vpop.f32.mrb[0].mxu0
        %v969 = vadd.f32 0.0, %v968
        %v970 = vpop.f32.mrb[0].mxu0
        %971 = vmatprep.mubr.f32.mxu0 0.0
        %972 = vmatmul.mubr.f32.gmra.mrb[0].mxu0 %v766
        %v973 = vpop.f32.mrb[0].mxu0
        %v974 = vadd.f32 0.0, %v973
        %v975 = vpop.f32.mrb[0].mxu0
        %976 = vdwg.mxu0
        %v977 = vmul.f32 %v834, 0.01
        %v978 = vmul.f32 %v839, 0.01
        %v979 = vmul.f32 %v844, 0.01
        %v980 = vmul.f32 %v849, 0.01
        %v981 = vmul.f32 %v854, 0.01
        %v982 = vmul.f32 %v859, 0.01
        %v983 = vmul.f32 %v864, 0.01
        %v984 = vmul.f32 %v869, 0.01
        %v985 = vsub.f32 %v534, %v977
        %v986 = vsub.f32 %v535, %v978
        %v987 = vsub.f32 %v536, %v979
        %v988 = vsub.f32 %v537, %v980
        %v989 = vsub.f32 %v538, %v981
        %v990 = vsub.f32 %v539, %v982
        %v991 = vsub.f32 %v540, %v983
        %v992 = vsub.f32 %v541, %v984
        %v993 = vmul.f32 %v939, 0.01
        %v994 = vmul.f32 %v944, 0.01
        %v995 = vmul.f32 %v949, 0.01
        %v996 = vmul.f32 %v954, 0.01
        %v997 = vmul.f32 %v959, 0.01
        %v998 = vmul.f32 %v964, 0.01
        %v999 = vmul.f32 %v969, 0.01
        %v1000 = vmul.f32 %v974, 0.01
        %v1001 = vsub.f32 %v743, %v993
        %v1002 = vsub.f32 %v744, %v994
        %v1003 = vsub.f32 %v745, %v995
        %v1004 = vsub.f32 %v746, %v996
        %v1005 = vsub.f32 %v747, %v997
        %v1006 = vsub.f32 %v748, %v998
        %v1007 = vsub.f32 %v749, %v999
        %v1008 = vsub.f32 %v750, %v1000
        %v1009 = vmul.f32 %v985, 0.01
        %v1010 = vmul.f32 %v986, 0.01
        %v1011 = vmul.f32 %v987, 0.01
        %v1012 = vmul.f32 %v988, 0.01
        %v1013 = vmul.f32 %v989, 0.01
        %v1014 = vmul.f32 %v990, 0.01
        %v1015 = vmul.f32 %v991, 0.01
        %v1016 = vmul.f32 %v992, 0.01
        %v1017 = vsub.f32 %v550, %v1009
        %v1018 = vsub.f32 %v551, %v1010
        %v1019 = vsub.f32 %v552, %v1011
        %v1020 = vsub.f32 %v553, %v1012
        %v1021 = vsub.f32 %v554, %v1013
        %v1022 = vsub.f32 %v555, %v1014
        %v1023 = vsub.f32 %v556, %v1015
        %v1024 = vsub.f32 %v557, %v1016
        %v1025 = vmul.f32 %v1001, 0.01
        %v1026 = vmul.f32 %v1002, 0.01
        %v1027 = vmul.f32 %v1003, 0.01
        %v1028 = vmul.f32 %v1004, 0.01
        %v1029 = vmul.f32 %v1005, 0.01
        %v1030 = vmul.f32 %v1006, 0.01
        %v1031 = vmul.f32 %v1007, 0.01
        %v1032 = vmul.f32 %v1008, 0.01
        %v1033 = vsub.f32 %v759, %v1025
        %v1034 = vsub.f32 %v760, %v1026
        %v1035 = vsub.f32 %v761, %v1027
        %v1036 = vsub.f32 %v762, %v1028
        %v1037 = vsub.f32 %v763, %v1029
        %v1038 = vsub.f32 %v764, %v1030
        %v1039 = vsub.f32 %v765, %v1031
        %v1040 = vsub.f32 %v766, %v1032
        %1041 = vmatprep.subr.mxu0 0.0
        %1042 = vmatpush1.msra.mxu0 %v301
        %1043 = vmatprep.subr.mxu0 0.0
        %1044 = vmatpush1.msra.mxu0 %v302
        %1045 = vmatprep.subr.mxu0 0.0
        %1046 = vmatpush1.msra.mxu0 %v303
        %1047 = vmatprep.subr.mxu0 0.0
        %1048 = vmatpush1.msra.mxu0 %v304
        %1049 = vmatprep.subr.mxu0 0.0
        %1050 = vmatpush1.msra.mxu0 %v305
        %1051 = vmatprep.subr.mxu0 0.0
        %1052 = vmatpush1.msra.mxu0 %v306
        %1053 = vmatprep.subr.mxu0 0.0
        %1054 = vmatpush1.msra.mxu0 %v307
        %1055 = vmatprep.subr.mxu0 0.0
        %1056 = vmatpush1.msra.mxu0 %v308
        %1057 = vmatprep.subr.mxu0 0.0
        %1058 = vmatpush1.msra.mxu0 %v309
        %1059 = vmatprep.subr.mxu0 0.0
        %1060 = vmatpush1.msra.mxu0 %v310
        %1061 = vmatprep.subr.mxu0 0.0
        %1062 = vmatpush1.msra.mxu0 %v311
        %1063 = vmatprep.subr.mxu0 0.0
        %1064 = vmatpush1.msra.mxu0 %v312
        %1065 = vmatprep.subr.mxu0 0.0
        %1066 = vmatpush1.msra.mxu0 %v313
        %1067 = vmatprep.subr.mxu0 0.0
        %1068 = vmatpush1.msra.mxu0 %v314
        %1069 = vmatprep.subr.mxu0 0.0
        %1070 = vmatpush1.msra.mxu0 %v315
        %1071 = vmatprep.subr.mxu0 0.0
        %1072 = vmatpush1.msra.mxu0 %v316
        %1073 = vmatprep.subr.mxu0 0.0
        %1074 = vmatpush1.msra.mxu0 0.0
        %1075 = vmatprep.subr.mxu0 0.0
        %1076 = vmatpush1.msra.mxu0 0.0
        %1077 = vmatprep.subr.mxu0 0.0
        %1078 = vmatpush1.msra.mxu0 0.0
        %1079 = vmatprep.subr.mxu0 0.0
        %1080 = vmatpush1.msra.mxu0 0.0
        %1081 = vmatprep.subr.mxu0 0.0
        %1082 = vmatpush1.msra.mxu0 0.0
        %1083 = vmatprep.subr.mxu0 0.0
        %1084 = vmatpush1.msra.mxu0 0.0
        %1085 = vmatprep.subr.mxu0 0.0
        %1086 = vmatpush1.msra.mxu0 0.0
        %1087 = vmatprep.subr.mxu0 0.0
        %1088 = vmatpush1.msra.mxu0 0.0
        %1089 = vmatprep.subr.mxu0 0.0
        %1090 = vmatpush1.msra.mxu0 0.0
        %1091 = vmatprep.subr.mxu0 0.0
        %1092 = vmatpush1.msra.mxu0 0.0
        %1093 = vmatprep.subr.mxu0 0.0
        %1094 = vmatpush1.msra.mxu0 0.0
        %1095 = vmatprep.subr.mxu0 0.0
        %1096 = vmatpush1.msra.mxu0 0.0
        %1097 = vmatprep.subr.mxu0 0.0
        %1098 = vmatpush1.msra.mxu0 0.0
        %1099 = vmatprep.subr.mxu0 0.0
        %1100 = vmatpush1.msra.mxu0 0.0
        %1101 = vmatprep.subr.mxu0 0.0
        %1102 = vmatpush1.msra.mxu0 0.0
        %1103 = vmatprep.subr.mxu0 0.0
        %1104 = vmatpush1.msra.mxu0 0.0
        %1105 = vmatprep.mubr.f32.mxu0 0.0
        %1106 = vmatmul.mubr.f32.gmra.mrb[0].mxu0 %v1017
        %v1107 = vpop.f32.mrb[0].mxu0
        %v1108 = vadd.f32 0.0, %v1107
        %v1109 = vpop.f32.mrb[0].mxu0
        %1110 = vmatprep.mubr.f32.mxu0 0.0
        %1111 = vmatmul.mubr.f32.gmra.mrb[0].mxu0 %v1018
        %v1112 = vpop.f32.mrb[0].mxu0
        %v1113 = vadd.f32 0.0, %v1112
        %v1114 = vpop.f32.mrb[0].mxu0
        %1115 = vmatprep.mubr.f32.mxu0 0.0
        %1116 = vmatmul.mubr.f32.gmra.mrb[0].mxu0 %v1019
        %v1117 = vpop.f32.mrb[0].mxu0
        %v1118 = vadd.f32 0.0, %v1117
        %v1119 = vpop.f32.mrb[0].mxu0
        %1120 = vmatprep.mubr.f32.mxu0 0.0
        %1121 = vmatmul.mubr.f32.gmra.mrb[0].mxu0 %v1020
        %v1122 = vpop.f32.mrb[0].mxu0
        %v1123 = vadd.f32 0.0, %v1122
        %v1124 = vpop.f32.mrb[0].mxu0
        %1125 = vmatprep.mubr.f32.mxu0 0.0
        %1126 = vmatmul.mubr.f32.gmra.mrb[0].mxu0 %v1021
        %v1127 = vpop.f32.mrb[0].mxu0
        %v1128 = vadd.f32 0.0, %v1127
        %v1129 = vpop.f32.mrb[0].mxu0
        %1130 = vmatprep.mubr.f32.mxu0 0.0
        %1131 = vmatmul.mubr.f32.gmra.mrb[0].mxu0 %v1022
        %v1132 = vpop.f32.mrb[0].mxu0
        %v1133 = vadd.f32 0.0, %v1132
        %v1134 = vpop.f32.mrb[0].mxu0
        %1135 = vmatprep.mubr.f32.mxu0 0.0
        %1136 = vmatmul.mubr.f32.gmra.mrb[0].mxu0 %v1023
        %v1137 = vpop.f32.mrb[0].mxu0
        %v1138 = vadd.f32 0.0, %v1137
        %v1139 = vpop.f32.mrb[0].mxu0
        %1140 = vmatprep.mubr.f32.mxu0 0.0
        %1141 = vmatmul.mubr.f32.gmra.mrb[0].mxu0 %v1024
        %v1142 = vpop.f32.mrb[0].mxu0
        %v1143 = vadd.f32 0.0, %v1142
        %v1144 = vpop.f32.mrb[0].mxu0
        %1145 = vdwg.mxu0
        %1146 = vmatprep.subr.mxu0 0.0
        %1147 = vmatpush1.msra.mxu0 %v301
        %1148 = vmatprep.subr.mxu0 0.0
        %1149 = vmatpush1.msra.mxu0 %v302
        %1150 = vmatprep.subr.mxu0 0.0
        %1151 = vmatpush1.msra.mxu0 %v303
        %1152 = vmatprep.subr.mxu0 0.0
        %1153 = vmatpush1.msra.mxu0 %v304
        %1154 = vmatprep.subr.mxu0 0.0
        %1155 = vmatpush1.msra.mxu0 %v305
        %1156 = vmatprep.subr.mxu0 0.0
        %1157 = vmatpush1.msra.mxu0 %v306
        %1158 = vmatprep.subr.mxu0 0.0
        %1159 = vmatpush1.msra.mxu0 %v307
        %1160 = vmatprep.subr.mxu0 0.0
        %1161 = vmatpush1.msra.mxu0 %v308
        %1162 = vmatprep.subr.mxu0 0.0
        %1163 = vmatpush1.msra.mxu0 %v309
        %1164 = vmatprep.subr.mxu0 0.0
        %1165 = vmatpush1.msra.mxu0 %v310
        %1166 = vmatprep.subr.mxu0 0.0
        %1167 = vmatpush1.msra.mxu0 %v311
        %1168 = vmatprep.subr.mxu0 0.0
        %1169 = vmatpush1.msra.mxu0 %v312
        %1170 = vmatprep.subr.mxu0 0.0
        %1171 = vmatpush1.msra.mxu0 %v313
        %1172 = vmatprep.subr.mxu0 0.0
        %1173 = vmatpush1.msra.mxu0 %v314
        %1174 = vmatprep.subr.mxu0 0.0
        %1175 = vmatpush1.msra.mxu0 %v315
        %1176 = vmatprep.subr.mxu0 0.0
        %1177 = vmatpush1.msra.mxu0 %v316
        %1178 = vmatprep.subr.mxu0 0.0
        %1179 = vmatpush1.msra.mxu0 0.0
        %1180 = vmatprep.subr.mxu0 0.0
        %1181 = vmatpush1.msra.mxu0 0.0
        %1182 = vmatprep.subr.mxu0 0.0
        %1183 = vmatpush1.msra.mxu0 0.0
        %1184 = vmatprep.subr.mxu0 0.0
        %1185 = vmatpush1.msra.mxu0 0.0
        %1186 = vmatprep.subr.mxu0 0.0
        %1187 = vmatpush1.msra.mxu0 0.0
        %1188 = vmatprep.subr.mxu0 0.0
        %1189 = vmatpush1.msra.mxu0 0.0
        %1190 = vmatprep.subr.mxu0 0.0
        %1191 = vmatpush1.msra.mxu0 0.0
        %1192 = vmatprep.subr.mxu0 0.0
        %1193 = vmatpush1.msra.mxu0 0.0
        %1194 = vmatprep.subr.mxu0 0.0
        %1195 = vmatpush1.msra.mxu0 0.0
        %1196 = vmatprep.subr.mxu0 0.0
        %1197 = vmatpush1.msra.mxu0 0.0
        %1198 = vmatprep.subr.mxu0 0.0
        %1199 = vmatpush1.msra.mxu0 0.0
        %1200 = vmatprep.subr.mxu0 0.0
        %1201 = vmatpush1.msra.mxu0 0.0
        %1202 = vmatprep.subr.mxu0 0.0
        %1203 = vmatpush1.msra.mxu0 0.0
        %1204 = vmatprep.subr.mxu0 0.0
        %1205 = vmatpush1.msra.mxu0 0.0
        %1206 = vmatprep.subr.mxu0 0.0
        %1207 = vmatpush1.msra.mxu0 0.0
        %1208 = vmatprep.subr.mxu0 0.0
        %1209 = vmatpush1.msra.mxu0 0.0
        %1210 = vmatprep.mubr.f32.mxu0 0.0
        %1211 = vmatmul.mubr.f32.gmra.mrb[0].mxu0 %v1033
        %v1212 = vpop.f32.mrb[0].mxu0
        %v1213 = vadd.f32 0.0, %v1212
        %v1214 = vpop.f32.mrb[0].mxu0
        %1215 = vmatprep.mubr.f32.mxu0 0.0
        %1216 = vmatmul.mubr.f32.gmra.mrb[0].mxu0 %v1034
        %v1217 = vpop.f32.mrb[0].mxu0
        %v1218 = vadd.f32 0.0, %v1217
        %v1219 = vpop.f32.mrb[0].mxu0
        %1220 = vmatprep.mubr.f32.mxu0 0.0
        %1221 = vmatmul.mubr.f32.gmra.mrb[0].mxu0 %v1035
        %v1222 = vpop.f32.mrb[0].mxu0
        %v1223 = vadd.f32 0.0, %v1222
        %v1224 = vpop.f32.mrb[0].mxu0
        %1225 = vmatprep.mubr.f32.mxu0 0.0
        %1226 = vmatmul.mubr.f32.gmra.mrb[0].mxu0 %v1036
        %v1227 = vpop.f32.mrb[0].mxu0
        %v1228 = vadd.f32 0.0, %v1227
        %v1229 = vpop.f32.mrb[0].mxu0
        %1230 = vmatprep.mubr.f32.mxu0 0.0
        %1231 = vmatmul.mubr.f32.gmra.mrb[0].mxu0 %v1037
        %v1232 = vpop.f32.mrb[0].mxu0
        %v1233 = vadd.f32 0.0, %v1232
        %v1234 = vpop.f32.mrb[0].mxu0
        %1235 = vmatprep.mubr.f32.mxu0 0.0
        %1236 = vmatmul.mubr.f32.gmra.mrb[0].mxu0 %v1038
        %v1237 = vpop.f32.mrb[0].mxu0
        %v1238 = vadd.f32 0.0, %v1237
        %v1239 = vpop.f32.mrb[0].mxu0
        %1240 = vmatprep.mubr.f32.mxu0 0.0
        %1241 = vmatmul.mubr.f32.gmra.mrb[0].mxu0 %v1039
        %v1242 = vpop.f32.mrb[0].mxu0
        %v1243 = vadd.f32 0.0, %v1242
        %v1244 = vpop.f32.mrb[0].mxu0
        %1245 = vmatprep.mubr.f32.mxu0 0.0
        %1246 = vmatmul.mubr.f32.gmra.mrb[0].mxu0 %v1040
        %v1247 = vpop.f32.mrb[0].mxu0
        %v1248 = vadd.f32 0.0, %v1247
        %v1249 = vpop.f32.mrb[0].mxu0
        %1250 = vdwg.mxu0
        %v1251 = vmul.f32 %v1108, 0.01
        %v1252 = vmul.f32 %v1113, 0.01
        %v1253 = vmul.f32 %v1118, 0.01
        %v1254 = vmul.f32 %v1123, 0.01
        %v1255 = vmul.f32 %v1128, 0.01
        %v1256 = vmul.f32 %v1133, 0.01
        %v1257 = vmul.f32 %v1138, 0.01
        %v1258 = vmul.f32 %v1143, 0.01
        %v1259 = vsub.f32 %v985, %v1251
        %v1260 = vsub.f32 %v986, %v1252
        %v1261 = vsub.f32 %v987, %v1253
        %v1262 = vsub.f32 %v988, %v1254
        %v1263 = vsub.f32 %v989, %v1255
        %v1264 = vsub.f32 %v990, %v1256
        %v1265 = vsub.f32 %v991, %v1257
        %v1266 = vsub.f32 %v992, %v1258
        %v1267 = vmul.f32 %v1213, 0.01
        %v1268 = vmul.f32 %v1218, 0.01
        %v1269 = vmul.f32 %v1223, 0.01
        %v1270 = vmul.f32 %v1228, 0.01
        %v1271 = vmul.f32 %v1233, 0.01
        %v1272 = vmul.f32 %v1238, 0.01
        %v1273 = vmul.f32 %v1243, 0.01
        %v1274 = vmul.f32 %v1248, 0.01
        %v1275 = vsub.f32 %v1001, %v1267
        %v1276 = vsub.f32 %v1002, %v1268
        %v1277 = vsub.f32 %v1003, %v1269
        %v1278 = vsub.f32 %v1004, %v1270
        %v1279 = vsub.f32 %v1005, %v1271
        %v1280 = vsub.f32 %v1006, %v1272
        %v1281 = vsub.f32 %v1007, %v1273
        %v1282 = vsub.f32 %v1008, %v1274
        %v1283 = vmul.f32 %v1259, 0.01
        %v1284 = vmul.f32 %v1260, 0.01
        %v1285 = vmul.f32 %v1261, 0.01
        %v1286 = vmul.f32 %v1262, 0.01
        %v1287 = vmul.f32 %v1263, 0.01
        %v1288 = vmul.f32 %v1264, 0.01
        %v1289 = vmul.f32 %v1265, 0.01
        %v1290 = vmul.f32 %v1266, 0.01
        %v1291 = vsub.f32 %v1017, %v1283
        %v1292 = vsub.f32 %v1018, %v1284
        %v1293 = vsub.f32 %v1019, %v1285
        %v1294 = vsub.f32 %v1020, %v1286
        %v1295 = vsub.f32 %v1021, %v1287
        %v1296 = vsub.f32 %v1022, %v1288
        %v1297 = vsub.f32 %v1023, %v1289
        %v1298 = vsub.f32 %v1024, %v1290
        %v1299 = vmul.f32 %v1275, 0.01
        %v1300 = vmul.f32 %v1276, 0.01
        %v1301 = vmul.f32 %v1277, 0.01
        %v1302 = vmul.f32 %v1278, 0.01
        %v1303 = vmul.f32 %v1279, 0.01
        %v1304 = vmul.f32 %v1280, 0.01
        %v1305 = vmul.f32 %v1281, 0.01
        %v1306 = vmul.f32 %v1282, 0.01
        %v1307 = vsub.f32 %v1033, %v1299
        %v1308 = vsub.f32 %v1034, %v1300
        %v1309 = vsub.f32 %v1035, %v1301
        %v1310 = vsub.f32 %v1036, %v1302
        %v1311 = vsub.f32 %v1037, %v1303
        %v1312 = vsub.f32 %v1038, %v1304
        %v1313 = vsub.f32 %v1039, %v1305
        %v1314 = vsub.f32 %v1040, %v1306
        %1315 = vmatprep.subr.mxu0 0.0
        %1316 = vmatpush1.msra.mxu0 %v301
        %1317 = vmatprep.subr.mxu0 0.0
        %1318 = vmatpush1.msra.mxu0 %v302
        %1319 = vmatprep.subr.mxu0 0.0
        %1320 = vmatpush1.msra.mxu0 %v303
        %1321 = vmatprep.subr.mxu0 0.0
        %1322 = vmatpush1.msra.mxu0 %v304
        %1323 = vmatprep.subr.mxu0 0.0
        %1324 = vmatpush1.msra.mxu0 %v305
        %1325 = vmatprep.subr.mxu0 0.0
        %1326 = vmatpush1.msra.mxu0 %v306
        %1327 = vmatprep.subr.mxu0 0.0
        %1328 = vmatpush1.msra.mxu0 %v307
        %1329 = vmatprep.subr.mxu0 0.0
        %1330 = vmatpush1.msra.mxu0 %v308
        %1331 = vmatprep.subr.mxu0 0.0
        %1332 = vmatpush1.msra.mxu0 %v309
        %1333 = vmatprep.subr.mxu0 0.0
        %1334 = vmatpush1.msra.mxu0 %v310
        %1335 = vmatprep.subr.mxu0 0.0
        %1336 = vmatpush1.msra.mxu0 %v311
        %1337 = vmatprep.subr.mxu0 0.0
        %1338 = vmatpush1.msra.mxu0 %v312
        %1339 = vmatprep.subr.mxu0 0.0
        %1340 = vmatpush1.msra.mxu0 %v313
        %1341 = vmatprep.subr.mxu0 0.0
        %1342 = vmatpush1.msra.mxu0 %v314
        %1343 = vmatprep.subr.mxu0 0.0
        %1344 = vmatpush1.msra.mxu0 %v315
        %1345 = vmatprep.subr.mxu0 0.0
        %1346 = vmatpush1.msra.mxu0 %v316
        %1347 = vmatprep.subr.mxu0 0.0
        %1348 = vmatpush1.msra.mxu0 0.0
        %1349 = vmatprep.subr.mxu0 0.0
        %1350 = vmatpush1.msra.mxu0 0.0
        %1351 = vmatprep.subr.mxu0 0.0
        %1352 = vmatpush1.msra.mxu0 0.0
        %1353 = vmatprep.subr.mxu0 0.0
        %1354 = vmatpush1.msra.mxu0 0.0
        %1355 = vmatprep.subr.mxu0 0.0
        %1356 = vmatpush1.msra.mxu0 0.0
        %1357 = vmatprep.subr.mxu0 0.0
        %1358 = vmatpush1.msra.mxu0 0.0
        %1359 = vmatprep.subr.mxu0 0.0
        %1360 = vmatpush1.msra.mxu0 0.0
        %1361 = vmatprep.subr.mxu0 0.0
        %1362 = vmatpush1.msra.mxu0 0.0
        %1363 = vmatprep.subr.mxu0 0.0
        %1364 = vmatpush1.msra.mxu0 0.0
        %1365 = vmatprep.subr.mxu0 0.0
        %1366 = vmatpush1.msra.mxu0 0.0
        %1367 = vmatprep.subr.mxu0 0.0
        %1368 = vmatpush1.msra.mxu0 0.0
        %1369 = vmatprep.subr.mxu0 0.0
        %1370 = vmatpush1.msra.mxu0 0.0
        %1371 = vmatprep.subr.mxu0 0.0
        %1372 = vmatpush1.msra.mxu0 0.0
        %1373 = vmatprep.subr.mxu0 0.0
        %1374 = vmatpush1.msra.mxu0 0.0
        %1375 = vmatprep.subr.mxu0 0.0
        %1376 = vmatpush1.msra.mxu0 0.0
        %1377 = vmatprep.subr.mxu0 0.0
        %1378 = vmatpush1.msra.mxu0 0.0
        %1379 = vmatprep.mubr.f32.mxu0 0.0
        %1380 = vmatmul.mubr.f32.gmra.mrb[0].mxu0 %v1291
        %v1381 = vpop.f32.mrb[0].mxu0
        %v1382 = vadd.f32 0.0, %v1381
        %v1383 = vpop.f32.mrb[0].mxu0
        %1384 = vmatprep.mubr.f32.mxu0 0.0
        %1385 = vmatmul.mubr.f32.gmra.mrb[0].mxu0 %v1292
        %v1386 = vpop.f32.mrb[0].mxu0
        %v1387 = vadd.f32 0.0, %v1386
        %v1388 = vpop.f32.mrb[0].mxu0
        %1389 = vmatprep.mubr.f32.mxu0 0.0
        %1390 = vmatmul.mubr.f32.gmra.mrb[0].mxu0 %v1293
        %v1391 = vpop.f32.mrb[0].mxu0
        %v1392 = vadd.f32 0.0, %v1391
        %v1393 = vpop.f32.mrb[0].mxu0
        %1394 = vmatprep.mubr.f32.mxu0 0.0
        %1395 = vmatmul.mubr.f32.gmra.mrb[0].mxu0 %v1294
        %v1396 = vpop.f32.mrb[0].mxu0
        %v1397 = vadd.f32 0.0, %v1396
        %v1398 = vpop.f32.mrb[0].mxu0
        %1399 = vmatprep.mubr.f32.mxu0 0.0
        %1400 = vmatmul.mubr.f32.gmra.mrb[0].mxu0 %v1295
        %v1401 = vpop.f32.mrb[0].mxu0
        %v1402 = vadd.f32 0.0, %v1401
        %v1403 = vpop.f32.mrb[0].mxu0
        %1404 = vmatprep.mubr.f32.mxu0 0.0
        %1405 = vmatmul.mubr.f32.gmra.mrb[0].mxu0 %v1296
        %v1406 = vpop.f32.mrb[0].mxu0
        %v1407 = vadd.f32 0.0, %v1406
        %v1408 = vpop.f32.mrb[0].mxu0
        %1409 = vmatprep.mubr.f32.mxu0 0.0
        %1410 = vmatmul.mubr.f32.gmra.mrb[0].mxu0 %v1297
        %v1411 = vpop.f32.mrb[0].mxu0
        %v1412 = vadd.f32 0.0, %v1411
        %v1413 = vpop.f32.mrb[0].mxu0
        %1414 = vmatprep.mubr.f32.mxu0 0.0
        %1415 = vmatmul.mubr.f32.gmra.mrb[0].mxu0 %v1298
        %v1416 = vpop.f32.mrb[0].mxu0
        %v1417 = vadd.f32 0.0, %v1416
        %v1418 = vpop.f32.mrb[0].mxu0
        %1419 = vdwg.mxu0
        %1420 = vmatprep.subr.mxu0 0.0
        %1421 = vmatpush1.msra.mxu0 %v301
        %1422 = vmatprep.subr.mxu0 0.0
        %1423 = vmatpush1.msra.mxu0 %v302
        %1424 = vmatprep.subr.mxu0 0.0
        %1425 = vmatpush1.msra.mxu0 %v303
        %1426 = vmatprep.subr.mxu0 0.0
        %1427 = vmatpush1.msra.mxu0 %v304
        %1428 = vmatprep.subr.mxu0 0.0
        %1429 = vmatpush1.msra.mxu0 %v305
        %1430 = vmatprep.subr.mxu0 0.0
        %1431 = vmatpush1.msra.mxu0 %v306
        %1432 = vmatprep.subr.mxu0 0.0
        %1433 = vmatpush1.msra.mxu0 %v307
        %1434 = vmatprep.subr.mxu0 0.0
        %1435 = vmatpush1.msra.mxu0 %v308
        %1436 = vmatprep.subr.mxu0 0.0
        %1437 = vmatpush1.msra.mxu0 %v309
        %1438 = vmatprep.subr.mxu0 0.0
        %1439 = vmatpush1.msra.mxu0 %v310
        %1440 = vmatprep.subr.mxu0 0.0
        %1441 = vmatpush1.msra.mxu0 %v311
        %1442 = vmatprep.subr.mxu0 0.0
        %1443 = vmatpush1.msra.mxu0 %v312
        %1444 = vmatprep.subr.mxu0 0.0
        %1445 = vmatpush1.msra.mxu0 %v313
        %1446 = vmatprep.subr.mxu0 0.0
        %1447 = vmatpush1.msra.mxu0 %v314
        %1448 = vmatprep.subr.mxu0 0.0
        %1449 = vmatpush1.msra.mxu0 %v315
        %1450 = vmatprep.subr.mxu0 0.0
        %1451 = vmatpush1.msra.mxu0 %v316
        %1452 = vmatprep.subr.mxu0 0.0
        %1453 = vmatpush1.msra.mxu0 0.0
        %1454 = vmatprep.subr.mxu0 0.0
        %1455 = vmatpush1.msra.mxu0 0.0
        %1456 = vmatprep.subr.mxu0 0.0
        %1457 = vmatpush1.msra.mxu0 0.0
        %1458 = vmatprep.subr.mxu0 0.0
        %1459 = vmatpush1.msra.mxu0 0.0
        %1460 = vmatprep.subr.mxu0 0.0
        %1461 = vmatpush1.msra.mxu0 0.0
        %1462 = vmatprep.subr.mxu0 0.0
        %1463 = vmatpush1.msra.mxu0 0.0
        %1464 = vmatprep.subr.mxu0 0.0
        %1465 = vmatpush1.msra.mxu0 0.0
        %1466 = vmatprep.subr.mxu0 0.0
        %1467 = vmatpush1.msra.mxu0 0.0
        %1468 = vmatprep.subr.mxu0 0.0
        %1469 = vmatpush1.msra.mxu0 0.0
        %1470 = vmatprep.subr.mxu0 0.0
        %1471 = vmatpush1.msra.mxu0 0.0
        %1472 = vmatprep.subr.mxu0 0.0
        %1473 = vmatpush1.msra.mxu0 0.0
        %1474 = vmatprep.subr.mxu0 0.0
        %1475 = vmatpush1.msra.mxu0 0.0
        %1476 = vmatprep.subr.mxu0 0.0
        %1477 = vmatpush1.msra.mxu0 0.0
        %1478 = vmatprep.subr.mxu0 0.0
        %1479 = vmatpush1.msra.mxu0 0.0
        %1480 = vmatprep.subr.mxu0 0.0
        %1481 = vmatpush1.msra.mxu0 0.0
        %1482 = vmatprep.subr.mxu0 0.0
        %1483 = vmatpush1.msra.mxu0 0.0
        %1484 = vmatprep.mubr.f32.mxu0 0.0
        %1485 = vmatmul.mubr.f32.gmra.mrb[0].mxu0 %v1307
        %v1486 = vpop.f32.mrb[0].mxu0
        %v1487 = vadd.f32 0.0, %v1486
        %v1488 = vpop.f32.mrb[0].mxu0
        %1489 = vmatprep.mubr.f32.mxu0 0.0
        %1490 = vmatmul.mubr.f32.gmra.mrb[0].mxu0 %v1308
        %v1491 = vpop.f32.mrb[0].mxu0
        %v1492 = vadd.f32 0.0, %v1491
        %v1493 = vpop.f32.mrb[0].mxu0
        %1494 = vmatprep.mubr.f32.mxu0 0.0
        %1495 = vmatmul.mubr.f32.gmra.mrb[0].mxu0 %v1309
        %v1496 = vpop.f32.mrb[0].mxu0
        %v1497 = vadd.f32 0.0, %v1496
        %v1498 = vpop.f32.mrb[0].mxu0
        %1499 = vmatprep.mubr.f32.mxu0 0.0
        %1500 = vmatmul.mubr.f32.gmra.mrb[0].mxu0 %v1310
        %v1501 = vpop.f32.mrb[0].mxu0
        %v1502 = vadd.f32 0.0, %v1501
        %v1503 = vpop.f32.mrb[0].mxu0
        %1504 = vmatprep.mubr.f32.mxu0 0.0
        %1505 = vmatmul.mubr.f32.gmra.mrb[0].mxu0 %v1311
        %v1506 = vpop.f32.mrb[0].mxu0
        %v1507 = vadd.f32 0.0, %v1506
        %v1508 = vpop.f32.mrb[0].mxu0
        %1509 = vmatprep.mubr.f32.mxu0 0.0
        %1510 = vmatmul.mubr.f32.gmra.mrb[0].mxu0 %v1312
        %v1511 = vpop.f32.mrb[0].mxu0
        %v1512 = vadd.f32 0.0, %v1511
        %v1513 = vpop.f32.mrb[0].mxu0
        %1514 = vmatprep.mubr.f32.mxu0 0.0
        %1515 = vmatmul.mubr.f32.gmra.mrb[0].mxu0 %v1313
        %v1516 = vpop.f32.mrb[0].mxu0
        %v1517 = vadd.f32 0.0, %v1516
        %v1518 = vpop.f32.mrb[0].mxu0
        %1519 = vmatprep.mubr.f32.mxu0 0.0
        %1520 = vmatmul.mubr.f32.gmra.mrb[0].mxu0 %v1314
        %v1521 = vpop.f32.mrb[0].mxu0
        %v1522 = vadd.f32 0.0, %v1521
        %v1523 = vpop.f32.mrb[0].mxu0
        %1524 = vdwg.mxu0
        %v1525 = vld [vmem:[%s297] sm:$0xff]
        %v1526 = vld [vmem:[%s297 + $0x8] sm:$0xff]
        %v1527 = vld [vmem:[%s297 + $0x10] sm:$0xff]
        %v1528 = vld [vmem:[%s297 + $0x18] sm:$0xff]
        %v1529 = vld [vmem:[%s297 + $0x20] sm:$0xff]
        %v1530 = vld [vmem:[%s297 + $0x28] sm:$0xff]
        %v1531 = vld [vmem:[%s297 + $0x30] sm:$0xff]
        %v1532 = vld [vmem:[%s297 + $0x38] sm:$0xff]
        %v1533 = vmul.f32 %v1382, 0.01
        %v1534 = vmul.f32 %v1387, 0.01
        %v1535 = vmul.f32 %v1392, 0.01
        %v1536 = vmul.f32 %v1397, 0.01
        %v1537 = vmul.f32 %v1402, 0.01
        %v1538 = vmul.f32 %v1407, 0.01
        %v1539 = vmul.f32 %v1412, 0.01
        %v1540 = vmul.f32 %v1417, 0.01
        %v1541 = vmul.f32 %v1533, 0.5
        %v1542 = vmul.f32 %v1534, 0.5
        %v1543 = vmul.f32 %v1535, 0.5
        %v1544 = vmul.f32 %v1536, 0.5
        %v1545 = vmul.f32 %v1537, 0.5
        %v1546 = vmul.f32 %v1538, 0.5
        %v1547 = vmul.f32 %v1539, 0.5
        %v1548 = vmul.f32 %v1540, 0.5
        %v1549 = vsub.f32 %v1259, %v1541
        %v1550 = vsub.f32 %v1260, %v1542
        %v1551 = vsub.f32 %v1261, %v1543
        %v1552 = vsub.f32 %v1262, %v1544
        %v1553 = vsub.f32 %v1263, %v1545
        %v1554 = vsub.f32 %v1264, %v1546
        %v1555 = vsub.f32 %v1265, %v1547
        %v1556 = vsub.f32 %v1266, %v1548
        %v1557 = vsub.f32 0.0, %v1549
        %v1558 = vsub.f32 0.0, %v1550
        %v1559 = vsub.f32 0.0, %v1551
        %v1560 = vsub.f32 0.0, %v1552
        %v1561 = vsub.f32 0.0, %v1553
        %v1562 = vsub.f32 0.0, %v1554
        %v1563 = vsub.f32 0.0, %v1555
        %v1564 = vsub.f32 0.0, %v1556
        %v1565 = vmul.f32 %v1291, %v1382
        %v1566 = vmul.f32 %v1292, %v1387
        %v1567 = vmul.f32 %v1293, %v1392
        %v1568 = vmul.f32 %v1294, %v1397
        %v1569 = vmul.f32 %v1295, %v1402
        %v1570 = vmul.f32 %v1296, %v1407
        %v1571 = vmul.f32 %v1297, %v1412
        %v1572 = vmul.f32 %v1298, %v1417
        %1573 = vadd.xlane.f32.xlu0 %v1565
        %v1574 = vpop.xlane.xlu0 %1573
        %1575 = vadd.xlane.f32.xlu0 %v1566
        %v1576 = vpop.xlane.xlu0 %1575
        %1577 = vadd.xlane.f32.xlu0 %v1567
        %v1578 = vpop.xlane.xlu0 %1577
        %1579 = vadd.xlane.f32.xlu0 %v1568
        %v1580 = vpop.xlane.xlu0 %1579
        %1581 = vadd.xlane.f32.xlu0 %v1569
        %v1582 = vpop.xlane.xlu0 %1581
        %1583 = vadd.xlane.f32.xlu0 %v1570
        %v1584 = vpop.xlane.xlu0 %1583
        %1585 = vadd.xlane.f32.xlu0 %v1571
        %v1586 = vpop.xlane.xlu0 %1585
        %1587 = vadd.xlane.f32.xlu0 %v1572
        %v1588 = vpop.xlane.xlu0 %1587
        %v1589 = vmul.f32 %v1574, 0.5
        %v1590 = vmul.f32 %v1576, 0.5
        %v1591 = vmul.f32 %v1578, 0.5
        %v1592 = vmul.f32 %v1580, 0.5
        %v1593 = vmul.f32 %v1582, 0.5
        %v1594 = vmul.f32 %v1584, 0.5
        %v1595 = vmul.f32 %v1586, 0.5
        %v1596 = vmul.f32 %v1588, 0.5
        %v1597 = vmul.f32 %v1557, %v1557
        %v1598 = vmul.f32 %v1558, %v1558
        %v1599 = vmul.f32 %v1559, %v1559
        %v1600 = vmul.f32 %v1560, %v1560
        %v1601 = vmul.f32 %v1561, %v1561
        %v1602 = vmul.f32 %v1562, %v1562
        %v1603 = vmul.f32 %v1563, %v1563
        %v1604 = vmul.f32 %v1564, %v1564
        %1605 = vadd.xlane.f32.xlu0 %v1597
        %v1606 = vpop.xlane.xlu0 %1605
        %1607 = vadd.xlane.f32.xlu0 %v1598
        %v1608 = vpop.xlane.xlu0 %1607
        %1609 = vadd.xlane.f32.xlu0 %v1599
        %v1610 = vpop.xlane.xlu0 %1609
        %1611 = vadd.xlane.f32.xlu0 %v1600
        %v1612 = vpop.xlane.xlu0 %1611
        %1613 = vadd.xlane.f32.xlu0 %v1601
        %v1614 = vpop.xlane.xlu0 %1613
        %1615 = vadd.xlane.f32.xlu0 %v1602
        %v1616 = vpop.xlane.xlu0 %1615
        %1617 = vadd.xlane.f32.xlu0 %v1603
        %v1618 = vpop.xlane.xlu0 %1617
        %1619 = vadd.xlane.f32.xlu0 %v1604
        %v1620 = vpop.xlane.xlu0 %1619
        %v1621 = vmul.f32 %v1606, 0.5
        %v1622 = vmul.f32 %v1608, 0.5
        %v1623 = vmul.f32 %v1610, 0.5
        %v1624 = vmul.f32 %v1612, 0.5
        %v1625 = vmul.f32 %v1614, 0.5
        %v1626 = vmul.f32 %v1616, 0.5
        %v1627 = vmul.f32 %v1618, 0.5
        %v1628 = vmul.f32 %v1620, 0.5
        %v1629 = vadd.f32 %v478, %v510
        %v1630 = vadd.f32 %v479, %v511
        %v1631 = vadd.f32 %v480, %v512
        %v1632 = vadd.f32 %v481, %v513
        %v1633 = vadd.f32 %v482, %v514
        %v1634 = vadd.f32 %v483, %v515
        %v1635 = vadd.f32 %v484, %v516
        %v1636 = vadd.f32 %v485, %v517
        %v1637 = vsub.f32 %v1629, %v1589
        %v1638 = vsub.f32 %v1630, %v1590
        %v1639 = vsub.f32 %v1631, %v1591
        %v1640 = vsub.f32 %v1632, %v1592
        %v1641 = vsub.f32 %v1633, %v1593
        %v1642 = vsub.f32 %v1634, %v1594
        %v1643 = vsub.f32 %v1635, %v1595
        %v1644 = vsub.f32 %v1636, %v1596
        %v1645 = vsub.f32 %v1637, %v1621
        %v1646 = vsub.f32 %v1638, %v1622
        %v1647 = vsub.f32 %v1639, %v1623
        %v1648 = vsub.f32 %v1640, %v1624
        %v1649 = vsub.f32 %v1641, %v1625
        %v1650 = vsub.f32 %v1642, %v1626
        %v1651 = vsub.f32 %v1643, %v1627
        %v1652 = vsub.f32 %v1644, %v1628
        %v1653 = vmin.f32 %v1645, 0.0
        %v1654 = vmin.f32 %v1646, 0.0
        %v1655 = vmin.f32 %v1647, 0.0
        %v1656 = vmin.f32 %v1648, 0.0
        %v1657 = vmin.f32 %v1649, 0.0
        %v1658 = vmin.f32 %v1650, 0.0
        %v1659 = vmin.f32 %v1651, 0.0
        %v1660 = vmin.f32 %v1652, 0.0
        %v1661 = vmul.f32 %v1653, 1.442695
        %v1662 = vpow.pop %v1661
        %v1663 = vmul.f32 %v1654, 1.442695
        %v1664 = vpow.pop %v1663
        %v1665 = vmul.f32 %v1655, 1.442695
        %v1666 = vpow.pop %v1665
        %v1667 = vmul.f32 %v1656, 1.442695
        %v1668 = vpow.pop %v1667
        %v1669 = vmul.f32 %v1657, 1.442695
        %v1670 = vpow.pop %v1669
        %v1671 = vmul.f32 %v1658, 1.442695
        %v1672 = vpow.pop %v1671
        %v1673 = vmul.f32 %v1659, 1.442695
        %v1674 = vpow.pop %v1673
        %v1675 = vmul.f32 %v1660, 1.442695
        %v1676 = vpow.pop %v1675
        %vm1677 = vcmp.lt.f32.partialorder %v1525, %v1662
        %vm1678 = vcmp.lt.f32.partialorder %v1526, %v1664
        %vm1679 = vcmp.lt.f32.partialorder %v1527, %v1666
        %vm1680 = vcmp.lt.f32.partialorder %v1528, %v1668
        %vm1681 = vcmp.lt.f32.partialorder %v1529, %v1670
        %vm1682 = vcmp.lt.f32.partialorder %v1530, %v1672
        %vm1683 = vcmp.lt.f32.partialorder %v1531, %v1674
        %vm1684 = vcmp.lt.f32.partialorder %v1532, %v1676
        %v1685 = vsel %vm1677, 1, 0
        %v1686 = vsel %vm1678, 1, 0
        %v1687 = vsel %vm1679, 1, 0
        %v1688 = vsel %vm1680, 1, 0
        %v1689 = vsel %vm1681, 1, 0
        %v1690 = vsel %vm1682, 1, 0
        %v1691 = vsel %vm1683, 1, 0
        %v1692 = vsel %vm1684, 1, 0
        %1693 = vset.pattern.permute.xlu0 0
        %1694 = vperm.xlu0 %1693, %v1685
        %v1695 = vpop.permute.xlu0 %1694
        %1696 = vset.pattern.permute.xlu0 0
        %1697 = vperm.xlu0 %1696, %v1686
        %v1698 = vpop.permute.xlu0 %1697
        %1699 = vset.pattern.permute.xlu0 0
        %1700 = vperm.xlu0 %1699, %v1687
        %v1701 = vpop.permute.xlu0 %1700
        %1702 = vset.pattern.permute.xlu0 0
        %1703 = vperm.xlu0 %1702, %v1688
        %v1704 = vpop.permute.xlu0 %1703
        %1705 = vset.pattern.permute.xlu0 0
        %1706 = vperm.xlu0 %1705, %v1689
        %v1707 = vpop.permute.xlu0 %1706
        %1708 = vset.pattern.permute.xlu0 0
        %1709 = vperm.xlu0 %1708, %v1690
        %v1710 = vpop.permute.xlu0 %1709
        %1711 = vset.pattern.permute.xlu0 0
        %1712 = vperm.xlu0 %1711, %v1691
        %v1713 = vpop.permute.xlu0 %1712
        %1714 = vset.pattern.permute.xlu0 0
        %1715 = vperm.xlu0 %1714, %v1692
        %v1716 = vpop.permute.xlu0 %1715
        %vm1717 = vcmp.eq.s32.totalorder %v1695, 1
        %vm1718 = vcmp.eq.s32.totalorder %v1698, 1
        %vm1719 = vcmp.eq.s32.totalorder %v1701, 1
        %vm1720 = vcmp.eq.s32.totalorder %v1704, 1
        %vm1721 = vcmp.eq.s32.totalorder %v1707, 1
        %vm1722 = vcmp.eq.s32.totalorder %v1710, 1
        %vm1723 = vcmp.eq.s32.totalorder %v1713, 1
        %vm1724 = vcmp.eq.s32.totalorder %v1716, 1
        %v1725 = vsel %vm1717, %v1291, %v317
        %v1726 = vsel %vm1718, %v1292, %v318
        %v1727 = vsel %vm1719, %v1293, %v319
        %v1728 = vsel %vm1720, %v1294, %v320
        %v1729 = vsel %vm1721, %v1295, %v321
        %v1730 = vsel %vm1722, %v1296, %v322
        %v1731 = vsel %vm1723, %v1297, %v323
        %v1732 = vsel %vm1724, %v1298, %v324
        %v1733 = vsel %vm1677, %v1589, %v478
        %v1734 = vsel %vm1678, %v1590, %v479
        %v1735 = vsel %vm1679, %v1591, %v480
        %v1736 = vsel %vm1680, %v1592, %v481
        %v1737 = vsel %vm1681, %v1593, %v482
        %v1738 = vsel %vm1682, %v1594, %v483
        %v1739 = vsel %vm1683, %v1595, %v484
        %v1740 = vsel %vm1684, %v1596, %v485
        %v1741 = vcvt.s32.f32 %v1685
        %v1742 = vcvt.s32.f32 %v1686
        %v1743 = vcvt.s32.f32 %v1687
        %v1744 = vcvt.s32.f32 %v1688
        %v1745 = vcvt.s32.f32 %v1689
        %v1746 = vcvt.s32.f32 %v1690
        %v1747 = vcvt.s32.f32 %v1691
        %v1748 = vcvt.s32.f32 %v1692
        %v1749 = vld [vmem:[%s297 + $0x40] sm:$0xff]
        %v1750 = vld [vmem:[%s297 + $0x48] sm:$0xff]
        %v1751 = vld [vmem:[%s297 + $0x50] sm:$0xff]
        %v1752 = vld [vmem:[%s297 + $0x58] sm:$0xff]
        %v1753 = vld [vmem:[%s297 + $0x60] sm:$0xff]
        %v1754 = vld [vmem:[%s297 + $0x68] sm:$0xff]
        %v1755 = vld [vmem:[%s297 + $0x70] sm:$0xff]
        %v1756 = vld [vmem:[%s297 + $0x78] sm:$0xff]
        %v1757 = vmul.f32 %v1487, 0.01
        %v1758 = vmul.f32 %v1492, 0.01
        %v1759 = vmul.f32 %v1497, 0.01
        %v1760 = vmul.f32 %v1502, 0.01
        %v1761 = vmul.f32 %v1507, 0.01
        %v1762 = vmul.f32 %v1512, 0.01
        %v1763 = vmul.f32 %v1517, 0.01
        %v1764 = vmul.f32 %v1522, 0.01
        %v1765 = vmul.f32 %v1757, 0.5
        %v1766 = vmul.f32 %v1758, 0.5
        %v1767 = vmul.f32 %v1759, 0.5
        %v1768 = vmul.f32 %v1760, 0.5
        %v1769 = vmul.f32 %v1761, 0.5
        %v1770 = vmul.f32 %v1762, 0.5
        %v1771 = vmul.f32 %v1763, 0.5
        %v1772 = vmul.f32 %v1764, 0.5
        %v1773 = vsub.f32 %v1275, %v1765
        %v1774 = vsub.f32 %v1276, %v1766
        %v1775 = vsub.f32 %v1277, %v1767
        %v1776 = vsub.f32 %v1278, %v1768
        %v1777 = vsub.f32 %v1279, %v1769
        %v1778 = vsub.f32 %v1280, %v1770
        %v1779 = vsub.f32 %v1281, %v1771
        %v1780 = vsub.f32 %v1282, %v1772
        %v1781 = vsub.f32 0.0, %v1773
        %v1782 = vsub.f32 0.0, %v1774
        %v1783 = vsub.f32 0.0, %v1775
        %v1784 = vsub.f32 0.0, %v1776
        %v1785 = vsub.f32 0.0, %v1777
        %v1786 = vsub.f32 0.0, %v1778
        %v1787 = vsub.f32 0.0, %v1779
        %v1788 = vsub.f32 0.0, %v1780
        %v1789 = vmul.f32 %v1307, %v1487
        %v1790 = vmul.f32 %v1308, %v1492
        %v1791 = vmul.f32 %v1309, %v1497
        %v1792 = vmul.f32 %v1310, %v1502
        %v1793 = vmul.f32 %v1311, %v1507
        %v1794 = vmul.f32 %v1312, %v1512
        %v1795 = vmul.f32 %v1313, %v1517
        %v1796 = vmul.f32 %v1314, %v1522
        %1797 = vadd.xlane.f32.xlu0 %v1789
        %v1798 = vpop.xlane.xlu0 %1797
        %1799 = vadd.xlane.f32.xlu0 %v1790
        %v1800 = vpop.xlane.xlu0 %1799
        %1801 = vadd.xlane.f32.xlu0 %v1791
        %v1802 = vpop.xlane.xlu0 %1801
        %1803 = vadd.xlane.f32.xlu0 %v1792
        %v1804 = vpop.xlane.xlu0 %1803
        %1805 = vadd.xlane.f32.xlu0 %v1793
        %v1806 = vpop.xlane.xlu0 %1805
        %1807 = vadd.xlane.f32.xlu0 %v1794
        %v1808 = vpop.xlane.xlu0 %1807
        %1809 = vadd.xlane.f32.xlu0 %v1795
        %v1810 = vpop.xlane.xlu0 %1809
        %1811 = vadd.xlane.f32.xlu0 %v1796
        %v1812 = vpop.xlane.xlu0 %1811
        %v1813 = vmul.f32 %v1798, 0.5
        %v1814 = vmul.f32 %v1800, 0.5
        %v1815 = vmul.f32 %v1802, 0.5
        %v1816 = vmul.f32 %v1804, 0.5
        %v1817 = vmul.f32 %v1806, 0.5
        %v1818 = vmul.f32 %v1808, 0.5
        %v1819 = vmul.f32 %v1810, 0.5
        %v1820 = vmul.f32 %v1812, 0.5
        %v1821 = vmul.f32 %v1781, %v1781
        %v1822 = vmul.f32 %v1782, %v1782
        %v1823 = vmul.f32 %v1783, %v1783
        %v1824 = vmul.f32 %v1784, %v1784
        %v1825 = vmul.f32 %v1785, %v1785
        %v1826 = vmul.f32 %v1786, %v1786
        %v1827 = vmul.f32 %v1787, %v1787
        %v1828 = vmul.f32 %v1788, %v1788
        %1829 = vadd.xlane.f32.xlu0 %v1821
        %v1830 = vpop.xlane.xlu0 %1829
        %1831 = vadd.xlane.f32.xlu0 %v1822
        %v1832 = vpop.xlane.xlu0 %1831
        %1833 = vadd.xlane.f32.xlu0 %v1823
        %v1834 = vpop.xlane.xlu0 %1833
        %1835 = vadd.xlane.f32.xlu0 %v1824
        %v1836 = vpop.xlane.xlu0 %1835
        %1837 = vadd.xlane.f32.xlu0 %v1825
        %v1838 = vpop.xlane.xlu0 %1837
        %1839 = vadd.xlane.f32.xlu0 %v1826
        %v1840 = vpop.xlane.xlu0 %1839
        %1841 = vadd.xlane.f32.xlu0 %v1827
        %v1842 = vpop.xlane.xlu0 %1841
        %1843 = vadd.xlane.f32.xlu0 %v1828
        %v1844 = vpop.xlane.xlu0 %1843
        %v1845 = vmul.f32 %v1830, 0.5
        %v1846 = vmul.f32 %v1832, 0.5
        %v1847 = vmul.f32 %v1834, 0.5
        %v1848 = vmul.f32 %v1836, 0.5
        %v1849 = vmul.f32 %v1838, 0.5
        %v1850 = vmul.f32 %v1840, 0.5
        %v1851 = vmul.f32 %v1842, 0.5
        %v1852 = vmul.f32 %v1844, 0.5
        %v1853 = vadd.f32 %v687, %v719
        %v1854 = vadd.f32 %v688, %v720
        %v1855 = vadd.f32 %v689, %v721
        %v1856 = vadd.f32 %v690, %v722
        %v1857 = vadd.f32 %v691, %v723
        %v1858 = vadd.f32 %v692, %v724
        %v1859 = vadd.f32 %v693, %v725
        %v1860 = vadd.f32 %v694, %v726
        %v1861 = vsub.f32 %v1853, %v1813
        %v1862 = vsub.f32 %v1854, %v1814
        %v1863 = vsub.f32 %v1855, %v1815
        %v1864 = vsub.f32 %v1856, %v1816
        %v1865 = vsub.f32 %v1857, %v1817
        %v1866 = vsub.f32 %v1858, %v1818
        %v1867 = vsub.f32 %v1859, %v1819
        %v1868 = vsub.f32 %v1860, %v1820
        %v1869 = vsub.f32 %v1861, %v1845
        %v1870 = vsub.f32 %v1862, %v1846
        %v1871 = vsub.f32 %v1863, %v1847
        %v1872 = vsub.f32 %v1864, %v1848
        %v1873 = vsub.f32 %v1865, %v1849
        %v1874 = vsub.f32 %v1866, %v1850
        %v1875 = vsub.f32 %v1867, %v1851
        %v1876 = vsub.f32 %v1868, %v1852
        %v1877 = vmin.f32 %v1869, 0.0
        %v1878 = vmin.f32 %v1870, 0.0
        %v1879 = vmin.f32 %v1871, 0.0
        %v1880 = vmin.f32 %v1872, 0.0
        %v1881 = vmin.f32 %v1873, 0.0
        %v1882 = vmin.f32 %v1874, 0.0
        %v1883 = vmin.f32 %v1875, 0.0
        %v1884 = vmin.f32 %v1876, 0.0
        %v1885 = vmul.f32 %v1877, 1.442695
        %v1886 = vpow.pop %v1885
        %v1887 = vmul.f32 %v1878, 1.442695
        %v1888 = vpow.pop %v1887
        %v1889 = vmul.f32 %v1879, 1.442695
        %v1890 = vpow.pop %v1889
        %v1891 = vmul.f32 %v1880, 1.442695
        %v1892 = vpow.pop %v1891
        %v1893 = vmul.f32 %v1881, 1.442695
        %v1894 = vpow.pop %v1893
        %v1895 = vmul.f32 %v1882, 1.442695
        %v1896 = vpow.pop %v1895
        %v1897 = vmul.f32 %v1883, 1.442695
        %v1898 = vpow.pop %v1897
        %v1899 = vmul.f32 %v1884, 1.442695
        %v1900 = vpow.pop %v1899
        %vm1901 = vcmp.lt.f32.partialorder %v1749, %v1886
        %vm1902 = vcmp.lt.f32.partialorder %v1750, %v1888
        %vm1903 = vcmp.lt.f32.partialorder %v1751, %v1890
        %vm1904 = vcmp.lt.f32.partialorder %v1752, %v1892
        %vm1905 = vcmp.lt.f32.partialorder %v1753, %v1894
        %vm1906 = vcmp.lt.f32.partialorder %v1754, %v1896
        %vm1907 = vcmp.lt.f32.partialorder %v1755, %v1898
        %vm1908 = vcmp.lt.f32.partialorder %v1756, %v1900
        %v1909 = vsel %vm1901, 1, 0
        %v1910 = vsel %vm1902, 1, 0
        %v1911 = vsel %vm1903, 1, 0
        %v1912 = vsel %vm1904, 1, 0
        %v1913 = vsel %vm1905, 1, 0
        %v1914 = vsel %vm1906, 1, 0
        %v1915 = vsel %vm1907, 1, 0
        %v1916 = vsel %vm1908, 1, 0
        %1917 = vset.pattern.permute.xlu0 0
        %1918 = vperm.xlu0 %1917, %v1909
        %v1919 = vpop.permute.xlu0 %1918
        %1920 = vset.pattern.permute.xlu0 0
        %1921 = vperm.xlu0 %1920, %v1910
        %v1922 = vpop.permute.xlu0 %1921
        %1923 = vset.pattern.permute.xlu0 0
        %1924 = vperm.xlu0 %1923, %v1911
        %v1925 = vpop.permute.xlu0 %1924
        %1926 = vset.pattern.permute.xlu0 0
        %1927 = vperm.xlu0 %1926, %v1912
        %v1928 = vpop.permute.xlu0 %1927
        %1929 = vset.pattern.permute.xlu0 0
        %1930 = vperm.xlu0 %1929, %v1913
        %v1931 = vpop.permute.xlu0 %1930
        %1932 = vset.pattern.permute.xlu0 0
        %1933 = vperm.xlu0 %1932, %v1914
        %v1934 = vpop.permute.xlu0 %1933
        %1935 = vset.pattern.permute.xlu0 0
        %1936 = vperm.xlu0 %1935, %v1915
        %v1937 = vpop.permute.xlu0 %1936
        %1938 = vset.pattern.permute.xlu0 0
        %1939 = vperm.xlu0 %1938, %v1916
        %v1940 = vpop.permute.xlu0 %1939
        %vm1941 = vcmp.eq.s32.totalorder %v1919, 1
        %vm1942 = vcmp.eq.s32.totalorder %v1922, 1
        %vm1943 = vcmp.eq.s32.totalorder %v1925, 1
        %vm1944 = vcmp.eq.s32.totalorder %v1928, 1
        %vm1945 = vcmp.eq.s32.totalorder %v1931, 1
        %vm1946 = vcmp.eq.s32.totalorder %v1934, 1
        %vm1947 = vcmp.eq.s32.totalorder %v1937, 1
        %vm1948 = vcmp.eq.s32.totalorder %v1940, 1
        %v1949 = vsel %vm1941, %v1307, %v325
        %v1950 = vsel %vm1942, %v1308, %v326
        %v1951 = vsel %vm1943, %v1309, %v327
        %v1952 = vsel %vm1944, %v1310, %v328
        %v1953 = vsel %vm1945, %v1311, %v329
        %v1954 = vsel %vm1946, %v1312, %v330
        %v1955 = vsel %vm1947, %v1313, %v331
        %v1956 = vsel %vm1948, %v1314, %v332
        %v1957 = vsel %vm1901, %v1813, %v687
        %v1958 = vsel %vm1902, %v1814, %v688
        %v1959 = vsel %vm1903, %v1815, %v689
        %v1960 = vsel %vm1904, %v1816, %v690
        %v1961 = vsel %vm1905, %v1817, %v691
        %v1962 = vsel %vm1906, %v1818, %v692
        %v1963 = vsel %vm1907, %v1819, %v693
        %v1964 = vsel %vm1908, %v1820, %v694
        %v1965 = vcvt.s32.f32 %v1909
        %v1966 = vcvt.s32.f32 %v1910
        %v1967 = vcvt.s32.f32 %v1911
        %v1968 = vcvt.s32.f32 %v1912
        %v1969 = vcvt.s32.f32 %v1913
        %v1970 = vcvt.s32.f32 %v1914
        %v1971 = vcvt.s32.f32 %v1915
        %v1972 = vcvt.s32.f32 %v1916
        %1973 = vst [vmem:[%s278] sm:$0xff] %v1725
        %1974 = vst [vmem:[%s278 + $0x8] sm:$0xff] %v1726
        %1975 = vst [vmem:[%s278 + $0x10] sm:$0xff] %v1727
        %1976 = vst [vmem:[%s278 + $0x18] sm:$0xff] %v1728
        %1977 = vst [vmem:[%s278 + $0x20] sm:$0xff] %v1729
        %1978 = vst [vmem:[%s278 + $0x28] sm:$0xff] %v1730
        %1979 = vst [vmem:[%s278 + $0x30] sm:$0xff] %v1731
        %1980 = vst [vmem:[%s278 + $0x38] sm:$0xff] %v1732
        %1981 = vst [vmem:[%s278 + $0x40] sm:$0xff] %v1949
        %1982 = vst [vmem:[%s278 + $0x48] sm:$0xff] %v1950
        %1983 = vst [vmem:[%s278 + $0x50] sm:$0xff] %v1951
        %1984 = vst [vmem:[%s278 + $0x58] sm:$0xff] %v1952
        %1985 = vst [vmem:[%s278 + $0x60] sm:$0xff] %v1953
        %1986 = vst [vmem:[%s278 + $0x68] sm:$0xff] %v1954
        %1987 = vst [vmem:[%s278 + $0x70] sm:$0xff] %v1955
        %1988 = vst [vmem:[%s278 + $0x78] sm:$0xff] %v1956
        %v1989 = vlaneseq
        %v1990 = vand.u32 %v1989, 127
        %vm1991 = vcmp.eq.s32.totalorder %v1990, 0
        %vm1992 = vcmp.eq.s32.totalorder %v1990, 1
        %1994 = vset.pattern.permute.xlu0 0
        %1995 = vperm.xlu0 %1994, %v1741
        %v1996 = vpop.permute.xlu0 %1995
        %1999 = vset.pattern.permute.xlu0 0
        %2000 = vperm.xlu0 %1999, %v1742
        %v2001 = vpop.permute.xlu0 %2000
        %2004 = vset.pattern.permute.xlu0 0
        %2005 = vperm.xlu0 %2004, %v1743
        %v2006 = vpop.permute.xlu0 %2005
        %2009 = vset.pattern.permute.xlu0 0
        %2010 = vperm.xlu0 %2009, %v1744
        %v2011 = vpop.permute.xlu0 %2010
        %2014 = vset.pattern.permute.xlu0 0
        %2015 = vperm.xlu0 %2014, %v1745
        %v2016 = vpop.permute.xlu0 %2015
        %2019 = vset.pattern.permute.xlu0 0
        %2020 = vperm.xlu0 %2019, %v1746
        %v2021 = vpop.permute.xlu0 %2020
        %2024 = vset.pattern.permute.xlu0 0
        %2025 = vperm.xlu0 %2024, %v1747
        %v2026 = vpop.permute.xlu0 %2025
        %2029 = vset.pattern.permute.xlu0 0
        %2030 = vperm.xlu0 %2029, %v1748
        %v2031 = vpop.permute.xlu0 %2030
        %v2033 = vsel %vm1992, %v1996, 0.0
        %v2034 = vsel %vm1992, %v2001, 0.0
        %v2035 = vsel %vm1992, %v2006, 0.0
        %v2036 = vsel %vm1992, %v2011, 0.0
        %v2037 = vsel %vm1992, %v2016, 0.0
        %v2038 = vsel %vm1992, %v2021, 0.0
        %v2039 = vsel %vm1992, %v2026, 0.0
        %v2040 = vsel %vm1992, %v2031, 0.0
        %2042 = vset.pattern.permute.xlu0 0
        %2043 = vperm.xlu0 %2042, %v1733
        %v2044 = vpop.permute.xlu0 %2043
        %2047 = vset.pattern.permute.xlu0 0
        %2048 = vperm.xlu0 %2047, %v1734
        %v2049 = vpop.permute.xlu0 %2048
        %2052 = vset.pattern.permute.xlu0 0
        %2053 = vperm.xlu0 %2052, %v1735
        %v2054 = vpop.permute.xlu0 %2053
        %2057 = vset.pattern.permute.xlu0 0
        %2058 = vperm.xlu0 %2057, %v1736
        %v2059 = vpop.permute.xlu0 %2058
        %2062 = vset.pattern.permute.xlu0 0
        %2063 = vperm.xlu0 %2062, %v1737
        %v2064 = vpop.permute.xlu0 %2063
        %2067 = vset.pattern.permute.xlu0 0
        %2068 = vperm.xlu0 %2067, %v1738
        %v2069 = vpop.permute.xlu0 %2068
        %2072 = vset.pattern.permute.xlu0 0
        %2073 = vperm.xlu0 %2072, %v1739
        %v2074 = vpop.permute.xlu0 %2073
        %2077 = vset.pattern.permute.xlu0 0
        %2078 = vperm.xlu0 %2077, %v1740
        %v2079 = vpop.permute.xlu0 %2078
        %v2081 = vsel %vm1991, %v2044, %v2033
        %v2082 = vsel %vm1991, %v2049, %v2034
        %v2083 = vsel %vm1991, %v2054, %v2035
        %v2084 = vsel %vm1991, %v2059, %v2036
        %v2085 = vsel %vm1991, %v2064, %v2037
        %v2086 = vsel %vm1991, %v2069, %v2038
        %v2087 = vsel %vm1991, %v2074, %v2039
        %v2088 = vsel %vm1991, %v2079, %v2040
        %2089 = vst [vmem:[%s285] sm:$0xff] %v2081
        %2090 = vst [vmem:[%s285 + $0x8] sm:$0xff] %v2082
        %2091 = vst [vmem:[%s285 + $0x10] sm:$0xff] %v2083
        %2092 = vst [vmem:[%s285 + $0x18] sm:$0xff] %v2084
        %2093 = vst [vmem:[%s285 + $0x20] sm:$0xff] %v2085
        %2094 = vst [vmem:[%s285 + $0x28] sm:$0xff] %v2086
        %2095 = vst [vmem:[%s285 + $0x30] sm:$0xff] %v2087
        %2096 = vst [vmem:[%s285 + $0x38] sm:$0xff] %v2088
        %2098 = vset.pattern.permute.xlu0 0
        %2099 = vperm.xlu0 %2098, %v1965
        %v2100 = vpop.permute.xlu0 %2099
        %2103 = vset.pattern.permute.xlu0 0
        %2104 = vperm.xlu0 %2103, %v1966
        %v2105 = vpop.permute.xlu0 %2104
        %2108 = vset.pattern.permute.xlu0 0
        %2109 = vperm.xlu0 %2108, %v1967
        %v2110 = vpop.permute.xlu0 %2109
        %2113 = vset.pattern.permute.xlu0 0
        %2114 = vperm.xlu0 %2113, %v1968
        %v2115 = vpop.permute.xlu0 %2114
        %2118 = vset.pattern.permute.xlu0 0
        %2119 = vperm.xlu0 %2118, %v1969
        %v2120 = vpop.permute.xlu0 %2119
        %2123 = vset.pattern.permute.xlu0 0
        %2124 = vperm.xlu0 %2123, %v1970
        %v2125 = vpop.permute.xlu0 %2124
        %2128 = vset.pattern.permute.xlu0 0
        %2129 = vperm.xlu0 %2128, %v1971
        %v2130 = vpop.permute.xlu0 %2129
        %2133 = vset.pattern.permute.xlu0 0
        %2134 = vperm.xlu0 %2133, %v1972
        %v2135 = vpop.permute.xlu0 %2134
        %v2137 = vsel %vm1992, %v2100, 0.0
        %v2138 = vsel %vm1992, %v2105, 0.0
        %v2139 = vsel %vm1992, %v2110, 0.0
        %v2140 = vsel %vm1992, %v2115, 0.0
        %v2141 = vsel %vm1992, %v2120, 0.0
        %v2142 = vsel %vm1992, %v2125, 0.0
        %v2143 = vsel %vm1992, %v2130, 0.0
        %v2144 = vsel %vm1992, %v2135, 0.0
        %2146 = vset.pattern.permute.xlu0 0
        %2147 = vperm.xlu0 %2146, %v1957
        %v2148 = vpop.permute.xlu0 %2147
        %2151 = vset.pattern.permute.xlu0 0
        %2152 = vperm.xlu0 %2151, %v1958
        %v2153 = vpop.permute.xlu0 %2152
        %2156 = vset.pattern.permute.xlu0 0
        %2157 = vperm.xlu0 %2156, %v1959
        %v2158 = vpop.permute.xlu0 %2157
        %2161 = vset.pattern.permute.xlu0 0
        %2162 = vperm.xlu0 %2161, %v1960
        %v2163 = vpop.permute.xlu0 %2162
        %2166 = vset.pattern.permute.xlu0 0
        %2167 = vperm.xlu0 %2166, %v1961
        %v2168 = vpop.permute.xlu0 %2167
        %2171 = vset.pattern.permute.xlu0 0
        %2172 = vperm.xlu0 %2171, %v1962
        %v2173 = vpop.permute.xlu0 %2172
        %2176 = vset.pattern.permute.xlu0 0
        %2177 = vperm.xlu0 %2176, %v1963
        %v2178 = vpop.permute.xlu0 %2177
        %2181 = vset.pattern.permute.xlu0 0
        %2182 = vperm.xlu0 %2181, %v1964
        %v2183 = vpop.permute.xlu0 %2182
        %v2185 = vsel %vm1991, %v2148, %v2137
        %v2186 = vsel %vm1991, %v2153, %v2138
        %v2187 = vsel %vm1991, %v2158, %v2139
        %v2188 = vsel %vm1991, %v2163, %v2140
        %v2189 = vsel %vm1991, %v2168, %v2141
        %v2190 = vsel %vm1991, %v2173, %v2142
        %v2191 = vsel %vm1991, %v2178, %v2143
        %v2192 = vsel %vm1991, %v2183, %v2144
        %2193 = vst [vmem:[%s285 + $0x40] sm:$0xff] %v2185
        %2194 = vst [vmem:[%s285 + $0x48] sm:$0xff] %v2186
        %2195 = vst [vmem:[%s285 + $0x50] sm:$0xff] %v2187
        %2196 = vst [vmem:[%s285 + $0x58] sm:$0xff] %v2188
        %2197 = vst [vmem:[%s285 + $0x60] sm:$0xff] %v2189
        %2198 = vst [vmem:[%s285 + $0x68] sm:$0xff] %v2190
        %2199 = vst [vmem:[%s285 + $0x70] sm:$0xff] %v2191
        %2200 = vst [vmem:[%s285 + $0x78] sm:$0xff] %v2192
        %s2201 = sand.u32 %s133, 1
        %s2202 = scalar_lea.sflag [#allocation4], %s2201
        %s2203 = sand.u32 %s133, 1
        %s2204 = smul.addr %s2203, 128
        %s2205 = scalar_lea.vmem [#allocation5], %s2204
        %s2206 = sand.u32 %s159, 1
        %s2207 = scalar_lea.sflag [#allocation7], %s2206
        %s2208 = sand.u32 %s159, 1
        %s2209 = smul.addr %s2208, 128
        %s2210 = scalar_lea.vmem [#allocation6], %s2209
        // Predicated region
        $region41: #{tpu_custom_call.1} parent=35 // pred_check
          %p2211 = pneg %p143
        $region42: #{tpu_custom_call.1} parent=35 // pred_check_branch
          %2213 = sbr.rel (%p2211) target = $region44
        $region43: #{tpu_custom_call.1} parent=35 // pred_region
          %s2214 = smul.u32 16, %s26
          %s2216 = ssub.s32 2048, 2048
          %2217 = vsyncadd %s2202, %s2216
          %s2218 = smul.addr %s2214, 128
          %s2219 = scalar_lea.hbm %s4, %s2218
          %s2220 = sshll.u32 %s2205, 4
          %s2221 = int_to_ptr.vmem [resolvable:$true] %s2220
          %2226 = dma.vmem_to_hbm [thread:$0]  %s2221, 2048, %s2219, %s2202, 128, 128, 8
        $region44: #{tpu_custom_call.1} parent=35 // pred_fallthru
          _
        // Predicated region
        $region45: #{tpu_custom_call.1} parent=35 // pred_check
          %p2227 = pneg %p169
        $region46: #{tpu_custom_call.1} parent=35 // pred_check_branch
          %2229 = sbr.rel (%p2227) target = $region48
        $region47: #{tpu_custom_call.1} parent=35 // pred_region
          %s2230 = smul.u32 16, %s26
          %s2232 = ssub.s32 2048, 2048
          %2233 = vsyncadd %s2207, %s2232
          %s2234 = smul.addr %s2230, 128
          %s2235 = scalar_lea.hbm %s5, %s2234
          %s2236 = sshll.u32 %s2210, 4
          %s2237 = int_to_ptr.vmem [resolvable:$true] %s2236
          %2242 = dma.vmem_to_hbm [thread:$0]  %s2237, 2048, %s2235, %s2207, 128, 128, 8
        $region48: #{tpu_custom_call.1} parent=35 // pred_fallthru
          _
      $region36: #{tpu_custom_call.1} parent=5 // pred_fallthru
        _
      %p2243 = scmp.le.s32.totalorder 2, %s21
      // Predicated region
      $region49: #{tpu_custom_call.1} parent=5 // pred_check
        %p2244 = pneg %p2243
      $region50: #{tpu_custom_call.1} parent=5 // pred_check_branch
        %2246 = sbr.rel (%p2244) target = $region52
      $region51: #{tpu_custom_call.1} parent=5 // pred_region
        %s2247 = ssub.s32 %s21, 2
        // Predicated region
        $region53: #{tpu_custom_call.1} parent=51 // pred_check
          %p2248 = pneg %p149
        $region54: #{tpu_custom_call.1} parent=51 // pred_check_branch
          %2250 = sbr.rel (%p2248) target = $region56
        $region55: #{tpu_custom_call.1} parent=51 // pred_region
          %s2251 = sand.u32 %s134, 1
          %s2252 = scalar_lea.sflag [#allocation4], %s2251
          %s2253 = sand.u32 %s134, 1
          %s2254 = smul.addr %s2253, 128
          %s2255 = scalar_lea.vmem [#allocation5], %s2254
          %2256 = dma.done %s2252, 2048
        $region56: #{tpu_custom_call.1} parent=51 // pred_fallthru
          _
        // Predicated region
        $region57: #{tpu_custom_call.1} parent=51 // pred_check
          %p2257 = pneg %p175
        $region58: #{tpu_custom_call.1} parent=51 // pred_check_branch
          %2259 = sbr.rel (%p2257) target = $region60
        $region59: #{tpu_custom_call.1} parent=51 // pred_region
          %s2260 = sand.u32 %s160, 1
          %s2261 = scalar_lea.sflag [#allocation7], %s2260
          %s2262 = sand.u32 %s160, 1
          %s2263 = smul.addr %s2262, 128
          %s2264 = scalar_lea.vmem [#allocation6], %s2263
          %2265 = dma.done %s2261, 2048
        $region60: #{tpu_custom_call.1} parent=51 // pred_fallthru
          _
      $region52: #{tpu_custom_call.1} parent=5 // pred_fallthru
        _
    $region6: #{tpu_custom_call.1} parent=1 // loop_footer
      %s25 = sadd.s32 1, %s21
    $region7: #{tpu_custom_call.1} parent=1 // loop_footer_branch
      %20 = sbr.rel target = $region3
    $region8: #{tpu_custom_call.1} parent=1 // loop_exit
      _
    %2266 = vsyncpa [#allocation3], 1
    %s2267 = scalar_lea.sflag [#allocation3], 1
    %2268 = vsyncpa %s2267, 1
    %2269 = vsyncpa [#allocation4], 1
    %s2270 = scalar_lea.sflag [#allocation4], 1
    %2271 = vsyncpa %s2270, 1
    %2272 = vsyncpa [#allocation7], 1
    %s2273 = scalar_lea.sflag [#allocation7], 1
    %2274 = vsyncpa %s2273, 1

</llo_original>
